<compile_context>
chip_gen: v7x
topology: tpu7x:2x2x1
jax: 0.10.0
libtpu: 0.0.40
codegen_flags: <defaults>
</compile_context>

<pallas_src>
import functools

import jax
import jax.numpy as jnp
from jax.experimental import pallas as pl
from jax.experimental.pallas import tpu as pltpu

EPS = 1e-5  # PyTorch nn.LayerNorm default eps


def _layernorm(t, g, b):
    mu = jnp.mean(t, axis=-1, keepdims=True)
    var = jnp.mean(jnp.square(t - mu), axis=-1, keepdims=True)
    return (t - mu) * jax.lax.rsqrt(var + EPS) * g + b


def _erf(z):
    # Abramowitz & Stegun 7.1.26 polynomial approximation, |error| < 1.5e-7.
    a1, a2, a3, a4, a5 = 0.254829592, -0.284496736, 1.421413741, -1.453152027, 1.061405429
    p = 0.3275911
    s = jnp.where(z >= 0.0, 1.0, -1.0)
    az = jnp.abs(z)
    t = 1.0 / (1.0 + p * az)
    poly = t * (a1 + t * (a2 + t * (a3 + t * (a4 + t * a5))))
    return s * (1.0 - poly * jnp.exp(-az * az))


def _gelu_exact(x):
    # nn.GELU() default (approximate='none') -> erf-based GELU
    return 0.5 * x * (1.0 + _erf(x * 0.7071067811865475))


def decoder_stack_kernel(x_ref, m_ref,
                         g1_ref, b1_ref,
                         wq_ref, wk_ref, wv_ref, wo_ref, bo_ref,
                         g2_ref, b2_ref,
                         w1_ref, bb1_ref, w2_ref, bb2_ref,
                         o_ref, *, heads, dim_head, scale, compute_dtype):
    layer = pl.program_id(1)

    # Layer 0 of each batch block: seed the resident residual stream from x.
    @pl.when(layer == 0)
    def _init():
        o_ref[...] = x_ref[...]

    Bb, N, D = x_ref.shape
    M = m_ref.shape[1]
    R, Rm = Bb * N, Bb * M
    cdt = compute_dtype

    # Residual stream (resident in the output VMEM block across the layer axis).
    x = o_ref[...].reshape(R, D).astype(jnp.float32)     # (Bb*N, D)
    m = m_ref[...].reshape(Rm, D).astype(jnp.float32)    # (Bb*M, D)

    # ---- Residual2(PreNorm2(Cross_Attention)) ----
    g1 = g1_ref[...]
    b1 = b1_ref[...]
    xn = _layernorm(x, g1, b1).astype(cdt)   # PreNorm2: SAME LN applied to x and m
    mn = _layernorm(m, g1, b1).astype(cdt)

    # Batched projections: all heads at once, batch folded into rows.
    q = jnp.dot(xn, wq_ref[...], preferred_element_type=jnp.float32)   # (R,  H*Dh)
    k = jnp.dot(mn, wk_ref[...], preferred_element_type=jnp.float32)   # (Rm, H*Dh)
    v = jnp.dot(mn, wv_ref[...], preferred_element_type=jnp.float32)   # (Rm, H*Dh)

    # TODO(synk): mask path (F.pad(mask.flatten(1),(1,0)) + outer-product
    # masked_fill) not implemented; this kernel covers mask=None only.
    wo = wo_ref[...]                        # (H, Dh, D) bf16, head-major
    acc = jnp.zeros((R, D), jnp.float32)
    for h in range(heads):                  # static unroll; no concatenate
        sl = slice(h * dim_head, (h + 1) * dim_head)
        qh = q[:, sl].reshape(Bb, N, dim_head).astype(cdt)
        kh = k[:, sl].reshape(Bb, M, dim_head).astype(cdt)
        vh = v[:, sl].reshape(Bb, M, dim_head).astype(cdt)
        dots = jnp.einsum('bnd,bmd->bnm', qh, kh,
                          preferred_element_type=jnp.float32) * scale
        dots = dots - jnp.max(dots, axis=-1, keepdims=True)
        e = jnp.exp(dots)
        p = e * pl.reciprocal(jnp.sum(e, axis=-1, keepdims=True), approx=True)
        ctx = jnp.einsum('bnm,bmd->bnd', p.astype(cdt), vh,
                         preferred_element_type=jnp.float32)            # (Bb,N,Dh)
        # Fold output projection per head: ctx_h @ Wo[h] accumulated in f32.
        acc = acc + jnp.dot(ctx.reshape(R, dim_head).astype(cdt), wo[h],
                            preferred_element_type=jnp.float32)         # (R, D)

    x = acc + bo_ref[...] + x               # to_out bias + residual

    # ---- Residual(PreNorm(FeedForward)) ----
    xn2 = _layernorm(x, g2_ref[...], b2_ref[...]).astype(cdt)
    hdn = jnp.dot(xn2, w1_ref[...], preferred_element_type=jnp.float32) + bb1_ref[...]
    hdn = _gelu_exact(hdn).astype(cdt)
    ff = jnp.dot(hdn, w2_ref[...], preferred_element_type=jnp.float32) + bb2_ref[...]

    o_ref[...] = (ff + x).reshape(Bb, N, D).astype(o_ref.dtype)


def transformer_decoder(x, m, layer_params, *, heads, dim_head,
                        batch_block=None, compute_dtype=jnp.bfloat16):
    """x = target(query) (B,N,D), m = memory (B,M,D). Fused full-depth forward."""
    B, N, D = x.shape
    M = m.shape[1]
    depth = len(layer_params)
    inner = heads * dim_head
    mlp = layer_params[0]["w1"].shape[1]
    if batch_block is None:
        batch_block = B                      # rows per MXU op; set smaller to spread
    assert B % batch_block == 0              # batch blocks across cores (v7x megacore)
    scale = float(D) ** (-0.5)               # Cross_Attention uses dim**-0.5

    def stacked(name, dtype=None):
        a = jnp.stack([p[name] for p in layer_params], axis=0)
        return a if dtype is None else a.astype(dtype)

    g1, b1 = stacked("g1"), stacked("b1")
    wq = stacked("wq", compute_dtype)
    wk = stacked("wk", compute_dtype)
    wv = stacked("wv", compute_dtype)
    wo = stacked("wo", compute_dtype).reshape(depth, heads, dim_head, D)  # head-major
    bo = stacked("bo")
    g2, b2 = stacked("g2"), stacked("b2")
    w1, bb1 = stacked("w1", compute_dtype), stacked("bb1")
    w2, bb2 = stacked("w2", compute_dtype), stacked("bb2")

    kern = functools.partial(decoder_stack_kernel, heads=heads, dim_head=dim_head,
                             scale=scale, compute_dtype=compute_dtype)

    def per_layer(*dims):
        nd = len(dims)
        return pl.BlockSpec((None,) + tuple(dims), lambda b, l: (l,) + (0,) * nd)

    def per_batch(rows):
        return pl.BlockSpec((batch_block, rows, D), lambda b, l: (b, 0, 0))

    return pl.pallas_call(
        kern,
        out_shape=jax.ShapeDtypeStruct((B, N, D), x.dtype),
        grid=(B // batch_block, depth),
        in_specs=[
            per_batch(N),                                   # x (per-batch tile)
            per_batch(M),                                   # m (per-batch tile)
            per_layer(1, D), per_layer(1, D),               # LN1 gamma/beta
            per_layer(D, inner), per_layer(D, inner), per_layer(D, inner),  # Wq Wk Wv
            per_layer(heads, dim_head, D),                  # Wo (head-major)
            per_layer(1, D),                                # bo
            per_layer(1, D), per_layer(1, D),               # LN2 gamma/beta
            per_layer(D, mlp), per_layer(1, mlp),           # W1, b1
            per_layer(mlp, D), per_layer(1, D),             # W2, b2
        ],
        out_specs=pl.BlockSpec((batch_block, N, D), lambda b, l: (b, 0, 0)),
        compiler_params=pltpu.CompilerParams(
            dimension_semantics=("parallel", "arbitrary"),
            vmem_limit_bytes=32 * 1024 * 1024,
        ),
    )(x, m, g1, b1, wq, wk, wv, wo, bo, g2, b2, w1, bb1, w2, bb2)


# ---------------- parameter init (deterministic, synthetic) ----------------
def init_params(key, depth, dim, heads, dim_head, mlp_dim):
    inner = heads * dim_head
    layers = []
    for i in range(depth):
        ks = jax.random.split(jax.random.fold_in(key, i), 6)
        layers.append(dict(
            g1=jnp.ones((1, dim), jnp.float32),
            b1=jnp.zeros((1, dim), jnp.float32),
            wq=0.05 * jax.random.normal(ks[0], (dim, inner), jnp.float32),
            wk=0.05 * jax.random.normal(ks[1], (dim, inner), jnp.float32),
            wv=0.05 * jax.random.normal(ks[2], (dim, inner), jnp.float32),
            wo=0.05 * jax.random.normal(ks[3], (inner, dim), jnp.float32),
            bo=jnp.zeros((1, dim), jnp.float32),
            g2=jnp.ones((1, dim), jnp.float32),
            b2=jnp.zeros((1, dim), jnp.float32),
            w1=0.05 * jax.random.normal(ks[4], (dim, mlp_dim), jnp.float32),
            bb1=jnp.zeros((1, mlp_dim), jnp.float32),
            w2=0.05 * jax.random.normal(ks[5], (mlp_dim, dim), jnp.float32),
            bb2=jnp.zeros((1, dim), jnp.float32),
        ))
    return layers


# ---------------- pure-JAX f32 reference (mirrors the PyTorch forward) --------------
def reference(x, m, layer_params, *, heads, dim_head):
    D = x.shape[-1]
    scale = float(D) ** (-0.5)
    for p in layer_params:
        xn = _layernorm(x, p["g1"], p["b1"])
        mn = _layernorm(m, p["g1"], p["b1"])
        q = xn @ p["wq"]
        k = mn @ p["wk"]
        v = mn @ p["wv"]
        B, N, _ = q.shape
        M = k.shape[1]
        qh = q.reshape(B, N, heads, dim_head).transpose(0, 2, 1, 3)
        kh = k.reshape(B, M, heads, dim_head).transpose(0, 2, 1, 3)
        vh = v.reshape(B, M, heads, dim_head).transpose(0, 2, 1, 3)
        dots = jnp.einsum('bhid,bhjd->bhij', qh, kh) * scale
        attn = jax.nn.softmax(dots, axis=-1)
        out = jnp.einsum('bhij,bhjd->bhid', attn, vh)
        out = out.transpose(0, 2, 1, 3).reshape(B, N, heads * dim_head)
        out = out @ p["wo"] + p["bo"]
        x = out + x
        xn2 = _layernorm(x, p["g2"], p["b2"])
        h = _gelu_exact(xn2 @ p["w1"] + p["bb1"])
        x = h @ p["w2"] + p["bb2"] + x
    return x


if __name__ == "__main__":
    B, N, M_len = 2, 8, 16
    dim, heads, dim_head, mlp_dim, depth = 32, 4, 8, 64, 2

    key = jax.random.PRNGKey(0)
    kx, km, kp = jax.random.split(key, 3)
    x = jax.random.normal(kx, (B, N, dim), jnp.float32)
    m = jax.random.normal(km, (B, M_len, dim), jnp.float32)
    params = init_params(kp, depth, dim, heads, dim_head, mlp_dim)

    out = transformer_decoder(x, m, params, heads=heads, dim_head=dim_head)
    out = jax.block_until_ready(out)

    ref = reference(x, m, params, heads=heads, dim_head=dim_head)
    assert out.shape == (B, N, dim), out.shape
    # bf16 matmul inputs + approx reciprocal in the kernel vs. pure-f32 reference
    max_err = float(jnp.max(jnp.abs(out - ref)))
    assert jnp.isfinite(max_err), "non-finite output"
    assert jnp.allclose(out, ref, atol=3e-2, rtol=3e-2), max_err
    print("KERNEL_OK")
</pallas_src>

<mosaic_0001>
module attributes {stable_mosaic.version = 11 : i64} {
  func.func @decoder_stack_kernel(%arg0: i32, %arg1: i32, %arg2: memref<2x8x32xf32, #tpu.memory_space<vmem>>, %arg3: memref<2x16x32xf32, #tpu.memory_space<vmem>>, %arg4: memref<1x1x32xf32, #tpu.memory_space<vmem>>, %arg5: memref<1x1x32xf32, #tpu.memory_space<vmem>>, %arg6: memref<1x32x32xbf16, #tpu.memory_space<vmem>>, %arg7: memref<1x32x32xbf16, #tpu.memory_space<vmem>>, %arg8: memref<1x32x32xbf16, #tpu.memory_space<vmem>>, %arg9: memref<1x4x8x32xbf16, #tpu.memory_space<vmem>>, %arg10: memref<1x1x32xf32, #tpu.memory_space<vmem>>, %arg11: memref<1x1x32xf32, #tpu.memory_space<vmem>>, %arg12: memref<1x1x32xf32, #tpu.memory_space<vmem>>, %arg13: memref<1x32x64xbf16, #tpu.memory_space<vmem>>, %arg14: memref<1x1x64xf32, #tpu.memory_space<vmem>>, %arg15: memref<1x64x32xbf16, #tpu.memory_space<vmem>>, %arg16: memref<1x1x32xf32, #tpu.memory_space<vmem>>, %arg17: memref<2x8x32xf32, #tpu.memory_space<vmem>>) attributes {dimension_semantics = [#tpu.dimension_semantics<parallel>, #tpu.dimension_semantics<arbitrary>], iteration_bounds = array<i64: 1, 2>, scalar_prefetch = 0 : i64, scratch_operands = 0 : i64, tpu.core_type = #tpu.core_type<tc>, window_params = [{transform_indices = @transform_0, window_bounds = array<i64: 2, 8, 32>}, {transform_indices = @transform_1, window_bounds = array<i64: 2, 16, 32>}, {transform_indices = @transform_2, window_bounds = array<i64: 1, 1, 32>}, {transform_indices = @transform_3, window_bounds = array<i64: 1, 1, 32>}, {transform_indices = @transform_4, window_bounds = array<i64: 1, 32, 32>}, {transform_indices = @transform_5, window_bounds = array<i64: 1, 32, 32>}, {transform_indices = @transform_6, window_bounds = array<i64: 1, 32, 32>}, {transform_indices = @transform_7, window_bounds = array<i64: 1, 4, 8, 32>}, {transform_indices = @transform_8, window_bounds = array<i64: 1, 1, 32>}, {transform_indices = @transform_9, window_bounds = array<i64: 1, 1, 32>}, {transform_indices = @transform_10, window_bounds = array<i64: 1, 1, 32>}, {transform_indices = @transform_11, window_bounds = array<i64: 1, 32, 64>}, {transform_indices = @transform_12, window_bounds = array<i64: 1, 1, 64>}, {transform_indices = @transform_13, window_bounds = array<i64: 1, 64, 32>}, {transform_indices = @transform_14, window_bounds = array<i64: 1, 1, 32>}, {transform_indices = @transform_15, window_bounds = array<i64: 2, 8, 32>}]} {
    %c0_i32 = arith.constant 0 : i32
    %0 = arith.cmpi eq, %arg1, %c0_i32 : i32
    %1 = arith.extui %0 : i1 to i32
    %c0_i32_0 = arith.constant 0 : i32
    %2 = arith.cmpi ne, %1, %c0_i32_0 : i32
    scf.if %2 {
      %c0_109 = arith.constant 0 : index
      %c0_110 = arith.constant 0 : index
      %c0_111 = arith.constant 0 : index
      %280 = vector.load %arg2[%c0_109, %c0_110, %c0_111] : memref<2x8x32xf32, #tpu.memory_space<vmem>>, vector<2x8x32xf32>
      %c0_112 = arith.constant 0 : index
      %c0_113 = arith.constant 0 : index
      %c0_114 = arith.constant 0 : index
      %281 = vector.load %arg17[%c0_112, %c0_113, %c0_114] : memref<2x8x32xf32, #tpu.memory_space<vmem>>, vector<2x8x32xf32>
      tpu.vector_store %arg17[%c0_112, %c0_113, %c0_114], %280 {strides = array<i32>} : memref<2x8x32xf32, #tpu.memory_space<vmem>>, vector<2x8x32xf32>,
    } else {
    }
    %c0 = arith.constant 0 : index
    %c0_1 = arith.constant 0 : index
    %c0_2 = arith.constant 0 : index
    %3 = vector.load %arg17[%c0, %c0_1, %c0_2] : memref<2x8x32xf32, #tpu.memory_space<vmem>>, vector<2x8x32xf32>
    %4 = vector.shape_cast %3 : vector<2x8x32xf32> to vector<16x32xf32>
    %c0_3 = arith.constant 0 : index
    %c0_4 = arith.constant 0 : index
    %c0_5 = arith.constant 0 : index
    %5 = vector.load %arg3[%c0_3, %c0_4, %c0_5] : memref<2x16x32xf32, #tpu.memory_space<vmem>>, vector<2x16x32xf32>
    %6 = vector.shape_cast %5 : vector<2x16x32xf32> to vector<32x32xf32>
    %c0_6 = arith.constant 0 : index
    %c0_7 = arith.constant 0 : index
    %c0_8 = arith.constant 0 : index
    %7 = vector.load %arg4[%c0_6, %c0_7, %c0_8] : memref<1x1x32xf32, #tpu.memory_space<vmem>>, vector<1x1x32xf32>
    %8 = vector.shape_cast %7 : vector<1x1x32xf32> to vector<1x32xf32>
    %c0_9 = arith.constant 0 : index
    %c0_10 = arith.constant 0 : index
    %c0_11 = arith.constant 0 : index
    %9 = vector.load %arg5[%c0_9, %c0_10, %c0_11] : memref<1x1x32xf32, #tpu.memory_space<vmem>>, vector<1x1x32xf32>
    %10 = vector.shape_cast %9 : vector<1x1x32xf32> to vector<1x32xf32>
    %cst = arith.constant dense<0.000000e+00> : vector<16xf32>
    %11 = vector.multi_reduction <add>, %4, %cst [1] : vector<16x32xf32> to vector<16xf32>
    %12 = vector.shape_cast %11 : vector<16xf32> to vector<16x1xf32>
    %cst_12 = arith.constant 3.200000e+01 : f32
    %13 = vector.broadcast %cst_12 : f32 to vector<16x1xf32>
    %14 = arith.divf %12, %13 : vector<16x1xf32>
    %15 = vector.broadcast %14 : vector<16x1xf32> to vector<16x32xf32>
    %16 = arith.subf %4, %15 : vector<16x32xf32>
    %17 = arith.mulf %16, %16 : vector<16x32xf32>
    %cst_13 = arith.constant dense<0.000000e+00> : vector<16xf32>
    %18 = vector.multi_reduction <add>, %17, %cst_13 [1] : vector<16x32xf32> to vector<16xf32>
    %19 = vector.shape_cast %18 : vector<16xf32> to vector<16x1xf32>
    %cst_14 = arith.constant 3.200000e+01 : f32
    %20 = vector.broadcast %cst_14 : f32 to vector<16x1xf32>
    %21 = arith.divf %19, %20 : vector<16x1xf32>
    %22 = vector.broadcast %14 : vector<16x1xf32> to vector<16x32xf32>
    %23 = arith.subf %4, %22 : vector<16x32xf32>
    %cst_15 = arith.constant 9.99999974E-6 : f32
    %24 = vector.broadcast %cst_15 : f32 to vector<16x1xf32>
    %25 = arith.addf %21, %24 : vector<16x1xf32>
    %26 = math.rsqrt %25 : vector<16x1xf32>
    %27 = vector.broadcast %26 : vector<16x1xf32> to vector<16x32xf32>
    %28 = arith.mulf %23, %27 : vector<16x32xf32>
    %29 = vector.broadcast %8 : vector<1x32xf32> to vector<16x32xf32>
    %30 = arith.mulf %28, %29 : vector<16x32xf32>
    %31 = vector.broadcast %10 : vector<1x32xf32> to vector<16x32xf32>
    %32 = arith.addf %30, %31 : vector<16x32xf32>
    %33 = arith.truncf %32 : vector<16x32xf32> to vector<16x32xbf16>
    %cst_16 = arith.constant dense<0.000000e+00> : vector<32xf32>
    %34 = vector.multi_reduction <add>, %6, %cst_16 [1] : vector<32x32xf32> to vector<32xf32>
    %35 = vector.shape_cast %34 : vector<32xf32> to vector<32x1xf32>
    %cst_17 = arith.constant 3.200000e+01 : f32
    %36 = vector.broadcast %cst_17 : f32 to vector<32x1xf32>
    %37 = arith.divf %35, %36 : vector<32x1xf32>
    %38 = vector.broadcast %37 : vector<32x1xf32> to vector<32x32xf32>
    %39 = arith.subf %6, %38 : vector<32x32xf32>
    %40 = arith.mulf %39, %39 : vector<32x32xf32>
    %cst_18 = arith.constant dense<0.000000e+00> : vector<32xf32>
    %41 = vector.multi_reduction <add>, %40, %cst_18 [1] : vector<32x32xf32> to vector<32xf32>
    %42 = vector.shape_cast %41 : vector<32xf32> to vector<32x1xf32>
    %cst_19 = arith.constant 3.200000e+01 : f32
    %43 = vector.broadcast %cst_19 : f32 to vector<32x1xf32>
    %44 = arith.divf %42, %43 : vector<32x1xf32>
    %45 = vector.broadcast %37 : vector<32x1xf32> to vector<32x32xf32>
    %46 = arith.subf %6, %45 : vector<32x32xf32>
    %cst_20 = arith.constant 9.99999974E-6 : f32
    %47 = vector.broadcast %cst_20 : f32 to vector<32x1xf32>
    %48 = arith.addf %44, %47 : vector<32x1xf32>
    %49 = math.rsqrt %48 : vector<32x1xf32>
    %50 = vector.broadcast %49 : vector<32x1xf32> to vector<32x32xf32>
    %51 = arith.mulf %46, %50 : vector<32x32xf32>
    %52 = vector.broadcast %8 : vector<1x32xf32> to vector<32x32xf32>
    %53 = arith.mulf %51, %52 : vector<32x32xf32>
    %54 = vector.broadcast %10 : vector<1x32xf32> to vector<32x32xf32>
    %55 = arith.addf %53, %54 : vector<32x32xf32>
    %56 = arith.truncf %55 : vector<32x32xf32> to vector<32x32xbf16>
    %c0_21 = arith.constant 0 : index
    %c0_22 = arith.constant 0 : index
    %c0_23 = arith.constant 0 : index
    %57 = vector.load %arg6[%c0_21, %c0_22, %c0_23] : memref<1x32x32xbf16, #tpu.memory_space<vmem>>, vector<1x32x32xbf16>
    %58 = vector.shape_cast %57 : vector<1x32x32xbf16> to vector<32x32xbf16>
    %cst_24 = arith.constant dense<0.000000e+00> : vector<16x32xf32>
    %59 = tpu.matmul %33, %58, %cst_24 {dimension_numbers = #tpu.dot_dimension_numbers<[1], [0], [0], [1], [0, 0, 1, 1], [], []>} : vector<16x32xbf16>, vector<32x32xbf16>, vector<16x32xf32> -> vector<16x32xf32>
    %c0_25 = arith.constant 0 : index
    %c0_26 = arith.constant 0 : index
    %c0_27 = arith.constant 0 : index
    %60 = vector.load %arg7[%c0_25, %c0_26, %c0_27] : memref<1x32x32xbf16, #tpu.memory_space<vmem>>, vector<1x32x32xbf16>
    %61 = vector.shape_cast %60 : vector<1x32x32xbf16> to vector<32x32xbf16>
    %cst_28 = arith.constant dense<0.000000e+00> : vector<32x32xf32>
    %62 = tpu.matmul %56, %61, %cst_28 {dimension_numbers = #tpu.dot_dimension_numbers<[1], [0], [0], [1], [0, 0, 1, 1], [], []>} : vector<32x32xbf16>, vector<32x32xbf16>, vector<32x32xf32> -> vector<32x32xf32>
    %c0_29 = arith.constant 0 : index
    %c0_30 = arith.constant 0 : index
    %c0_31 = arith.constant 0 : index
    %63 = vector.load %arg8[%c0_29, %c0_30, %c0_31] : memref<1x32x32xbf16, #tpu.memory_space<vmem>>, vector<1x32x32xbf16>
    %64 = vector.shape_cast %63 : vector<1x32x32xbf16> to vector<32x32xbf16>
    %cst_32 = arith.constant dense<0.000000e+00> : vector<32x32xf32>
    %65 = tpu.matmul %56, %64, %cst_32 {dimension_numbers = #tpu.dot_dimension_numbers<[1], [0], [0], [1], [0, 0, 1, 1], [], []>} : vector<32x32xbf16>, vector<32x32xbf16>, vector<32x32xf32> -> vector<32x32xf32>
    %c0_33 = arith.constant 0 : index
    %c0_34 = arith.constant 0 : index
    %c0_35 = arith.constant 0 : index
    %c0_36 = arith.constant 0 : index
    %66 = vector.load %arg9[%c0_33, %c0_34, %c0_35, %c0_36] : memref<1x4x8x32xbf16, #tpu.memory_space<vmem>>, vector<1x4x8x32xbf16>
    %67 = vector.shape_cast %66 : vector<1x4x8x32xbf16> to vector<4x8x32xbf16>
    %cst_37 = arith.constant 0.000000e+00 : f32
    %68 = vector.broadcast %cst_37 : f32 to vector<16x32xf32>
    %69 = vector.extract_strided_slice %59 {offsets = [0, 0], sizes = [16, 8], strides = [1, 1]} : vector<16x32xf32> to vector<16x8xf32>
    %70 = vector.shape_cast %69 : vector<16x8xf32> to vector<2x8x8xf32>
    %71 = arith.truncf %70 : vector<2x8x8xf32> to vector<2x8x8xbf16>
    %72 = vector.extract_strided_slice %62 {offsets = [0, 0], sizes = [32, 8], strides = [1, 1]} : vector<32x32xf32> to vector<32x8xf32>
    %73 = vector.shape_cast %72 : vector<32x8xf32> to vector<2x16x8xf32>
    %74 = arith.truncf %73 : vector<2x16x8xf32> to vector<2x16x8xbf16>
    %75 = vector.extract_strided_slice %65 {offsets = [0, 0], sizes = [32, 8], strides = [1, 1]} : vector<32x32xf32> to vector<32x8xf32>
    %76 = vector.shape_cast %75 : vector<32x8xf32> to vector<2x16x8xf32>
    %77 = arith.truncf %76 : vector<2x16x8xf32> to vector<2x16x8xbf16>
    "tpu.trace_start"() <{level = 10 : i32, message = "bnd,bmd->bnm"}> : () -> ()
    %cst_38 = arith.constant dense<0.000000e+00> : vector<2x8x16xf32>
    %78 = tpu.matmul %71, %74, %cst_38 {dimension_numbers = #tpu.dot_dimension_numbers<[2], [2], [1], [1], [0, 0, 0, 1, 1, 1], [0], [0]>} : vector<2x8x8xbf16>, vector<2x16x8xbf16>, vector<2x8x16xf32> -> vector<2x8x16xf32>
    "tpu.trace_stop"() : () -> ()
    %cst_39 = arith.constant 0.176776692 : f32
    %79 = vector.broadcast %cst_39 : f32 to vector<2x8x16xf32>
    %80 = arith.mulf %78, %79 : vector<2x8x16xf32>
    %cst_40 = arith.constant dense<0xFF800000> : vector<2x8xf32>
    %81 = vector.multi_reduction <maximumf>, %80, %cst_40 [2] : vector<2x8x16xf32> to vector<2x8xf32>
    %82 = vector.shape_cast %81 : vector<2x8xf32> to vector<2x8x1xf32>
    %83 = vector.broadcast %82 : vector<2x8x1xf32> to vector<2x8x16xf32>
    %84 = arith.subf %80, %83 : vector<2x8x16xf32>
    %85 = math.exp %84 : vector<2x8x16xf32>
    %cst_41 = arith.constant dense<0.000000e+00> : vector<2x8xf32>
    %86 = vector.multi_reduction <add>, %85, %cst_41 [2] : vector<2x8x16xf32> to vector<2x8xf32>
    %87 = vector.shape_cast %86 : vector<2x8xf32> to vector<2x8x1xf32>
    %88 = tpu.reciprocal %87 {approx = true} : vector<2x8x1xf32> -> vector<2x8x1xf32>
    %89 = vector.broadcast %88 : vector<2x8x1xf32> to vector<2x8x16xf32>
    %90 = arith.mulf %85, %89 : vector<2x8x16xf32>
    %91 = arith.truncf %90 : vector<2x8x16xf32> to vector<2x8x16xbf16>
    "tpu.trace_start"() <{level = 10 : i32, message = "bnm,bmd->bnd"}> : () -> ()
    %cst_42 = arith.constant dense<0.000000e+00> : vector<2x8x8xf32>
    %92 = tpu.matmul %91, %77, %cst_42 {dimension_numbers = #tpu.dot_dimension_numbers<[2], [1], [1], [2], [0, 0, 0, 1, 1, 2], [0], [0]>} : vector<2x8x16xbf16>, vector<2x16x8xbf16>, vector<2x8x8xf32> -> vector<2x8x8xf32>
    "tpu.trace_stop"() : () -> ()
    %93 = vector.shape_cast %92 : vector<2x8x8xf32> to vector<16x8xf32>
    %94 = arith.truncf %93 : vector<16x8xf32> to vector<16x8xbf16>
    %95 = vector.extract_strided_slice %67 {offsets = [0, 0, 0], sizes = [1, 8, 32], strides = [1, 1, 1]} : vector<4x8x32xbf16> to vector<1x8x32xbf16>
    %96 = vector.shape_cast %95 : vector<1x8x32xbf16> to vector<8x32xbf16>
    %cst_43 = arith.constant dense<0.000000e+00> : vector<16x32xf32>
    %97 = tpu.matmul %94, %96, %cst_43 {dimension_numbers = #tpu.dot_dimension_numbers<[1], [0], [0], [1], [0, 0, 1, 1], [], []>} : vector<16x8xbf16>, vector<8x32xbf16>, vector<16x32xf32> -> vector<16x32xf32>
    %98 = arith.addf %68, %97 : vector<16x32xf32>
    %99 = vector.extract_strided_slice %59 {offsets = [0, 8], sizes = [16, 8], strides = [1, 1]} : vector<16x32xf32> to vector<16x8xf32>
    %100 = vector.shape_cast %99 : vector<16x8xf32> to vector<2x8x8xf32>
    %101 = arith.truncf %100 : vector<2x8x8xf32> to vector<2x8x8xbf16>
    %102 = vector.extract_strided_slice %62 {offsets = [0, 8], sizes = [32, 8], strides = [1, 1]} : vector<32x32xf32> to vector<32x8xf32>
    %103 = vector.shape_cast %102 : vector<32x8xf32> to vector<2x16x8xf32>
    %104 = arith.truncf %103 : vector<2x16x8xf32> to vector<2x16x8xbf16>
    %105 = vector.extract_strided_slice %65 {offsets = [0, 8], sizes = [32, 8], strides = [1, 1]} : vector<32x32xf32> to vector<32x8xf32>
    %106 = vector.shape_cast %105 : vector<32x8xf32> to vector<2x16x8xf32>
    %107 = arith.truncf %106 : vector<2x16x8xf32> to vector<2x16x8xbf16>
    "tpu.trace_start"() <{level = 10 : i32, message = "bnd,bmd->bnm"}> : () -> ()
    %cst_44 = arith.constant dense<0.000000e+00> : vector<2x8x16xf32>
    %108 = tpu.matmul %101, %104, %cst_44 {dimension_numbers = #tpu.dot_dimension_numbers<[2], [2], [1], [1], [0, 0, 0, 1, 1, 1], [0], [0]>} : vector<2x8x8xbf16>, vector<2x16x8xbf16>, vector<2x8x16xf32> -> vector<2x8x16xf32>
    "tpu.trace_stop"() : () -> ()
    %cst_45 = arith.constant 0.176776692 : f32
    %109 = vector.broadcast %cst_45 : f32 to vector<2x8x16xf32>
    %110 = arith.mulf %108, %109 : vector<2x8x16xf32>
    %cst_46 = arith.constant dense<0xFF800000> : vector<2x8xf32>
    %111 = vector.multi_reduction <maximumf>, %110, %cst_46 [2] : vector<2x8x16xf32> to vector<2x8xf32>
    %112 = vector.shape_cast %111 : vector<2x8xf32> to vector<2x8x1xf32>
    %113 = vector.broadcast %112 : vector<2x8x1xf32> to vector<2x8x16xf32>
    %114 = arith.subf %110, %113 : vector<2x8x16xf32>
    %115 = math.exp %114 : vector<2x8x16xf32>
    %cst_47 = arith.constant dense<0.000000e+00> : vector<2x8xf32>
    %116 = vector.multi_reduction <add>, %115, %cst_47 [2] : vector<2x8x16xf32> to vector<2x8xf32>
    %117 = vector.shape_cast %116 : vector<2x8xf32> to vector<2x8x1xf32>
    %118 = tpu.reciprocal %117 {approx = true} : vector<2x8x1xf32> -> vector<2x8x1xf32>
    %119 = vector.broadcast %118 : vector<2x8x1xf32> to vector<2x8x16xf32>
    %120 = arith.mulf %115, %119 : vector<2x8x16xf32>
    %121 = arith.truncf %120 : vector<2x8x16xf32> to vector<2x8x16xbf16>
    "tpu.trace_start"() <{level = 10 : i32, message = "bnm,bmd->bnd"}> : () -> ()
    %cst_48 = arith.constant dense<0.000000e+00> : vector<2x8x8xf32>
    %122 = tpu.matmul %121, %107, %cst_48 {dimension_numbers = #tpu.dot_dimension_numbers<[2], [1], [1], [2], [0, 0, 0, 1, 1, 2], [0], [0]>} : vector<2x8x16xbf16>, vector<2x16x8xbf16>, vector<2x8x8xf32> -> vector<2x8x8xf32>
    "tpu.trace_stop"() : () -> ()
    %123 = vector.shape_cast %122 : vector<2x8x8xf32> to vector<16x8xf32>
    %124 = arith.truncf %123 : vector<16x8xf32> to vector<16x8xbf16>
    %125 = vector.extract_strided_slice %67 {offsets = [1, 0, 0], sizes = [1, 8, 32], strides = [1, 1, 1]} : vector<4x8x32xbf16> to vector<1x8x32xbf16>
    %126 = vector.shape_cast %125 : vector<1x8x32xbf16> to vector<8x32xbf16>
    %cst_49 = arith.constant dense<0.000000e+00> : vector<16x32xf32>
    %127 = tpu.matmul %124, %126, %cst_49 {dimension_numbers = #tpu.dot_dimension_numbers<[1], [0], [0], [1], [0, 0, 1, 1], [], []>} : vector<16x8xbf16>, vector<8x32xbf16>, vector<16x32xf32> -> vector<16x32xf32>
    %128 = arith.addf %98, %127 : vector<16x32xf32>
    %129 = vector.extract_strided_slice %59 {offsets = [0, 16], sizes = [16, 8], strides = [1, 1]} : vector<16x32xf32> to vector<16x8xf32>
    %130 = vector.shape_cast %129 : vector<16x8xf32> to vector<2x8x8xf32>
    %131 = arith.truncf %130 : vector<2x8x8xf32> to vector<2x8x8xbf16>
    %132 = vector.extract_strided_slice %62 {offsets = [0, 16], sizes = [32, 8], strides = [1, 1]} : vector<32x32xf32> to vector<32x8xf32>
    %133 = vector.shape_cast %132 : vector<32x8xf32> to vector<2x16x8xf32>
    %134 = arith.truncf %133 : vector<2x16x8xf32> to vector<2x16x8xbf16>
    %135 = vector.extract_strided_slice %65 {offsets = [0, 16], sizes = [32, 8], strides = [1, 1]} : vector<32x32xf32> to vector<32x8xf32>
    %136 = vector.shape_cast %135 : vector<32x8xf32> to vector<2x16x8xf32>
    %137 = arith.truncf %136 : vector<2x16x8xf32> to vector<2x16x8xbf16>
    "tpu.trace_start"() <{level = 10 : i32, message = "bnd,bmd->bnm"}> : () -> ()
    %cst_50 = arith.constant dense<0.000000e+00> : vector<2x8x16xf32>
    %138 = tpu.matmul %131, %134, %cst_50 {dimension_numbers = #tpu.dot_dimension_numbers<[2], [2], [1], [1], [0, 0, 0, 1, 1, 1], [0], [0]>} : vector<2x8x8xbf16>, vector<2x16x8xbf16>, vector<2x8x16xf32> -> vector<2x8x16xf32>
    "tpu.trace_stop"() : () -> ()
    %cst_51 = arith.constant 0.176776692 : f32
    %139 = vector.broadcast %cst_51 : f32 to vector<2x8x16xf32>
    %140 = arith.mulf %138, %139 : vector<2x8x16xf32>
    %cst_52 = arith.constant dense<0xFF800000> : vector<2x8xf32>
    %141 = vector.multi_reduction <maximumf>, %140, %cst_52 [2] : vector<2x8x16xf32> to vector<2x8xf32>
    %142 = vector.shape_cast %141 : vector<2x8xf32> to vector<2x8x1xf32>
    %143 = vector.broadcast %142 : vector<2x8x1xf32> to vector<2x8x16xf32>
    %144 = arith.subf %140, %143 : vector<2x8x16xf32>
    %145 = math.exp %144 : vector<2x8x16xf32>
    %cst_53 = arith.constant dense<0.000000e+00> : vector<2x8xf32>
    %146 = vector.multi_reduction <add>, %145, %cst_53 [2] : vector<2x8x16xf32> to vector<2x8xf32>
    %147 = vector.shape_cast %146 : vector<2x8xf32> to vector<2x8x1xf32>
    %148 = tpu.reciprocal %147 {approx = true} : vector<2x8x1xf32> -> vector<2x8x1xf32>
    %149 = vector.broadcast %148 : vector<2x8x1xf32> to vector<2x8x16xf32>
    %150 = arith.mulf %145, %149 : vector<2x8x16xf32>
    %151 = arith.truncf %150 : vector<2x8x16xf32> to vector<2x8x16xbf16>
    "tpu.trace_start"() <{level = 10 : i32, message = "bnm,bmd->bnd"}> : () -> ()
    %cst_54 = arith.constant dense<0.000000e+00> : vector<2x8x8xf32>
    %152 = tpu.matmul %151, %137, %cst_54 {dimension_numbers = #tpu.dot_dimension_numbers<[2], [1], [1], [2], [0, 0, 0, 1, 1, 2], [0], [0]>} : vector<2x8x16xbf16>, vector<2x16x8xbf16>, vector<2x8x8xf32> -> vector<2x8x8xf32>
    "tpu.trace_stop"() : () -> ()
    %153 = vector.shape_cast %152 : vector<2x8x8xf32> to vector<16x8xf32>
    %154 = arith.truncf %153 : vector<16x8xf32> to vector<16x8xbf16>
    %155 = vector.extract_strided_slice %67 {offsets = [2, 0, 0], sizes = [1, 8, 32], strides = [1, 1, 1]} : vector<4x8x32xbf16> to vector<1x8x32xbf16>
    %156 = vector.shape_cast %155 : vector<1x8x32xbf16> to vector<8x32xbf16>
    %cst_55 = arith.constant dense<0.000000e+00> : vector<16x32xf32>
    %157 = tpu.matmul %154, %156, %cst_55 {dimension_numbers = #tpu.dot_dimension_numbers<[1], [0], [0], [1], [0, 0, 1, 1], [], []>} : vector<16x8xbf16>, vector<8x32xbf16>, vector<16x32xf32> -> vector<16x32xf32>
    %158 = arith.addf %128, %157 : vector<16x32xf32>
    %159 = vector.extract_strided_slice %59 {offsets = [0, 24], sizes = [16, 8], strides = [1, 1]} : vector<16x32xf32> to vector<16x8xf32>
    %160 = vector.shape_cast %159 : vector<16x8xf32> to vector<2x8x8xf32>
    %161 = arith.truncf %160 : vector<2x8x8xf32> to vector<2x8x8xbf16>
    %162 = vector.extract_strided_slice %62 {offsets = [0, 24], sizes = [32, 8], strides = [1, 1]} : vector<32x32xf32> to vector<32x8xf32>
    %163 = vector.shape_cast %162 : vector<32x8xf32> to vector<2x16x8xf32>
    %164 = arith.truncf %163 : vector<2x16x8xf32> to vector<2x16x8xbf16>
    %165 = vector.extract_strided_slice %65 {offsets = [0, 24], sizes = [32, 8], strides = [1, 1]} : vector<32x32xf32> to vector<32x8xf32>
    %166 = vector.shape_cast %165 : vector<32x8xf32> to vector<2x16x8xf32>
    %167 = arith.truncf %166 : vector<2x16x8xf32> to vector<2x16x8xbf16>
    "tpu.trace_start"() <{level = 10 : i32, message = "bnd,bmd->bnm"}> : () -> ()
    %cst_56 = arith.constant dense<0.000000e+00> : vector<2x8x16xf32>
    %168 = tpu.matmul %161, %164, %cst_56 {dimension_numbers = #tpu.dot_dimension_numbers<[2], [2], [1], [1], [0, 0, 0, 1, 1, 1], [0], [0]>} : vector<2x8x8xbf16>, vector<2x16x8xbf16>, vector<2x8x16xf32> -> vector<2x8x16xf32>
    "tpu.trace_stop"() : () -> ()
    %cst_57 = arith.constant 0.176776692 : f32
    %169 = vector.broadcast %cst_57 : f32 to vector<2x8x16xf32>
    %170 = arith.mulf %168, %169 : vector<2x8x16xf32>
    %cst_58 = arith.constant dense<0xFF800000> : vector<2x8xf32>
    %171 = vector.multi_reduction <maximumf>, %170, %cst_58 [2] : vector<2x8x16xf32> to vector<2x8xf32>
    %172 = vector.shape_cast %171 : vector<2x8xf32> to vector<2x8x1xf32>
    %173 = vector.broadcast %172 : vector<2x8x1xf32> to vector<2x8x16xf32>
    %174 = arith.subf %170, %173 : vector<2x8x16xf32>
    %175 = math.exp %174 : vector<2x8x16xf32>
    %cst_59 = arith.constant dense<0.000000e+00> : vector<2x8xf32>
    %176 = vector.multi_reduction <add>, %175, %cst_59 [2] : vector<2x8x16xf32> to vector<2x8xf32>
    %177 = vector.shape_cast %176 : vector<2x8xf32> to vector<2x8x1xf32>
    %178 = tpu.reciprocal %177 {approx = true} : vector<2x8x1xf32> -> vector<2x8x1xf32>
    %179 = vector.broadcast %178 : vector<2x8x1xf32> to vector<2x8x16xf32>
    %180 = arith.mulf %175, %179 : vector<2x8x16xf32>
    %181 = arith.truncf %180 : vector<2x8x16xf32> to vector<2x8x16xbf16>
    "tpu.trace_start"() <{level = 10 : i32, message = "bnm,bmd->bnd"}> : () -> ()
    %cst_60 = arith.constant dense<0.000000e+00> : vector<2x8x8xf32>
    %182 = tpu.matmul %181, %167, %cst_60 {dimension_numbers = #tpu.dot_dimension_numbers<[2], [1], [1], [2], [0, 0, 0, 1, 1, 2], [0], [0]>} : vector<2x8x16xbf16>, vector<2x16x8xbf16>, vector<2x8x8xf32> -> vector<2x8x8xf32>
    "tpu.trace_stop"() : () -> ()
    %183 = vector.shape_cast %182 : vector<2x8x8xf32> to vector<16x8xf32>
    %184 = arith.truncf %183 : vector<16x8xf32> to vector<16x8xbf16>
    %185 = vector.extract_strided_slice %67 {offsets = [3, 0, 0], sizes = [1, 8, 32], strides = [1, 1, 1]} : vector<4x8x32xbf16> to vector<1x8x32xbf16>
    %186 = vector.shape_cast %185 : vector<1x8x32xbf16> to vector<8x32xbf16>
    %cst_61 = arith.constant dense<0.000000e+00> : vector<16x32xf32>
    %187 = tpu.matmul %184, %186, %cst_61 {dimension_numbers = #tpu.dot_dimension_numbers<[1], [0], [0], [1], [0, 0, 1, 1], [], []>} : vector<16x8xbf16>, vector<8x32xbf16>, vector<16x32xf32> -> vector<16x32xf32>
    %188 = arith.addf %158, %187 : vector<16x32xf32>
    %c0_62 = arith.constant 0 : index
    %c0_63 = arith.constant 0 : index
    %c0_64 = arith.constant 0 : index
    %189 = vector.load %arg10[%c0_62, %c0_63, %c0_64] : memref<1x1x32xf32, #tpu.memory_space<vmem>>, vector<1x1x32xf32>
    %190 = vector.shape_cast %189 : vector<1x1x32xf32> to vector<1x32xf32>
    %191 = vector.broadcast %190 : vector<1x32xf32> to vector<16x32xf32>
    %192 = arith.addf %188, %191 : vector<16x32xf32>
    %193 = arith.addf %192, %4 : vector<16x32xf32>
    %c0_65 = arith.constant 0 : index
    %c0_66 = arith.constant 0 : index
    %c0_67 = arith.constant 0 : index
    %194 = vector.load %arg11[%c0_65, %c0_66, %c0_67] : memref<1x1x32xf32, #tpu.memory_space<vmem>>, vector<1x1x32xf32>
    %195 = vector.shape_cast %194 : vector<1x1x32xf32> to vector<1x32xf32>
    %c0_68 = arith.constant 0 : index
    %c0_69 = arith.constant 0 : index
    %c0_70 = arith.constant 0 : index
    %196 = vector.load %arg12[%c0_68, %c0_69, %c0_70] : memref<1x1x32xf32, #tpu.memory_space<vmem>>, vector<1x1x32xf32>
    %197 = vector.shape_cast %196 : vector<1x1x32xf32> to vector<1x32xf32>
    %cst_71 = arith.constant dense<0.000000e+00> : vector<16xf32>
    %198 = vector.multi_reduction <add>, %193, %cst_71 [1] : vector<16x32xf32> to vector<16xf32>
    %199 = vector.shape_cast %198 : vector<16xf32> to vector<16x1xf32>
    %cst_72 = arith.constant 3.200000e+01 : f32
    %200 = vector.broadcast %cst_72 : f32 to vector<16x1xf32>
    %201 = arith.divf %199, %200 : vector<16x1xf32>
    %202 = vector.broadcast %201 : vector<16x1xf32> to vector<16x32xf32>
    %203 = arith.subf %193, %202 : vector<16x32xf32>
    %204 = arith.mulf %203, %203 : vector<16x32xf32>
    %cst_73 = arith.constant dense<0.000000e+00> : vector<16xf32>
    %205 = vector.multi_reduction <add>, %204, %cst_73 [1] : vector<16x32xf32> to vector<16xf32>
    %206 = vector.shape_cast %205 : vector<16xf32> to vector<16x1xf32>
    %cst_74 = arith.constant 3.200000e+01 : f32
    %207 = vector.broadcast %cst_74 : f32 to vector<16x1xf32>
    %208 = arith.divf %206, %207 : vector<16x1xf32>
    %209 = vector.broadcast %201 : vector<16x1xf32> to vector<16x32xf32>
    %210 = arith.subf %193, %209 : vector<16x32xf32>
    %cst_75 = arith.constant 9.99999974E-6 : f32
    %211 = vector.broadcast %cst_75 : f32 to vector<16x1xf32>
    %212 = arith.addf %208, %211 : vector<16x1xf32>
    %213 = math.rsqrt %212 : vector<16x1xf32>
    %214 = vector.broadcast %213 : vector<16x1xf32> to vector<16x32xf32>
    %215 = arith.mulf %210, %214 : vector<16x32xf32>
    %216 = vector.broadcast %195 : vector<1x32xf32> to vector<16x32xf32>
    %217 = arith.mulf %215, %216 : vector<16x32xf32>
    %218 = vector.broadcast %197 : vector<1x32xf32> to vector<16x32xf32>
    %219 = arith.addf %217, %218 : vector<16x32xf32>
    %220 = arith.truncf %219 : vector<16x32xf32> to vector<16x32xbf16>
    %c0_76 = arith.constant 0 : index
    %c0_77 = arith.constant 0 : index
    %c0_78 = arith.constant 0 : index
    %221 = vector.load %arg13[%c0_76, %c0_77, %c0_78] : memref<1x32x64xbf16, #tpu.memory_space<vmem>>, vector<1x32x64xbf16>
    %222 = vector.shape_cast %221 : vector<1x32x64xbf16> to vector<32x64xbf16>
    %cst_79 = arith.constant dense<0.000000e+00> : vector<16x64xf32>
    %223 = tpu.matmul %220, %222, %cst_79 {dimension_numbers = #tpu.dot_dimension_numbers<[1], [0], [0], [1], [0, 0, 1, 1], [], []>} : vector<16x32xbf16>, vector<32x64xbf16>, vector<16x64xf32> -> vector<16x64xf32>
    %c0_80 = arith.constant 0 : index
    %c0_81 = arith.constant 0 : index
    %c0_82 = arith.constant 0 : index
    %224 = vector.load %arg14[%c0_80, %c0_81, %c0_82] : memref<1x1x64xf32, #tpu.memory_space<vmem>>, vector<1x1x64xf32>
    %225 = vector.shape_cast %224 : vector<1x1x64xf32> to vector<1x64xf32>
    %226 = vector.broadcast %225 : vector<1x64xf32> to vector<16x64xf32>
    %227 = arith.addf %223, %226 : vector<16x64xf32>
    %cst_83 = arith.constant 5.000000e-01 : f32
    %228 = vector.broadcast %cst_83 : f32 to vector<16x64xf32>
    %229 = arith.mulf %228, %227 : vector<16x64xf32>
    %cst_84 = arith.constant 0.707106769 : f32
    %230 = vector.broadcast %cst_84 : f32 to vector<16x64xf32>
    %231 = arith.mulf %227, %230 : vector<16x64xf32>
    %cst_85 = arith.constant 0.000000e+00 : f32
    %232 = vector.broadcast %cst_85 : f32 to vector<16x64xf32>
    %233 = arith.cmpf oge, %231, %232 : vector<16x64xf32>
    %cst_86 = arith.constant 1.000000e+00 : f32
    %cst_87 = arith.constant -1.000000e+00 : f32
    %234 = vector.broadcast %cst_86 : f32 to vector<16x64xf32>
    %235 = vector.broadcast %cst_87 : f32 to vector<16x64xf32>
    %236 = arith.select %233, %234, %235 : vector<16x64xi1>, vector<16x64xf32>
    %237 = math.absf %231 : vector<16x64xf32>
    %cst_88 = arith.constant 0.327591091 : f32
    %238 = vector.broadcast %cst_88 : f32 to vector<16x64xf32>
    %239 = arith.mulf %238, %237 : vector<16x64xf32>
    %cst_89 = arith.constant 1.000000e+00 : f32
    %240 = vector.broadcast %cst_89 : f32 to vector<16x64xf32>
    %241 = arith.addf %240, %239 : vector<16x64xf32>
    %cst_90 = arith.constant 1.000000e+00 : f32
    %242 = vector.broadcast %cst_90 : f32 to vector<16x64xf32>
    %243 = arith.divf %242, %241 : vector<16x64xf32>
    %cst_91 = arith.constant 1.06140542 : f32
    %244 = vector.broadcast %cst_91 : f32 to vector<16x64xf32>
    %245 = arith.mulf %243, %244 : vector<16x64xf32>
    %cst_92 = arith.constant -1.45315206 : f32
    %246 = vector.broadcast %cst_92 : f32 to vector<16x64xf32>
    %247 = arith.addf %246, %245 : vector<16x64xf32>
    %248 = arith.mulf %243, %247 : vector<16x64xf32>
    %cst_93 = arith.constant 1.42141378 : f32
    %249 = vector.broadcast %cst_93 : f32 to vector<16x64xf32>
    %250 = arith.addf %249, %248 : vector<16x64xf32>
    %251 = arith.mulf %243, %250 : vector<16x64xf32>
    %cst_94 = arith.constant -0.284496725 : f32
    %252 = vector.broadcast %cst_94 : f32 to vector<16x64xf32>
    %253 = arith.addf %252, %251 : vector<16x64xf32>
    %254 = arith.mulf %243, %253 : vector<16x64xf32>
    %cst_95 = arith.constant 0.254829586 : f32
    %255 = vector.broadcast %cst_95 : f32 to vector<16x64xf32>
    %256 = arith.addf %255, %254 : vector<16x64xf32>
    %257 = arith.mulf %243, %256 : vector<16x64xf32>
    %cst_96 = arith.constant 0.000000e+00 : f32
    %258 = vector.broadcast %cst_96 : f32 to vector<16x64xf32>
    %259 = arith.subf %258, %237 : vector<16x64xf32>
    %260 = arith.mulf %259, %237 : vector<16x64xf32>
    %261 = math.exp %260 : vector<16x64xf32>
    %262 = arith.mulf %257, %261 : vector<16x64xf32>
    %cst_97 = arith.constant 1.000000e+00 : f32
    %263 = vector.broadcast %cst_97 : f32 to vector<16x64xf32>
    %264 = arith.subf %263, %262 : vector<16x64xf32>
    %265 = arith.mulf %236, %264 : vector<16x64xf32>
    %cst_98 = arith.constant 1.000000e+00 : f32
    %266 = vector.broadcast %cst_98 : f32 to vector<16x64xf32>
    %267 = arith.addf %266, %265 : vector<16x64xf32>
    %268 = arith.mulf %229, %267 : vector<16x64xf32>
    %269 = arith.truncf %268 : vector<16x64xf32> to vector<16x64xbf16>
    %c0_99 = arith.constant 0 : index
    %c0_100 = arith.constant 0 : index
    %c0_101 = arith.constant 0 : index
    %270 = vector.load %arg15[%c0_99, %c0_100, %c0_101] : memref<1x64x32xbf16, #tpu.memory_space<vmem>>, vector<1x64x32xbf16>
    %271 = vector.shape_cast %270 : vector<1x64x32xbf16> to vector<64x32xbf16>
    %cst_102 = arith.constant dense<0.000000e+00> : vector<16x32xf32>
    %272 = tpu.matmul %269, %271, %cst_102 {dimension_numbers = #tpu.dot_dimension_numbers<[1], [0], [0], [1], [0, 0, 1, 1], [], []>} : vector<16x64xbf16>, vector<64x32xbf16>, vector<16x32xf32> -> vector<16x32xf32>
    %c0_103 = arith.constant 0 : index
    %c0_104 = arith.constant 0 : index
    %c0_105 = arith.constant 0 : index
    %273 = vector.load %arg16[%c0_103, %c0_104, %c0_105] : memref<1x1x32xf32, #tpu.memory_space<vmem>>, vector<1x1x32xf32>
    %274 = vector.shape_cast %273 : vector<1x1x32xf32> to vector<1x32xf32>
    %275 = vector.broadcast %274 : vector<1x32xf32> to vector<16x32xf32>
    %276 = arith.addf %272, %275 : vector<16x32xf32>
    %277 = arith.addf %276, %193 : vector<16x32xf32>
    %278 = vector.shape_cast %277 : vector<16x32xf32> to vector<2x8x32xf32>
    %c0_106 = arith.constant 0 : index
    %c0_107 = arith.constant 0 : index
    %c0_108 = arith.constant 0 : index
    %279 = vector.load %arg17[%c0_106, %c0_107, %c0_108] : memref<2x8x32xf32, #tpu.memory_space<vmem>>, vector<2x8x32xf32>
    tpu.vector_store %arg17[%c0_106, %c0_107, %c0_108], %278 {strides = array<i32>} : memref<2x8x32xf32, #tpu.memory_space<vmem>>, vector<2x8x32xf32>,
    return
  }
  func.func @transform_0(%arg0: i32, %arg1: i32) -> (i32, i32, i32) {
    %c0_i32 = arith.constant 0 : i32
    %c0_i32_0 = arith.constant 0 : i32
    %c0_i32_1 = arith.constant 0 : i32
    return %arg0, %c0_i32, %c0_i32_0 : i32, i32, i32
  }
  func.func @transform_1(%arg0: i32, %arg1: i32) -> (i32, i32, i32) {
    %c0_i32 = arith.constant 0 : i32
    %c0_i32_0 = arith.constant 0 : i32
    %c0_i32_1 = arith.constant 0 : i32
    return %arg0, %c0_i32, %c0_i32_0 : i32, i32, i32
  }
  func.func @transform_2(%arg0: i32, %arg1: i32) -> (i32, i32, i32) {
    %c0_i32 = arith.constant 0 : i32
    %c0_i32_0 = arith.constant 0 : i32
    %c0_i32_1 = arith.constant 0 : i32
    return %arg1, %c0_i32, %c0_i32_0 : i32, i32, i32
  }
  func.func @transform_3(%arg0: i32, %arg1: i32) -> (i32, i32, i32) {
    %c0_i32 = arith.constant 0 : i32
    %c0_i32_0 = arith.constant 0 : i32
    %c0_i32_1 = arith.constant 0 : i32
    return %arg1, %c0_i32, %c0_i32_0 : i32, i32, i32
  }
  func.func @transform_4(%arg0: i32, %arg1: i32) -> (i32, i32, i32) {
    %c0_i32 = arith.constant 0 : i32
    %c0_i32_0 = arith.constant 0 : i32
    %c0_i32_1 = arith.constant 0 : i32
    return %arg1, %c0_i32, %c0_i32_0 : i32, i32, i32
  }
  func.func @transform_5(%arg0: i32, %arg1: i32) -> (i32, i32, i32) {
    %c0_i32 = arith.constant 0 : i32
    %c0_i32_0 = arith.constant 0 : i32
    %c0_i32_1 = arith.constant 0 : i32
    return %arg1, %c0_i32, %c0_i32_0 : i32, i32, i32
  }
  func.func @transform_6(%arg0: i32, %arg1: i32) -> (i32, i32, i32) {
    %c0_i32 = arith.constant 0 : i32
    %c0_i32_0 = arith.constant 0 : i32
    %c0_i32_1 = arith.constant 0 : i32
    return %arg1, %c0_i32, %c0_i32_0 : i32, i32, i32
  }
  func.func @transform_7(%arg0: i32, %arg1: i32) -> (i32, i32, i32, i32) {
    %c0_i32 = arith.constant 0 : i32
    %c0_i32_0 = arith.constant 0 : i32
    %c0_i32_1 = arith.constant 0 : i32
    %c0_i32_2 = arith.constant 0 : i32
    return %arg1, %c0_i32, %c0_i32_0, %c0_i32_1 : i32, i32, i32, i32
  }
  func.func @transform_8(%arg0: i32, %arg1: i32) -> (i32, i32, i32) {
    %c0_i32 = arith.constant 0 : i32
    %c0_i32_0 = arith.constant 0 : i32
    %c0_i32_1 = arith.constant 0 : i32
    return %arg1, %c0_i32, %c0_i32_0 : i32, i32, i32
  }
  func.func @transform_9(%arg0: i32, %arg1: i32) -> (i32, i32, i32) {
    %c0_i32 = arith.constant 0 : i32
    %c0_i32_0 = arith.constant 0 : i32
    %c0_i32_1 = arith.constant 0 : i32
    return %arg1, %c0_i32, %c0_i32_0 : i32, i32, i32
  }
  func.func @transform_10(%arg0: i32, %arg1: i32) -> (i32, i32, i32) {
    %c0_i32 = arith.constant 0 : i32
    %c0_i32_0 = arith.constant 0 : i32
    %c0_i32_1 = arith.constant 0 : i32
    return %arg1, %c0_i32, %c0_i32_0 : i32, i32, i32
  }
  func.func @transform_11(%arg0: i32, %arg1: i32) -> (i32, i32, i32) {
    %c0_i32 = arith.constant 0 : i32
    %c0_i32_0 = arith.constant 0 : i32
    %c0_i32_1 = arith.constant 0 : i32
    return %arg1, %c0_i32, %c0_i32_0 : i32, i32, i32
  }
  func.func @transform_12(%arg0: i32, %arg1: i32) -> (i32, i32, i32) {
    %c0_i32 = arith.constant 0 : i32
    %c0_i32_0 = arith.constant 0 : i32
    %c0_i32_1 = arith.constant 0 : i32
    return %arg1, %c0_i32, %c0_i32_0 : i32, i32, i32
  }
  func.func @transform_13(%arg0: i32, %arg1: i32) -> (i32, i32, i32) {
    %c0_i32 = arith.constant 0 : i32
    %c0_i32_0 = arith.constant 0 : i32
    %c0_i32_1 = arith.constant 0 : i32
    return %arg1, %c0_i32, %c0_i32_0 : i32, i32, i32
  }
  func.func @transform_14(%arg0: i32, %arg1: i32) -> (i32, i32, i32) {
    %c0_i32 = arith.constant 0 : i32
    %c0_i32_0 = arith.constant 0 : i32
    %c0_i32_1 = arith.constant 0 : i32
    return %arg1, %c0_i32, %c0_i32_0 : i32, i32, i32
  }
  func.func @transform_15(%arg0: i32, %arg1: i32) -> (i32, i32, i32) {
    %c0_i32 = arith.constant 0 : i32
    %c0_i32_0 = arith.constant 0 : i32
    %c0_i32_1 = arith.constant 0 : i32
    return %arg0, %c0_i32, %c0_i32_0 : i32, i32, i32
  }
}

</mosaic_0001>

<llo_original>
// kernel: tpu_custom_call.1
$region0: #{tpu_custom_call.1}
  #allocation0 [shape = 'u32[]', space=smem, size = 0x4, offset = 0x4, fixed_abs, tag = 'smem constant byte address 0x4 - core index']
  #allocation1 [shape = 'u32[144,128]{1,0:T(1,128)}', space=vmem, size = 0x12000, scoped, tag = 'internal scratch']
  %s0 = inlined_call_operand.hbm [shape: f32[2,8,32], index: 0, kind: input, shape index: {}]
  %s1 = inlined_call_operand.vmem [shape: f32[2,16,32], index: 1, kind: input, shape index: {}]
  %s2 = inlined_call_operand.vmem [shape: f32[2,1,32], index: 2, kind: input, shape index: {}]
  %s3 = inlined_call_operand.vmem [shape: f32[2,1,32], index: 3, kind: input, shape index: {}]
  %s4 = inlined_call_operand.vmem [shape: bf16[2,32,32], index: 4, kind: input, shape index: {}]
  %s5 = inlined_call_operand.vmem [shape: bf16[2,32,32], index: 5, kind: input, shape index: {}]
  %s6 = inlined_call_operand.hbm [shape: bf16[2,32,32], index: 6, kind: input, shape index: {}]
  %s7 = inlined_call_operand.hbm [shape: bf16[2,4,8,32], index: 7, kind: input, shape index: {}]
  %s8 = inlined_call_operand.vmem [shape: f32[2,1,32], index: 8, kind: input, shape index: {}]
  %s9 = inlined_call_operand.vmem [shape: f32[2,1,32], index: 9, kind: input, shape index: {}]
  %s10 = inlined_call_operand.vmem [shape: f32[2,1,32], index: 10, kind: input, shape index: {}]
  %s11 = inlined_call_operand.hbm [shape: bf16[2,32,64], index: 11, kind: input, shape index: {}]
  %s12 = inlined_call_operand.vmem [shape: f32[2,1,64], index: 12, kind: input, shape index: {}]
  %s13 = inlined_call_operand.vmem [shape: bf16[2,64,32], index: 13, kind: input, shape index: {}]
  %s14 = inlined_call_operand.vmem [shape: f32[2,1,32], index: 14, kind: input, shape index: {}]
  %s15 = inlined_call_operand.hbm [shape: f32[2,8,32], index: 15, kind: output, shape index: {}]
  %s16 = sld [smem:[#allocation0]]
  $region113: #{tpu_custom_call.1} parent=0
    _
  %s18 = ssub.s32 1, %s16
  %s19 = scalar_select 0, %s18, %s16
  $region1: #{tpu_custom_call.1} parent=0
    #allocation2 [shape = 'u8[8192]{0}', space=vmem, size = 0x2000, scoped, tag = 'input window, operand 0, single buffered']
    #allocation3 [shape = 's32[2]{0}', space=sflag, size = 0x8, scoped, tag = 'scoped memory for tpu_custom_call.1']
    #allocation4 [shape = 's32[2]{0}', space=sflag, size = 0x8, scoped, tag = 'scoped memory for tpu_custom_call.1']
    #allocation5 [shape = 'u8[16384]{0}', space=vmem, size = 0x4000, scoped, tag = 'input window, operand 6']
    #allocation6 [shape = 's32[2]{0}', space=sflag, size = 0x8, scoped, tag = 'scoped memory for tpu_custom_call.1']
    #allocation7 [shape = 'u8[16384]{0}', space=vmem, size = 0x4000, scoped, tag = 'input window, operand 7']
    #allocation8 [shape = 'u8[16384]{0}', space=vmem, size = 0x4000, scoped, tag = 'input window, operand 11']
    #allocation9 [shape = 's32[2]{0}', space=sflag, size = 0x8, scoped, tag = 'scoped memory for tpu_custom_call.1']
    #allocation10 [shape = 'u8[8192]{0}', space=vmem, size = 0x2000, scoped, tag = 'output window, operand 0, single buffered']
    %20 = vsyncpa [#allocation3], 0
    %21 = vsyncpa [#allocation6], 0
    %s22 = scalar_lea.sflag [#allocation6], 1
    %23 = vsyncpa %s22, 0
    %24 = vsyncpa [#allocation9], 0
    %s25 = scalar_lea.sflag [#allocation9], 1
    %26 = vsyncpa %s25, 0
    %27 = vsyncpa [#allocation4], 0
    loop: start=0, step=1, limit=4
    $region2: #{tpu_custom_call.1} parent=1 // loop_pre_header
      _
    $region3: #{tpu_custom_call.1} parent=1 // loop_header
      %s29 = sphi 0, %s33
      %p30 = scmp.ge.s32.totalorder %s29, 4
      %s36 = sphi 0, %s48
      %s37 = sphi 0, %s44
      %s38 = sphi 0, %s36
      %s39 = sphi 0, %s37
      %s40 = sphi 0, %s38
      %s41 = sphi 0, %s39
      %s51 = sphi 0, %s53
      %s54 = sphi 0, %s51
      %s55 = sphi 0, %s54
      %s71 = sphi 0, %s55
      %s77 = sphi 0, %s79
      %s80 = sphi 0, %s77
      %s81 = sphi 0, %s80
      %s97 = sphi 0, %s81
      %s103 = sphi 0, %s105
      %s106 = sphi 0, %s103
      %s107 = sphi 0, %s106
      %s123 = sphi 0, %s107
      %s129 = sphi 0, %s131
      %s132 = sphi 0, %s129
      %s133 = sphi 0, %s132
      %s149 = sphi 0, %s133
      %s155 = sphi 0, %s157
      %s158 = sphi 0, %s155
      %s159 = sphi 0, %s158
      %s175 = sphi 0, %s159
      %s181 = sphi 0, %s183
      %s184 = sphi 0, %s181
      %s185 = sphi 0, %s184
      %s201 = sphi 0, %s185
      %s207 = sphi 0, %s209
      %s210 = sphi 0, %s207
      %s211 = sphi 0, %s210
      %s227 = sphi 0, %s211
      %s233 = sphi 0, %s235
      %s236 = sphi 0, %s233
      %s237 = sphi 0, %s236
      %s253 = sphi 0, %s237
      %s259 = sphi 0, %s261
      %s262 = sphi 0, %s259
      %s263 = sphi 0, %s262
      %s279 = sphi 0, %s263
      %s285 = sphi 0, %s287
      %s288 = sphi 0, %s285
      %s289 = sphi 0, %s288
      %s305 = sphi 0, %s289
      %s311 = sphi 0, %s313
      %s314 = sphi 0, %s311
      %s315 = sphi 0, %s314
      %s331 = sphi 0, %s315
      %s337 = sphi 0, %s339
      %s340 = sphi 0, %s337
      %s341 = sphi 0, %s340
      %s357 = sphi 0, %s341
      %s363 = sphi 0, %s365
      %s366 = sphi 0, %s363
      %s367 = sphi 0, %s366
      %s383 = sphi 0, %s367
      %s389 = sphi 0, %s391
      %s392 = sphi 0, %s389
      %s393 = sphi 0, %s392
      %s409 = sphi 0, %s393
      %s415 = sphi 0, %s417
      %s418 = sphi 0, %s415
      %s419 = sphi 0, %s418
      %s435 = sphi 0, %s419
      %s441 = sphi 0, %s443
      %s444 = sphi 0, %s441
      %s445 = sphi 0, %s444
      %s461 = sphi 0, %s445
    $region4: #{tpu_custom_call.1} parent=1 // loop_header_branch
      %32 = sbr.rel (%p30) target = $region8
    $region5: #{tpu_custom_call.1} parent=1 // loop_body
      %s34 = ssub.s32 %s29, 1
      %s35 = ssub.s32 %s29, 2
      %s42 = sadd.s32 1, %s37
      %p43 = scmp.ge.s32.totalorder %s42, 2
      %s44 = scalar_select %p43, 0, %s42
      %s45 = sadd.s32 1, %s36
      %s46 = scalar_select %p43, %s45, %s36
      %p47 = scmp.ge.s32.totalorder %s46, 1
      %s48 = scalar_select %p47, 0, %s46
      %s49 = ssub.s32 %s36, %s48
      %p50 = scmp.eq.s32.totalorder %s49, 0
      %s52 = sadd.s32 %s51, 1
      %s53 = scalar_select %p50, %s51, %s52
      %p56 = pneg %p50
      %p57 = scmp.eq.s32.totalorder %s29, 1
      %p58 = por %p56, %p57
      %p59 = scmp.ne.s32.totalorder %s51, %s54
      %p60 = scmp.eq.s32.totalorder %s29, 0
      %p61 = por %p59, %p60
      %p62 = scmp.ne.s32.totalorder %s51, %s54
      %p63 = scmp.eq.s32.totalorder %s34, 1
      %p64 = por %p62, %p63
      %p65 = scmp.ne.s32.totalorder %s54, %s55
      %p66 = scmp.eq.s32.totalorder %s34, 0
      %p67 = por %p65, %p66
      %p68 = scmp.ne.s32.totalorder %s54, %s55
      %p69 = scmp.eq.s32.totalorder %s35, 1
      %p70 = por %p68, %p69
      %p72 = scmp.ne.s32.totalorder %s55, %s71
      %p73 = scmp.eq.s32.totalorder %s35, 0
      %p74 = por %p72, %p73
      %s75 = ssub.s32 %s36, %s48
      %p76 = scmp.eq.s32.totalorder %s75, 0
      %s78 = sadd.s32 %s77, 1
      %s79 = scalar_select %p76, %s77, %s78
      %p82 = pneg %p76
      %p83 = scmp.eq.s32.totalorder %s29, 1
      %p84 = por %p82, %p83
      %p85 = scmp.ne.s32.totalorder %s77, %s80
      %p86 = scmp.eq.s32.totalorder %s29, 0
      %p87 = por %p85, %p86
      %p88 = scmp.ne.s32.totalorder %s77, %s80
      %p89 = scmp.eq.s32.totalorder %s34, 1
      %p90 = por %p88, %p89
      %p91 = scmp.ne.s32.totalorder %s80, %s81
      %p92 = scmp.eq.s32.totalorder %s34, 0
      %p93 = por %p91, %p92
      %p94 = scmp.ne.s32.totalorder %s80, %s81
      %p95 = scmp.eq.s32.totalorder %s35, 1
      %p96 = por %p94, %p95
      %p98 = scmp.ne.s32.totalorder %s81, %s97
      %p99 = scmp.eq.s32.totalorder %s35, 0
      %p100 = por %p98, %p99
      %s101 = ssub.s32 %s37, %s44
      %p102 = scmp.eq.s32.totalorder %s101, 0
      %s104 = sadd.s32 %s103, 1
      %s105 = scalar_select %p102, %s103, %s104
      %p108 = pneg %p102
      %p109 = scmp.eq.s32.totalorder %s29, 1
      %p110 = por %p108, %p109
      %p111 = scmp.ne.s32.totalorder %s103, %s106
      %p112 = scmp.eq.s32.totalorder %s29, 0
      %p113 = por %p111, %p112
      %p114 = scmp.ne.s32.totalorder %s103, %s106
      %p115 = scmp.eq.s32.totalorder %s34, 1
      %p116 = por %p114, %p115
      %p117 = scmp.ne.s32.totalorder %s106, %s107
      %p118 = scmp.eq.s32.totalorder %s34, 0
      %p119 = por %p117, %p118
      %p120 = scmp.ne.s32.totalorder %s106, %s107
      %p121 = scmp.eq.s32.totalorder %s35, 1
      %p122 = por %p120, %p121
      %p124 = scmp.ne.s32.totalorder %s107, %s123
      %p125 = scmp.eq.s32.totalorder %s35, 0
      %p126 = por %p124, %p125
      %s127 = ssub.s32 %s37, %s44
      %p128 = scmp.eq.s32.totalorder %s127, 0
      %s130 = sadd.s32 %s129, 1
      %s131 = scalar_select %p128, %s129, %s130
      %p134 = pneg %p128
      %p135 = scmp.eq.s32.totalorder %s29, 1
      %p136 = por %p134, %p135
      %p137 = scmp.ne.s32.totalorder %s129, %s132
      %p138 = scmp.eq.s32.totalorder %s29, 0
      %p139 = por %p137, %p138
      %p140 = scmp.ne.s32.totalorder %s129, %s132
      %p141 = scmp.eq.s32.totalorder %s34, 1
      %p142 = por %p140, %p141
      %p143 = scmp.ne.s32.totalorder %s132, %s133
      %p144 = scmp.eq.s32.totalorder %s34, 0
      %p145 = por %p143, %p144
      %p146 = scmp.ne.s32.totalorder %s132, %s133
      %p147 = scmp.eq.s32.totalorder %s35, 1
      %p148 = por %p146, %p147
      %p150 = scmp.ne.s32.totalorder %s133, %s149
      %p151 = scmp.eq.s32.totalorder %s35, 0
      %p152 = por %p150, %p151
      %s153 = ssub.s32 %s37, %s44
      %p154 = scmp.eq.s32.totalorder %s153, 0
      %s156 = sadd.s32 %s155, 1
      %s157 = scalar_select %p154, %s155, %s156
      %p160 = pneg %p154
      %p161 = scmp.eq.s32.totalorder %s29, 1
      %p162 = por %p160, %p161
      %p163 = scmp.ne.s32.totalorder %s155, %s158
      %p164 = scmp.eq.s32.totalorder %s29, 0
      %p165 = por %p163, %p164
      %p166 = scmp.ne.s32.totalorder %s155, %s158
      %p167 = scmp.eq.s32.totalorder %s34, 1
      %p168 = por %p166, %p167
      %p169 = scmp.ne.s32.totalorder %s158, %s159
      %p170 = scmp.eq.s32.totalorder %s34, 0
      %p171 = por %p169, %p170
      %p172 = scmp.ne.s32.totalorder %s158, %s159
      %p173 = scmp.eq.s32.totalorder %s35, 1
      %p174 = por %p172, %p173
      %p176 = scmp.ne.s32.totalorder %s159, %s175
      %p177 = scmp.eq.s32.totalorder %s35, 0
      %p178 = por %p176, %p177
      %s179 = ssub.s32 %s37, %s44
      %p180 = scmp.eq.s32.totalorder %s179, 0
      %s182 = sadd.s32 %s181, 1
      %s183 = scalar_select %p180, %s181, %s182
      %p186 = pneg %p180
      %p187 = scmp.eq.s32.totalorder %s29, 1
      %p188 = por %p186, %p187
      %p189 = scmp.ne.s32.totalorder %s181, %s184
      %p190 = scmp.eq.s32.totalorder %s29, 0
      %p191 = por %p189, %p190
      %p192 = scmp.ne.s32.totalorder %s181, %s184
      %p193 = scmp.eq.s32.totalorder %s34, 1
      %p194 = por %p192, %p193
      %p195 = scmp.ne.s32.totalorder %s184, %s185
      %p196 = scmp.eq.s32.totalorder %s34, 0
      %p197 = por %p195, %p196
      %p198 = scmp.ne.s32.totalorder %s184, %s185
      %p199 = scmp.eq.s32.totalorder %s35, 1
      %p200 = por %p198, %p199
      %p202 = scmp.ne.s32.totalorder %s185, %s201
      %p203 = scmp.eq.s32.totalorder %s35, 0
      %p204 = por %p202, %p203
      %s205 = ssub.s32 %s37, %s44
      %p206 = scmp.eq.s32.totalorder %s205, 0
      %s208 = sadd.s32 %s207, 1
      %s209 = scalar_select %p206, %s207, %s208
      %p212 = pneg %p206
      %p213 = scmp.eq.s32.totalorder %s29, 1
      %p214 = por %p212, %p213
      %p215 = scmp.ne.s32.totalorder %s207, %s210
      %p216 = scmp.eq.s32.totalorder %s29, 0
      %p217 = por %p215, %p216
      %p218 = scmp.ne.s32.totalorder %s207, %s210
      %p219 = scmp.eq.s32.totalorder %s34, 1
      %p220 = por %p218, %p219
      %p221 = scmp.ne.s32.totalorder %s210, %s211
      %p222 = scmp.eq.s32.totalorder %s34, 0
      %p223 = por %p221, %p222
      %p224 = scmp.ne.s32.totalorder %s210, %s211
      %p225 = scmp.eq.s32.totalorder %s35, 1
      %p226 = por %p224, %p225
      %p228 = scmp.ne.s32.totalorder %s211, %s227
      %p229 = scmp.eq.s32.totalorder %s35, 0
      %p230 = por %p228, %p229
      %s231 = ssub.s32 %s37, %s44
      %p232 = scmp.eq.s32.totalorder %s231, 0
      %s234 = sadd.s32 %s233, 1
      %s235 = scalar_select %p232, %s233, %s234
      %p238 = pneg %p232
      %p239 = scmp.eq.s32.totalorder %s29, 1
      %p240 = por %p238, %p239
      %p241 = scmp.ne.s32.totalorder %s233, %s236
      %p242 = scmp.eq.s32.totalorder %s29, 0
      %p243 = por %p241, %p242
      %p244 = scmp.ne.s32.totalorder %s233, %s236
      %p245 = scmp.eq.s32.totalorder %s34, 1
      %p246 = por %p244, %p245
      %p247 = scmp.ne.s32.totalorder %s236, %s237
      %p248 = scmp.eq.s32.totalorder %s34, 0
      %p249 = por %p247, %p248
      %p250 = scmp.ne.s32.totalorder %s236, %s237
      %p251 = scmp.eq.s32.totalorder %s35, 1
      %p252 = por %p250, %p251
      %p254 = scmp.ne.s32.totalorder %s237, %s253
      %p255 = scmp.eq.s32.totalorder %s35, 0
      %p256 = por %p254, %p255
      %s257 = ssub.s32 %s37, %s44
      %p258 = scmp.eq.s32.totalorder %s257, 0
      %s260 = sadd.s32 %s259, 1
      %s261 = scalar_select %p258, %s259, %s260
      %p264 = pneg %p258
      %p265 = scmp.eq.s32.totalorder %s29, 1
      %p266 = por %p264, %p265
      %p267 = scmp.ne.s32.totalorder %s259, %s262
      %p268 = scmp.eq.s32.totalorder %s29, 0
      %p269 = por %p267, %p268
      %p270 = scmp.ne.s32.totalorder %s259, %s262
      %p271 = scmp.eq.s32.totalorder %s34, 1
      %p272 = por %p270, %p271
      %p273 = scmp.ne.s32.totalorder %s262, %s263
      %p274 = scmp.eq.s32.totalorder %s34, 0
      %p275 = por %p273, %p274
      %p276 = scmp.ne.s32.totalorder %s262, %s263
      %p277 = scmp.eq.s32.totalorder %s35, 1
      %p278 = por %p276, %p277
      %p280 = scmp.ne.s32.totalorder %s263, %s279
      %p281 = scmp.eq.s32.totalorder %s35, 0
      %p282 = por %p280, %p281
      %s283 = ssub.s32 %s37, %s44
      %p284 = scmp.eq.s32.totalorder %s283, 0
      %s286 = sadd.s32 %s285, 1
      %s287 = scalar_select %p284, %s285, %s286
      %p290 = pneg %p284
      %p291 = scmp.eq.s32.totalorder %s29, 1
      %p292 = por %p290, %p291
      %p293 = scmp.ne.s32.totalorder %s285, %s288
      %p294 = scmp.eq.s32.totalorder %s29, 0
      %p295 = por %p293, %p294
      %p296 = scmp.ne.s32.totalorder %s285, %s288
      %p297 = scmp.eq.s32.totalorder %s34, 1
      %p298 = por %p296, %p297
      %p299 = scmp.ne.s32.totalorder %s288, %s289
      %p300 = scmp.eq.s32.totalorder %s34, 0
      %p301 = por %p299, %p300
      %p302 = scmp.ne.s32.totalorder %s288, %s289
      %p303 = scmp.eq.s32.totalorder %s35, 1
      %p304 = por %p302, %p303
      %p306 = scmp.ne.s32.totalorder %s289, %s305
      %p307 = scmp.eq.s32.totalorder %s35, 0
      %p308 = por %p306, %p307
      %s309 = ssub.s32 %s37, %s44
      %p310 = scmp.eq.s32.totalorder %s309, 0
      %s312 = sadd.s32 %s311, 1
      %s313 = scalar_select %p310, %s311, %s312
      %p316 = pneg %p310
      %p317 = scmp.eq.s32.totalorder %s29, 1
      %p318 = por %p316, %p317
      %p319 = scmp.ne.s32.totalorder %s311, %s314
      %p320 = scmp.eq.s32.totalorder %s29, 0
      %p321 = por %p319, %p320
      %p322 = scmp.ne.s32.totalorder %s311, %s314
      %p323 = scmp.eq.s32.totalorder %s34, 1
      %p324 = por %p322, %p323
      %p325 = scmp.ne.s32.totalorder %s314, %s315
      %p326 = scmp.eq.s32.totalorder %s34, 0
      %p327 = por %p325, %p326
      %p328 = scmp.ne.s32.totalorder %s314, %s315
      %p329 = scmp.eq.s32.totalorder %s35, 1
      %p330 = por %p328, %p329
      %p332 = scmp.ne.s32.totalorder %s315, %s331
      %p333 = scmp.eq.s32.totalorder %s35, 0
      %p334 = por %p332, %p333
      %s335 = ssub.s32 %s37, %s44
      %p336 = scmp.eq.s32.totalorder %s335, 0
      %s338 = sadd.s32 %s337, 1
      %s339 = scalar_select %p336, %s337, %s338
      %p342 = pneg %p336
      %p343 = scmp.eq.s32.totalorder %s29, 1
      %p344 = por %p342, %p343
      %p345 = scmp.ne.s32.totalorder %s337, %s340
      %p346 = scmp.eq.s32.totalorder %s29, 0
      %p347 = por %p345, %p346
      %p348 = scmp.ne.s32.totalorder %s337, %s340
      %p349 = scmp.eq.s32.totalorder %s34, 1
      %p350 = por %p348, %p349
      %p351 = scmp.ne.s32.totalorder %s340, %s341
      %p352 = scmp.eq.s32.totalorder %s34, 0
      %p353 = por %p351, %p352
      %p354 = scmp.ne.s32.totalorder %s340, %s341
      %p355 = scmp.eq.s32.totalorder %s35, 1
      %p356 = por %p354, %p355
      %p358 = scmp.ne.s32.totalorder %s341, %s357
      %p359 = scmp.eq.s32.totalorder %s35, 0
      %p360 = por %p358, %p359
      %s361 = ssub.s32 %s37, %s44
      %p362 = scmp.eq.s32.totalorder %s361, 0
      %s364 = sadd.s32 %s363, 1
      %s365 = scalar_select %p362, %s363, %s364
      %p368 = pneg %p362
      %p369 = scmp.eq.s32.totalorder %s29, 1
      %p370 = por %p368, %p369
      %p371 = scmp.ne.s32.totalorder %s363, %s366
      %p372 = scmp.eq.s32.totalorder %s29, 0
      %p373 = por %p371, %p372
      %p374 = scmp.ne.s32.totalorder %s363, %s366
      %p375 = scmp.eq.s32.totalorder %s34, 1
      %p376 = por %p374, %p375
      %p377 = scmp.ne.s32.totalorder %s366, %s367
      %p378 = scmp.eq.s32.totalorder %s34, 0
      %p379 = por %p377, %p378
      %p380 = scmp.ne.s32.totalorder %s366, %s367
      %p381 = scmp.eq.s32.totalorder %s35, 1
      %p382 = por %p380, %p381
      %p384 = scmp.ne.s32.totalorder %s367, %s383
      %p385 = scmp.eq.s32.totalorder %s35, 0
      %p386 = por %p384, %p385
      %s387 = ssub.s32 %s37, %s44
      %p388 = scmp.eq.s32.totalorder %s387, 0
      %s390 = sadd.s32 %s389, 1
      %s391 = scalar_select %p388, %s389, %s390
      %p394 = pneg %p388
      %p395 = scmp.eq.s32.totalorder %s29, 1
      %p396 = por %p394, %p395
      %p397 = scmp.ne.s32.totalorder %s389, %s392
      %p398 = scmp.eq.s32.totalorder %s29, 0
      %p399 = por %p397, %p398
      %p400 = scmp.ne.s32.totalorder %s389, %s392
      %p401 = scmp.eq.s32.totalorder %s34, 1
      %p402 = por %p400, %p401
      %p403 = scmp.ne.s32.totalorder %s392, %s393
      %p404 = scmp.eq.s32.totalorder %s34, 0
      %p405 = por %p403, %p404
      %p406 = scmp.ne.s32.totalorder %s392, %s393
      %p407 = scmp.eq.s32.totalorder %s35, 1
      %p408 = por %p406, %p407
      %p410 = scmp.ne.s32.totalorder %s393, %s409
      %p411 = scmp.eq.s32.totalorder %s35, 0
      %p412 = por %p410, %p411
      %s413 = ssub.s32 %s37, %s44
      %p414 = scmp.eq.s32.totalorder %s413, 0
      %s416 = sadd.s32 %s415, 1
      %s417 = scalar_select %p414, %s415, %s416
      %p420 = pneg %p414
      %p421 = scmp.eq.s32.totalorder %s29, 1
      %p422 = por %p420, %p421
      %p423 = scmp.ne.s32.totalorder %s415, %s418
      %p424 = scmp.eq.s32.totalorder %s29, 0
      %p425 = por %p423, %p424
      %p426 = scmp.ne.s32.totalorder %s415, %s418
      %p427 = scmp.eq.s32.totalorder %s34, 1
      %p428 = por %p426, %p427
      %p429 = scmp.ne.s32.totalorder %s418, %s419
      %p430 = scmp.eq.s32.totalorder %s34, 0
      %p431 = por %p429, %p430
      %p432 = scmp.ne.s32.totalorder %s418, %s419
      %p433 = scmp.eq.s32.totalorder %s35, 1
      %p434 = por %p432, %p433
      %p436 = scmp.ne.s32.totalorder %s419, %s435
      %p437 = scmp.eq.s32.totalorder %s35, 0
      %p438 = por %p436, %p437
      %s439 = ssub.s32 %s36, %s48
      %p440 = scmp.eq.s32.totalorder %s439, 0
      %s442 = sadd.s32 %s441, 1
      %s443 = scalar_select %p440, %s441, %s442
      %p446 = pneg %p440
      %p447 = scmp.eq.s32.totalorder %s29, 1
      %p448 = por %p446, %p447
      %p449 = scmp.ne.s32.totalorder %s441, %s444
      %p450 = scmp.eq.s32.totalorder %s29, 0
      %p451 = por %p449, %p450
      %p452 = scmp.ne.s32.totalorder %s441, %s444
      %p453 = scmp.eq.s32.totalorder %s34, 1
      %p454 = por %p452, %p453
      %p455 = scmp.ne.s32.totalorder %s444, %s445
      %p456 = scmp.eq.s32.totalorder %s34, 0
      %p457 = por %p455, %p456
      %p458 = scmp.ne.s32.totalorder %s444, %s445
      %p459 = scmp.eq.s32.totalorder %s35, 1
      %p460 = por %p458, %p459
      %p462 = scmp.ne.s32.totalorder %s445, %s461
      %p463 = scmp.eq.s32.totalorder %s35, 0
      %p464 = por %p462, %p463
      %p465 = scmp.le.s32.totalorder 1, %s29
      %p466 = scmp.lt.s32.totalorder %s29, 3
      %p467 = pnand %p465, %p466
      %p468 = pneg %p467
      // Predicated region
      $region9: #{tpu_custom_call.1} parent=5 // pred_check
        _
      $region10: #{tpu_custom_call.1} parent=5 // pred_check_branch
        %470 = sbr.rel (%p467) target = $region12
      $region11: #{tpu_custom_call.1} parent=5 // pred_region
        %s471 = ssub.s32 %s29, 1
        // Predicated region
        $region13: #{tpu_custom_call.1} parent=11 // pred_check
          %p472 = pneg %p67
        $region14: #{tpu_custom_call.1} parent=11 // pred_check_branch
          %474 = sbr.rel (%p472) target = $region16
        $region15: #{tpu_custom_call.1} parent=11 // pred_region
          %s475 = smul.u32 2, %s38
          %s477 = ssub.s32 256, 256
          %478 = vsyncadd [#allocation3], %s477
          %s479 = smul.addr %s475, 128
          %s480 = scalar_lea.hbm %s0, %s479
          %s481 = sshll.u32 [#allocation2], 4
          %s482 = int_to_ptr.vmem [resolvable:$true] %s481
          %487 = dma.hbm_to_vmem [thread:$0]  %s480, 256, %s482, [#allocation3], 128, 128, 8
        $region16: #{tpu_custom_call.1} parent=11 // pred_fallthru
          _
        // Predicated region
        $region17: #{tpu_custom_call.1} parent=11 // pred_check
          %p488 = pneg %p93
        $region18: #{tpu_custom_call.1} parent=11 // pred_check_branch
          %490 = sbr.rel (%p488) target = $region20
        $region19: #{tpu_custom_call.1} parent=11 // pred_region
          %s491 = smul.u32 2, %s38
          %p492 = scmp.lt.s32.totalorder %s491, 1
          %s493 = scalar_select %p492, %s491, 1
          %s494 = smul.addr %s493, 2
          %s495 = smul.addr %s494, 8
          %s496 = scalar_lea.vmem %s1, %s495
          %s497 = smul.u32 2, %s38
        $region20: #{tpu_custom_call.1} parent=11 // pred_fallthru
          _
      $region12: #{tpu_custom_call.1} parent=5 // pred_fallthru
        _
      %p498 = scmp.lt.s32.totalorder %s29, 2
      // Predicated region
      $region21: #{tpu_custom_call.1} parent=5 // pred_check
        %p499 = pneg %p498
      $region22: #{tpu_custom_call.1} parent=5 // pred_check_branch
        %501 = sbr.rel (%p499) target = $region24
      $region23: #{tpu_custom_call.1} parent=5 // pred_region
        // Predicated region
        $region25: #{tpu_custom_call.1} parent=23 // pred_check
          %p502 = pneg %p113
        $region26: #{tpu_custom_call.1} parent=23 // pred_check_branch
          %504 = sbr.rel (%p502) target = $region28
        $region27: #{tpu_custom_call.1} parent=23 // pred_region
          %p505 = scmp.lt.s32.totalorder %s37, 1
          %s506 = scalar_select %p505, %s37, 1
          %s507 = scalar_lea.vmem %s2, %s506
        $region28: #{tpu_custom_call.1} parent=23 // pred_fallthru
          _
        // Predicated region
        $region29: #{tpu_custom_call.1} parent=23 // pred_check
          %p508 = pneg %p139
        $region30: #{tpu_custom_call.1} parent=23 // pred_check_branch
          %510 = sbr.rel (%p508) target = $region32
        $region31: #{tpu_custom_call.1} parent=23 // pred_region
          %p511 = scmp.lt.s32.totalorder %s37, 1
          %s512 = scalar_select %p511, %s37, 1
          %s513 = scalar_lea.vmem %s3, %s512
        $region32: #{tpu_custom_call.1} parent=23 // pred_fallthru
          _
        // Predicated region
        $region33: #{tpu_custom_call.1} parent=23 // pred_check
          %p514 = pneg %p165
        $region34: #{tpu_custom_call.1} parent=23 // pred_check_branch
          %516 = sbr.rel (%p514) target = $region36
        $region35: #{tpu_custom_call.1} parent=23 // pred_region
          %p517 = scmp.lt.s32.totalorder %s37, 1
          %s518 = scalar_select %p517, %s37, 1
          %s519 = smul.addr %s518, 4
          %s520 = smul.addr %s519, 4
          %s521 = scalar_lea.vmem %s4, %s520
        $region36: #{tpu_custom_call.1} parent=23 // pred_fallthru
          _
        // Predicated region
        $region37: #{tpu_custom_call.1} parent=23 // pred_check
          %p522 = pneg %p191
        $region38: #{tpu_custom_call.1} parent=23 // pred_check_branch
          %524 = sbr.rel (%p522) target = $region40
        $region39: #{tpu_custom_call.1} parent=23 // pred_region
          %p525 = scmp.lt.s32.totalorder %s37, 1
          %s526 = scalar_select %p525, %s37, 1
          %s527 = smul.addr %s526, 4
          %s528 = smul.addr %s527, 4
          %s529 = scalar_lea.vmem %s5, %s528
        $region40: #{tpu_custom_call.1} parent=23 // pred_fallthru
          _
        // Predicated region
        $region41: #{tpu_custom_call.1} parent=23 // pred_check
          %p530 = pneg %p217
        $region42: #{tpu_custom_call.1} parent=23 // pred_check_branch
          %532 = sbr.rel (%p530) target = $region44
        $region43: #{tpu_custom_call.1} parent=23 // pred_region
          %s533 = sand.u32 %s29, 1
          %s534 = scalar_lea.sflag [#allocation6], %s533
          %s535 = sand.u32 %s207, 1
          %s536 = smul.addr %s535, 16
          %s537 = scalar_lea.vmem [#allocation5], %s536
          %s539 = ssub.s32 256, 256
          %540 = vsyncadd %s534, %s539
          %s541 = smul.addr %s37, 4
          %s542 = smul.addr %s541, 64
          %s543 = scalar_lea.hbm %s6, %s542
          %s544 = sshll.u32 %s537, 4
          %s545 = int_to_ptr.vmem [resolvable:$true] %s544
          %550 = dma.hbm_to_vmem [thread:$0]  %s543, 256, %s545, %s534, 64, 64, 4
        $region44: #{tpu_custom_call.1} parent=23 // pred_fallthru
          _
        // Predicated region
        $region45: #{tpu_custom_call.1} parent=23 // pred_check
          %p551 = pneg %p243
        $region46: #{tpu_custom_call.1} parent=23 // pred_check_branch
          %553 = sbr.rel (%p551) target = $region48
        $region47: #{tpu_custom_call.1} parent=23 // pred_region
          %s554 = sand.u32 %s29, 1
          %s555 = scalar_lea.sflag [#allocation6], %s554
          %s556 = sand.u32 %s233, 1
          %s557 = smul.addr %s556, 16
          %s558 = scalar_lea.vmem [#allocation7], %s557
          %s560 = ssub.s32 256, 256
          %561 = vsyncadd %s555, %s560
          %s562 = smul.addr %s37, 4
          %s563 = smul.addr %s562, 64
          %s564 = scalar_lea.hbm %s7, %s563
          %s565 = sshll.u32 %s558, 4
          %s566 = int_to_ptr.vmem [resolvable:$true] %s565
          %571 = dma.hbm_to_vmem [thread:$0]  %s564, 256, %s566, %s555, 64, 64, 4
        $region48: #{tpu_custom_call.1} parent=23 // pred_fallthru
          _
        // Predicated region
        $region49: #{tpu_custom_call.1} parent=23 // pred_check
          %p572 = pneg %p269
        $region50: #{tpu_custom_call.1} parent=23 // pred_check_branch
          %574 = sbr.rel (%p572) target = $region52
        $region51: #{tpu_custom_call.1} parent=23 // pred_region
          %p575 = scmp.lt.s32.totalorder %s37, 1
          %s576 = scalar_select %p575, %s37, 1
          %s577 = scalar_lea.vmem %s8, %s576
        $region52: #{tpu_custom_call.1} parent=23 // pred_fallthru
          _
        // Predicated region
        $region53: #{tpu_custom_call.1} parent=23 // pred_check
          %p578 = pneg %p295
        $region54: #{tpu_custom_call.1} parent=23 // pred_check_branch
          %580 = sbr.rel (%p578) target = $region56
        $region55: #{tpu_custom_call.1} parent=23 // pred_region
          %p581 = scmp.lt.s32.totalorder %s37, 1
          %s582 = scalar_select %p581, %s37, 1
          %s583 = scalar_lea.vmem %s9, %s582
        $region56: #{tpu_custom_call.1} parent=23 // pred_fallthru
          _
        // Predicated region
        $region57: #{tpu_custom_call.1} parent=23 // pred_check
          %p584 = pneg %p321
        $region58: #{tpu_custom_call.1} parent=23 // pred_check_branch
          %586 = sbr.rel (%p584) target = $region60
        $region59: #{tpu_custom_call.1} parent=23 // pred_region
          %p587 = scmp.lt.s32.totalorder %s37, 1
          %s588 = scalar_select %p587, %s37, 1
          %s589 = scalar_lea.vmem %s10, %s588
        $region60: #{tpu_custom_call.1} parent=23 // pred_fallthru
          _
        // Predicated region
        $region61: #{tpu_custom_call.1} parent=23 // pred_check
          %p590 = pneg %p347
        $region62: #{tpu_custom_call.1} parent=23 // pred_check_branch
          %592 = sbr.rel (%p590) target = $region64
        $region63: #{tpu_custom_call.1} parent=23 // pred_region
          %s593 = sand.u32 %s337, 1
          %s594 = scalar_lea.sflag [#allocation9], %s593
          %s595 = sand.u32 %s337, 1
          %s596 = smul.addr %s595, 16
          %s597 = scalar_lea.vmem [#allocation8], %s596
          %s599 = ssub.s32 256, 256
          %600 = vsyncadd %s594, %s599
          %s601 = smul.addr %s37, 4
          %s602 = smul.addr %s601, 64
          %s603 = scalar_lea.hbm %s11, %s602
          %s604 = sshll.u32 %s597, 4
          %s605 = int_to_ptr.vmem [resolvable:$true] %s604
          %610 = dma.hbm_to_vmem [thread:$0]  %s603, 256, %s605, %s594, 64, 64, 4
        $region64: #{tpu_custom_call.1} parent=23 // pred_fallthru
          _
        // Predicated region
        $region65: #{tpu_custom_call.1} parent=23 // pred_check
          %p611 = pneg %p373
        $region66: #{tpu_custom_call.1} parent=23 // pred_check_branch
          %613 = sbr.rel (%p611) target = $region68
        $region67: #{tpu_custom_call.1} parent=23 // pred_region
          %p614 = scmp.lt.s32.totalorder %s37, 1
          %s615 = scalar_select %p614, %s37, 1
          %s616 = scalar_lea.vmem %s12, %s615
        $region68: #{tpu_custom_call.1} parent=23 // pred_fallthru
          _
        // Predicated region
        $region69: #{tpu_custom_call.1} parent=23 // pred_check
          %p617 = pneg %p399
        $region70: #{tpu_custom_call.1} parent=23 // pred_check_branch
          %619 = sbr.rel (%p617) target = $region72
        $region71: #{tpu_custom_call.1} parent=23 // pred_region
          %p620 = scmp.lt.s32.totalorder %s37, 1
          %s621 = scalar_select %p620, %s37, 1
          %s622 = smul.addr %s621, 8
          %s623 = smul.addr %s622, 4
          %s624 = scalar_lea.vmem %s13, %s623
        $region72: #{tpu_custom_call.1} parent=23 // pred_fallthru
          _
        // Predicated region
        $region73: #{tpu_custom_call.1} parent=23 // pred_check
          %p625 = pneg %p425
        $region74: #{tpu_custom_call.1} parent=23 // pred_check_branch
          %627 = sbr.rel (%p625) target = $region76
        $region75: #{tpu_custom_call.1} parent=23 // pred_region
          %p628 = scmp.lt.s32.totalorder %s37, 1
          %s629 = scalar_select %p628, %s37, 1
          %s630 = scalar_lea.vmem %s14, %s629
        $region76: #{tpu_custom_call.1} parent=23 // pred_fallthru
          _
      $region24: #{tpu_custom_call.1} parent=5 // pred_fallthru
        _
      %p631 = scmp.le.s32.totalorder 1, %s29
      %p632 = scmp.lt.s32.totalorder %s29, 3
      %p633 = pnand %p631, %p632
      %p634 = pneg %p633
      // Predicated region
      $region77: #{tpu_custom_call.1} parent=5 // pred_check
        _
      $region78: #{tpu_custom_call.1} parent=5 // pred_check_branch
        %636 = sbr.rel (%p633) target = $region80
      $region79: #{tpu_custom_call.1} parent=5 // pred_region
        %s637 = ssub.s32 %s29, 1
        // Predicated region
        $region81: #{tpu_custom_call.1} parent=79 // pred_check
          %p638 = pneg %p67
        $region82: #{tpu_custom_call.1} parent=79 // pred_check_branch
          %640 = sbr.rel (%p638) target = $region84
        $region83: #{tpu_custom_call.1} parent=79 // pred_region
          %641 = dma.done [#allocation3], 256
        $region84: #{tpu_custom_call.1} parent=79 // pred_fallthru
          _
        %s642 = sand.u32 %s34, 1
        %s643 = scalar_lea.sflag [#allocation6], %s642
        %s644 = sand.u32 %s210, 1
        %s645 = smul.addr %s644, 16
        %s646 = scalar_lea.vmem [#allocation5], %s645
        // Predicated region
        $region85: #{tpu_custom_call.1} parent=79 // pred_check
          %p647 = pneg %p223
        $region86: #{tpu_custom_call.1} parent=79 // pred_check_branch
          %649 = sbr.rel (%p647) target = $region88
        $region87: #{tpu_custom_call.1} parent=79 // pred_region
          %650 = dma.done %s643, 256
        $region88: #{tpu_custom_call.1} parent=79 // pred_fallthru
          _
        %s651 = sand.u32 %s34, 1
        %s652 = scalar_lea.sflag [#allocation6], %s651
        %s653 = sand.u32 %s236, 1
        %s654 = smul.addr %s653, 16
        %s655 = scalar_lea.vmem [#allocation7], %s654
        // Predicated region
        $region89: #{tpu_custom_call.1} parent=79 // pred_check
          %p656 = pneg %p249
        $region90: #{tpu_custom_call.1} parent=79 // pred_check_branch
          %658 = sbr.rel (%p656) target = $region92
        $region91: #{tpu_custom_call.1} parent=79 // pred_region
          %659 = dma.done %s652, 256
        $region92: #{tpu_custom_call.1} parent=79 // pred_fallthru
          _
        %s660 = sand.u32 %s340, 1
        %s661 = scalar_lea.sflag [#allocation9], %s660
        %s662 = sand.u32 %s340, 1
        %s663 = smul.addr %s662, 16
        %s664 = scalar_lea.vmem [#allocation8], %s663
        // Predicated region
        $region93: #{tpu_custom_call.1} parent=79 // pred_check
          %p665 = pneg %p353
        $region94: #{tpu_custom_call.1} parent=79 // pred_check_branch
          %667 = sbr.rel (%p665) target = $region96
        $region95: #{tpu_custom_call.1} parent=79 // pred_region
          %668 = dma.done %s661, 256
        $region96: #{tpu_custom_call.1} parent=79 // pred_fallthru
          _
        %p669 = pneg %p67
        %p670 = pneg %p64
        %s671 = smul.u32 2, %s38
        %p672 = scmp.lt.s32.totalorder %s671, 1
        %s673 = scalar_select %p672, %s671, 1
        %s674 = smul.addr %s673, 2
        %s675 = smul.addr %s674, 8
        %s676 = scalar_lea.vmem %s1, %s675
        %p677 = pneg %p93
        %p678 = pneg %p90
        %p679 = scmp.lt.s32.totalorder %s39, 1
        %s680 = scalar_select %p679, %s39, 1
        %s681 = scalar_lea.vmem %s2, %s680
        %p682 = pneg %p119
        %p683 = pneg %p116
        %p684 = scmp.lt.s32.totalorder %s39, 1
        %s685 = scalar_select %p684, %s39, 1
        %s686 = scalar_lea.vmem %s3, %s685
        %p687 = pneg %p145
        %p688 = pneg %p142
        %p689 = scmp.lt.s32.totalorder %s39, 1
        %s690 = scalar_select %p689, %s39, 1
        %s691 = smul.addr %s690, 4
        %s692 = smul.addr %s691, 4
        %s693 = scalar_lea.vmem %s4, %s692
        %p694 = pneg %p171
        %p695 = pneg %p168
        %p696 = scmp.lt.s32.totalorder %s39, 1
        %s697 = scalar_select %p696, %s39, 1
        %s698 = smul.addr %s697, 4
        %s699 = smul.addr %s698, 4
        %s700 = scalar_lea.vmem %s5, %s699
        %p701 = pneg %p197
        %p702 = pneg %p194
        %s703 = sand.u32 %s34, 1
        %s704 = scalar_lea.sflag [#allocation6], %s703
        %s705 = sand.u32 %s210, 1
        %s706 = smul.addr %s705, 16
        %s707 = scalar_lea.vmem [#allocation5], %s706
        %p708 = pneg %p223
        %p709 = pneg %p220
        %s710 = sand.u32 %s34, 1
        %s711 = scalar_lea.sflag [#allocation6], %s710
        %s712 = sand.u32 %s236, 1
        %s713 = smul.addr %s712, 16
        %s714 = scalar_lea.vmem [#allocation7], %s713
        %p715 = pneg %p249
        %p716 = pneg %p246
        %p717 = scmp.lt.s32.totalorder %s39, 1
        %s718 = scalar_select %p717, %s39, 1
        %s719 = scalar_lea.vmem %s8, %s718
        %p720 = pneg %p275
        %p721 = pneg %p272
        %p722 = scmp.lt.s32.totalorder %s39, 1
        %s723 = scalar_select %p722, %s39, 1
        %s724 = scalar_lea.vmem %s9, %s723
        %p725 = pneg %p301
        %p726 = pneg %p298
        %p727 = scmp.lt.s32.totalorder %s39, 1
        %s728 = scalar_select %p727, %s39, 1
        %s729 = scalar_lea.vmem %s10, %s728
        %p730 = pneg %p327
        %p731 = pneg %p324
        %s732 = sand.u32 %s340, 1
        %s733 = scalar_lea.sflag [#allocation9], %s732
        %s734 = sand.u32 %s340, 1
        %s735 = smul.addr %s734, 16
        %s736 = scalar_lea.vmem [#allocation8], %s735
        %p737 = pneg %p353
        %p738 = pneg %p350
        %p739 = scmp.lt.s32.totalorder %s39, 1
        %s740 = scalar_select %p739, %s39, 1
        %s741 = scalar_lea.vmem %s12, %s740
        %p742 = pneg %p379
        %p743 = pneg %p376
        %p744 = scmp.lt.s32.totalorder %s39, 1
        %s745 = scalar_select %p744, %s39, 1
        %s746 = smul.addr %s745, 8
        %s747 = smul.addr %s746, 4
        %s748 = scalar_lea.vmem %s13, %s747
        %p749 = pneg %p405
        %p750 = pneg %p402
        %p751 = scmp.lt.s32.totalorder %s39, 1
        %s752 = scalar_select %p751, %s39, 1
        %s753 = scalar_lea.vmem %s14, %s752
        %p754 = pneg %p431
        %p755 = pneg %p428
        %p756 = pneg %p457
        %p757 = pneg %p454
        %s758 = smul.u32 2, %s38
        %s759 = smul.u32 2, %s38
        %p760 = scmp.lt.s32.totalorder %s759, 1
        %s761 = scalar_select %p760, %s759, 1
        %s762 = smul.addr %s761, 2
        %s763 = smul.addr %s762, 8
        %s764 = scalar_lea.vmem %s1, %s763
        %s765 = smul.u32 2, %s38
        %p766 = scmp.lt.s32.totalorder %s39, 1
        %s767 = scalar_select %p766, %s39, 1
        %s768 = scalar_lea.vmem %s2, %s767
        %p769 = scmp.lt.s32.totalorder %s39, 1
        %s770 = scalar_select %p769, %s39, 1
        %s771 = scalar_lea.vmem %s3, %s770
        %p772 = scmp.lt.s32.totalorder %s39, 1
        %s773 = scalar_select %p772, %s39, 1
        %s774 = smul.addr %s773, 4
        %s775 = smul.addr %s774, 4
        %s776 = scalar_lea.vmem %s4, %s775
        %p777 = scmp.lt.s32.totalorder %s39, 1
        %s778 = scalar_select %p777, %s39, 1
        %s779 = smul.addr %s778, 4
        %s780 = smul.addr %s779, 4
        %s781 = scalar_lea.vmem %s5, %s780
        %p782 = scmp.lt.s32.totalorder %s39, 1
        %s783 = scalar_select %p782, %s39, 1
        %s784 = scalar_lea.vmem %s8, %s783
        %p785 = scmp.lt.s32.totalorder %s39, 1
        %s786 = scalar_select %p785, %s39, 1
        %s787 = scalar_lea.vmem %s9, %s786
        %p788 = scmp.lt.s32.totalorder %s39, 1
        %s789 = scalar_select %p788, %s39, 1
        %s790 = scalar_lea.vmem %s10, %s789
        %p791 = scmp.lt.s32.totalorder %s39, 1
        %s792 = scalar_select %p791, %s39, 1
        %s793 = scalar_lea.vmem %s12, %s792
        %p794 = scmp.lt.s32.totalorder %s39, 1
        %s795 = scalar_select %p794, %s39, 1
        %s796 = smul.addr %s795, 8
        %s797 = smul.addr %s796, 4
        %s798 = scalar_lea.vmem %s13, %s797
        %p799 = scmp.lt.s32.totalorder %s39, 1
        %s800 = scalar_select %p799, %s39, 1
        %s801 = scalar_lea.vmem %s14, %s800
        %s802 = smul.u32 2, %s38
        %p804 = scmp.eq.s32.totalorder %s39, 0
        // Predicated region
        $region97: #{tpu_custom_call.1} parent=79 // pred_check
          %p805 = pneg %p804
        $region98: #{tpu_custom_call.1} parent=79 // pred_check_branch
          %807 = sbr.rel (%p805) target = $region100
        $region99: #{tpu_custom_call.1} parent=79 // pred_region
          %v808 = vld [vmem:[#allocation2] sm:$0xff]
          %v809 = vld [vmem:[#allocation2 + $0x8] sm:$0xff]
          %vm810 = vcmask 261120
          %811 = vst.msk [vmem:[#allocation10] sm:$0xff] %vm810, %v808
          %812 = vst.msk [vmem:[#allocation10 + $0x8] sm:$0xff] %vm810, %v809
        $region100: #{tpu_custom_call.1} parent=79 // pred_fallthru
          _
        %v813 = vld [vmem:[#allocation10] sm:$0xff]
        %v814 = vld [vmem:[#allocation10 + $0x8] sm:$0xff]
        %v815 = vld [vmem:[%s764] sm:$0xff]
        %v816 = vld [vmem:[%s764 + $0x8] sm:$0xff]
        %v817 = vld [vmem:[%s764 + $0x10] sm:$0xff]
        %v818 = vld [vmem:[%s764 + $0x18] sm:$0xff]
        %v819 = vld [vmem:[%s768] sm:$0x1]
        %v820 = vld [vmem:[%s771] sm:$0x1]
        %vm821 = vcmask 261120
        %v822 = vsel %vm821, %v813, 0.0
        %823 = vadd.xlane.f32.xlu0 %v822
        %v824 = vpop.xlane.xlu0 %823
        %v825 = vsel %vm821, %v814, 0.0
        %826 = vadd.xlane.f32.xlu0 %v825
        %v827 = vpop.xlane.xlu0 %826
        %v828 = vrcp.pop 32.0
        %v829 = vmul.f32 %v824, %v828
        %v830 = vmul.f32 %v827, %v828
        %v831 = vsub.f32 %v813, %v829
        %v832 = vsub.f32 %v814, %v830
        %v833 = vmul.f32 %v831, %v831
        %v834 = vmul.f32 %v832, %v832
        %v835 = vsel %vm821, %v833, 0.0
        %836 = vadd.xlane.f32.xlu0 %v835
        %v837 = vpop.xlane.xlu0 %836
        %v838 = vsel %vm821, %v834, 0.0
        %839 = vadd.xlane.f32.xlu0 %v838
        %v840 = vpop.xlane.xlu0 %839
        %v841 = vmul.f32 %v837, %v828
        %v842 = vmul.f32 %v840, %v828
        %v843 = vadd.f32 %v841, 1e-05
        %v844 = vadd.f32 %v842, 1e-05
        %v845 = vrsqrt.pop %v843
        %v846 = vrsqrt.pop %v844
        %v847 = vmul.f32 %v831, %v845
        %v848 = vmul.f32 %v832, %v846
        %v850 = vlaneseq
        %v851 = vshrl.u32 %v850, 7
        %v852 = vsub.s32 0, %v851
        %v853 = vrot.slane %v819, %v852
        %v855 = vmul.f32 %v847, %v853
        %v856 = vmul.f32 %v848, %v853
        %v858 = vlaneseq
        %v859 = vshrl.u32 %v858, 7
        %v860 = vsub.s32 0, %v859
        %v861 = vrot.slane %v820, %v860
        %v863 = vadd.f32 %v855, %v861
        %v864 = vadd.f32 %v856, %v861
        %v865 = vpack.c.bf16 %v864, %v863
        %v866 = vsel %vm821, %v815, 0.0
        %867 = vadd.xlane.f32.xlu0 %v866
        %v868 = vpop.xlane.xlu0 %867
        %v869 = vsel %vm821, %v816, 0.0
        %870 = vadd.xlane.f32.xlu0 %v869
        %v871 = vpop.xlane.xlu0 %870
        %v872 = vsel %vm821, %v817, 0.0
        %873 = vadd.xlane.f32.xlu0 %v872
        %v874 = vpop.xlane.xlu0 %873
        %v875 = vsel %vm821, %v818, 0.0
        %876 = vadd.xlane.f32.xlu0 %v875
        %v877 = vpop.xlane.xlu0 %876
        %v878 = vmul.f32 %v868, %v828
        %v879 = vmul.f32 %v871, %v828
        %v880 = vmul.f32 %v874, %v828
        %v881 = vmul.f32 %v877, %v828
        %v882 = vsub.f32 %v815, %v878
        %v883 = vsub.f32 %v816, %v879
        %v884 = vsub.f32 %v817, %v880
        %v885 = vsub.f32 %v818, %v881
        %v886 = vmul.f32 %v882, %v882
        %v887 = vmul.f32 %v883, %v883
        %v888 = vmul.f32 %v884, %v884
        %v889 = vmul.f32 %v885, %v885
        %v890 = vsel %vm821, %v886, 0.0
        %891 = vadd.xlane.f32.xlu0 %v890
        %v892 = vpop.xlane.xlu0 %891
        %v893 = vsel %vm821, %v887, 0.0
        %894 = vadd.xlane.f32.xlu0 %v893
        %v895 = vpop.xlane.xlu0 %894
        %v896 = vsel %vm821, %v888, 0.0
        %897 = vadd.xlane.f32.xlu0 %v896
        %v898 = vpop.xlane.xlu0 %897
        %v899 = vsel %vm821, %v889, 0.0
        %900 = vadd.xlane.f32.xlu0 %v899
        %v901 = vpop.xlane.xlu0 %900
        %v902 = vmul.f32 %v892, %v828
        %v903 = vmul.f32 %v895, %v828
        %v904 = vmul.f32 %v898, %v828
        %v905 = vmul.f32 %v901, %v828
        %v906 = vadd.f32 %v902, 1e-05
        %v907 = vadd.f32 %v903, 1e-05
        %v908 = vadd.f32 %v904, 1e-05
        %v909 = vadd.f32 %v905, 1e-05
        %v910 = vrsqrt.pop %v906
        %v911 = vrsqrt.pop %v907
        %v912 = vrsqrt.pop %v908
        %v913 = vrsqrt.pop %v909
        %v914 = vmul.f32 %v882, %v910
        %v915 = vmul.f32 %v883, %v911
        %v916 = vmul.f32 %v884, %v912
        %v917 = vmul.f32 %v885, %v913
        %v918 = vmul.f32 %v914, %v853
        %v919 = vmul.f32 %v915, %v853
        %v920 = vmul.f32 %v916, %v853
        %v921 = vmul.f32 %v917, %v853
        %v922 = vadd.f32 %v918, %v861
        %v923 = vadd.f32 %v919, %v861
        %v924 = vadd.f32 %v920, %v861
        %v925 = vadd.f32 %v921, %v861
        %v926 = vpack.c.bf16 %v923, %v922
        %v927 = vpack.c.bf16 %v925, %v924
        %v928 = vld [vmem:[%s776] sm:$0xf]
        %v929 = vld [vmem:[%s776 + $0x4] sm:$0xf]
        %v930 = vld [vmem:[%s776 + $0x8] sm:$0xf]
        %v931 = vld [vmem:[%s776 + $0xc] sm:$0xf]
        %v936 = vunpack.c.l.b16 %v928
        %v937 = vunpack.c.l.b16 %v929
        %v938 = vunpack.c.l.b16 %v930
        %v939 = vunpack.c.l.b16 %v931
        %v940 = vpack.c.b16 %v937, %v936
        %v941 = vpack.c.b16 %v939, %v938
        %v945 = vsel %vm821, %v865, 0
        %947 = vmatprep.subr.bf16.mxu0 0
        %948 = vmatpush1.bf16.msra.mxu0 %v940
        %949 = vmatprep.subr.bf16.mxu0 0
        %950 = vmatpush1.bf16.msra.mxu0 %v941
        %951 = vmatprep.subr.bf16.mxu0 0
        %952 = vmatpush1.bf16.msra.mxu0 0
        %953 = vmatprep.subr.bf16.mxu0 0
        %954 = vmatpush1.bf16.msra.mxu0 0
        %955 = vmatprep.subr.bf16.mxu0 0
        %956 = vmatpush1.bf16.msra.mxu0 0
        %957 = vmatprep.subr.bf16.mxu0 0
        %958 = vmatpush1.bf16.msra.mxu0 0
        %959 = vmatprep.subr.bf16.mxu0 0
        %960 = vmatpush1.bf16.msra.mxu0 0
        %961 = vmatprep.subr.bf16.mxu0 0
        %962 = vmatpush1.bf16.msra.mxu0 0
        %963 = vmatprep.subr.bf16.mxu0 0
        %964 = vmatpush1.bf16.msra.mxu0 0
        %965 = vmatprep.subr.bf16.mxu0 0
        %966 = vmatpush1.bf16.msra.mxu0 0
        %967 = vmatprep.subr.bf16.mxu0 0
        %968 = vmatpush1.bf16.msra.mxu0 0
        %969 = vmatprep.subr.bf16.mxu0 0
        %970 = vmatpush1.bf16.msra.mxu0 0
        %971 = vmatprep.subr.bf16.mxu0 0
        %972 = vmatpush1.bf16.msra.mxu0 0
        %973 = vmatprep.subr.bf16.mxu0 0
        %974 = vmatpush1.bf16.msra.mxu0 0
        %975 = vmatprep.subr.bf16.mxu0 0
        %976 = vmatpush1.bf16.msra.mxu0 0
        %977 = vmatprep.subr.bf16.mxu0 0
        %978 = vmatpush1.bf16.msra.mxu0 0
        %979 = vmatprep.mubr.bf16.mxu0 0
        %980 = vmatmul.mubr.bf16.gmra.mrb[0].mxu0 %v945
        %v981 = vpop.f32.mrb[0].mxu0
        %v982 = vadd.f32 0.0, %v981
        %v983 = vpop.f32.mrb[0].mxu0
        %v984 = vpop.f32.mrb[0].mxu0
        %v985 = vadd.f32 0.0, %v984
        %v986 = vpop.f32.mrb[0].mxu0
        %987 = vdwg.mxu0
        %v988 = vld [vmem:[%s781] sm:$0xf]
        %v989 = vld [vmem:[%s781 + $0x4] sm:$0xf]
        %v990 = vld [vmem:[%s781 + $0x8] sm:$0xf]
        %v991 = vld [vmem:[%s781 + $0xc] sm:$0xf]
        %v996 = vunpack.c.l.b16 %v988
        %v997 = vunpack.c.l.b16 %v989
        %v998 = vunpack.c.l.b16 %v990
        %v999 = vunpack.c.l.b16 %v991
        %v1000 = vpack.c.b16 %v997, %v996
        %v1001 = vpack.c.b16 %v999, %v998
        %v1005 = vsel %vm821, %v926, 0
        %v1008 = vsel %vm821, %v927, 0
        %1010 = vmatprep.subr.bf16.mxu0 0
        %1011 = vmatpush1.bf16.msra.mxu0 %v1000
        %1012 = vmatprep.subr.bf16.mxu0 0
        %1013 = vmatpush1.bf16.msra.mxu0 %v1001
        %1014 = vmatprep.subr.bf16.mxu0 0
        %1015 = vmatpush1.bf16.msra.mxu0 0
        %1016 = vmatprep.subr.bf16.mxu0 0
        %1017 = vmatpush1.bf16.msra.mxu0 0
        %1018 = vmatprep.subr.bf16.mxu0 0
        %1019 = vmatpush1.bf16.msra.mxu0 0
        %1020 = vmatprep.subr.bf16.mxu0 0
        %1021 = vmatpush1.bf16.msra.mxu0 0
        %1022 = vmatprep.subr.bf16.mxu0 0
        %1023 = vmatpush1.bf16.msra.mxu0 0
        %1024 = vmatprep.subr.bf16.mxu0 0
        %1025 = vmatpush1.bf16.msra.mxu0 0
        %1026 = vmatprep.subr.bf16.mxu0 0
        %1027 = vmatpush1.bf16.msra.mxu0 0
        %1028 = vmatprep.subr.bf16.mxu0 0
        %1029 = vmatpush1.bf16.msra.mxu0 0
        %1030 = vmatprep.subr.bf16.mxu0 0
        %1031 = vmatpush1.bf16.msra.mxu0 0
        %1032 = vmatprep.subr.bf16.mxu0 0
        %1033 = vmatpush1.bf16.msra.mxu0 0
        %1034 = vmatprep.subr.bf16.mxu0 0
        %1035 = vmatpush1.bf16.msra.mxu0 0
        %1036 = vmatprep.subr.bf16.mxu0 0
        %1037 = vmatpush1.bf16.msra.mxu0 0
        %1038 = vmatprep.subr.bf16.mxu0 0
        %1039 = vmatpush1.bf16.msra.mxu0 0
        %1040 = vmatprep.subr.bf16.mxu0 0
        %1041 = vmatpush1.bf16.msra.mxu0 0
        %1042 = vmatprep.mubr.bf16.mxu0 0
        %1043 = vmatmul.mubr.bf16.gmra.mrb[0].mxu0 %v1005
        %v1044 = vpop.f32.mrb[0].mxu0
        %v1045 = vadd.f32 0.0, %v1044
        %v1046 = vpop.f32.mrb[0].mxu0
        %v1047 = vpop.f32.mrb[0].mxu0
        %v1048 = vadd.f32 0.0, %v1047
        %v1049 = vpop.f32.mrb[0].mxu0
        %1050 = vmatprep.mubr.bf16.mxu0 0
        %1051 = vmatmul.mubr.bf16.gmra.mrb[0].mxu0 %v1008
        %v1052 = vpop.f32.mrb[0].mxu0
        %v1053 = vadd.f32 0.0, %v1052
        %v1054 = vpop.f32.mrb[0].mxu0
        %v1055 = vpop.f32.mrb[0].mxu0
        %v1056 = vadd.f32 0.0, %v1055
        %v1057 = vpop.f32.mrb[0].mxu0
        %1058 = vdwg.mxu0
        %v1059 = vld [vmem:[%s646] sm:$0xf]
        %v1060 = vld [vmem:[%s646 + $0x4] sm:$0xf]
        %v1061 = vld [vmem:[%s646 + $0x8] sm:$0xf]
        %v1062 = vld [vmem:[%s646 + $0xc] sm:$0xf]
        %v1067 = vunpack.c.l.b16 %v1059
        %v1068 = vunpack.c.l.b16 %v1060
        %v1069 = vunpack.c.l.b16 %v1061
        %v1070 = vunpack.c.l.b16 %v1062
        %v1071 = vpack.c.b16 %v1068, %v1067
        %v1072 = vpack.c.b16 %v1070, %v1069
        %1075 = vmatprep.subr.bf16.mxu0 0
        %1076 = vmatpush1.bf16.msra.mxu0 %v1071
        %1077 = vmatprep.subr.bf16.mxu0 0
        %1078 = vmatpush1.bf16.msra.mxu0 %v1072
        %1079 = vmatprep.subr.bf16.mxu0 0
        %1080 = vmatpush1.bf16.msra.mxu0 0
        %1081 = vmatprep.subr.bf16.mxu0 0
        %1082 = vmatpush1.bf16.msra.mxu0 0
        %1083 = vmatprep.subr.bf16.mxu0 0
        %1084 = vmatpush1.bf16.msra.mxu0 0
        %1085 = vmatprep.subr.bf16.mxu0 0
        %1086 = vmatpush1.bf16.msra.mxu0 0
        %1087 = vmatprep.subr.bf16.mxu0 0
        %1088 = vmatpush1.bf16.msra.mxu0 0
        %1089 = vmatprep.subr.bf16.mxu0 0
        %1090 = vmatpush1.bf16.msra.mxu0 0
        %1091 = vmatprep.subr.bf16.mxu0 0
        %1092 = vmatpush1.bf16.msra.mxu0 0
        %1093 = vmatprep.subr.bf16.mxu0 0
        %1094 = vmatpush1.bf16.msra.mxu0 0
        %1095 = vmatprep.subr.bf16.mxu0 0
        %1096 = vmatpush1.bf16.msra.mxu0 0
        %1097 = vmatprep.subr.bf16.mxu0 0
        %1098 = vmatpush1.bf16.msra.mxu0 0
        %1099 = vmatprep.subr.bf16.mxu0 0
        %1100 = vmatpush1.bf16.msra.mxu0 0
        %1101 = vmatprep.subr.bf16.mxu0 0
        %1102 = vmatpush1.bf16.msra.mxu0 0
        %1103 = vmatprep.subr.bf16.mxu0 0
        %1104 = vmatpush1.bf16.msra.mxu0 0
        %1105 = vmatprep.subr.bf16.mxu0 0
        %1106 = vmatpush1.bf16.msra.mxu0 0
        %1107 = vmatprep.mubr.bf16.mxu0 0
        %1108 = vmatmul.mubr.bf16.gmra.mrb[0].mxu0 %v1005
        %v1109 = vpop.f32.mrb[0].mxu0
        %v1110 = vadd.f32 0.0, %v1109
        %v1111 = vpop.f32.mrb[0].mxu0
        %v1112 = vpop.f32.mrb[0].mxu0
        %v1113 = vadd.f32 0.0, %v1112
        %v1114 = vpop.f32.mrb[0].mxu0
        %1115 = vmatprep.mubr.bf16.mxu0 0
        %1116 = vmatmul.mubr.bf16.gmra.mrb[0].mxu0 %v1008
        %v1117 = vpop.f32.mrb[0].mxu0
        %v1118 = vadd.f32 0.0, %v1117
        %v1119 = vpop.f32.mrb[0].mxu0
        %v1120 = vpop.f32.mrb[0].mxu0
        %v1121 = vadd.f32 0.0, %v1120
        %v1122 = vpop.f32.mrb[0].mxu0
        %1123 = vdwg.mxu0
        %v1124 = vld [vmem:[%s655] sm:$0xf]
        %v1125 = vld [vmem:[%s655 + $0x4] sm:$0xf]
        %v1126 = vld [vmem:[%s655 + $0x8] sm:$0xf]
        %v1127 = vld [vmem:[%s655 + $0xc] sm:$0xf]
        %v1128 = vpack.c.bf16 %v982, %v982
        %v1129 = vpack.c.bf16 %v985, %v985
        %v1130 = vpack.c.bf16 %v1048, %v1045
        %v1131 = vpack.c.bf16 %v1056, %v1053
        %v1132 = vpack.c.bf16 %v1113, %v1110
        %v1133 = vpack.c.bf16 %v1121, %v1118
        %vm1134 = vcmask 64512
        %v1136 = vsel %vm1134, %v1128, 0
        %v1139 = vsel %vm1134, %v1130, 0
        %1141 = vmatprep.subr.bf16.mxu0 0
        %1142 = vmatpush1.bf16.xpose.msra.mxu0 %v1139
        %1143 = vmatprep.subr.bf16.mxu0 0
        %1144 = vmatpush1.bf16.xpose.msra.mxu0 0
        %1145 = vmatprep.subr.bf16.mxu0 0
        %1146 = vmatpush1.bf16.xpose.msra.mxu0 0
        %1147 = vmatprep.subr.bf16.mxu0 0
        %1148 = vmatpush1.bf16.xpose.msra.mxu0 0
        %1149 = vmatprep.subr.bf16.mxu0 0
        %1150 = vmatpush1.bf16.xpose.msra.mxu0 0
        %1151 = vmatprep.subr.bf16.mxu0 0
        %1152 = vmatpush1.bf16.xpose.msra.mxu0 0
        %1153 = vmatprep.subr.bf16.mxu0 0
        %1154 = vmatpush1.bf16.xpose.msra.mxu0 0
        %1155 = vmatprep.subr.bf16.mxu0 0
        %1156 = vmatpush1.bf16.xpose.msra.mxu0 0
        %1157 = vmatprep.subr.bf16.mxu0 0
        %1158 = vmatpush1.bf16.xpose.msra.mxu0 0
        %1159 = vmatprep.subr.bf16.mxu0 0
        %1160 = vmatpush1.bf16.xpose.msra.mxu0 0
        %1161 = vmatprep.subr.bf16.mxu0 0
        %1162 = vmatpush1.bf16.xpose.msra.mxu0 0
        %1163 = vmatprep.subr.bf16.mxu0 0
        %1164 = vmatpush1.bf16.xpose.msra.mxu0 0
        %1165 = vmatprep.subr.bf16.mxu0 0
        %1166 = vmatpush1.bf16.xpose.msra.mxu0 0
        %1167 = vmatprep.subr.bf16.mxu0 0
        %1168 = vmatpush1.bf16.xpose.msra.mxu0 0
        %1169 = vmatprep.subr.bf16.mxu0 0
        %1170 = vmatpush1.bf16.xpose.msra.mxu0 0
        %1171 = vmatprep.subr.bf16.mxu0 0
        %1172 = vmatpush1.bf16.xpose.msra.mxu0 0
        %1173 = vmatprep.mubr.bf16.mxu0 0
        %1174 = vmatmul.mubr.bf16.gmra.mrb[0].mxu0 %v1136
        %v1175 = vpop.f32.mrb[0].mxu0
        %v1176 = vadd.f32 0.0, %v1175
        %v1177 = vpop.f32.mrb[0].mxu0
        %v1178 = vpop.f32.mrb[0].mxu0
        %v1179 = vpop.f32.mrb[0].mxu0
        %1180 = vdwg.mxu0
        %v1182 = vsel %vm1134, %v1129, 0
        %v1185 = vsel %vm1134, %v1131, 0
        %1187 = vmatprep.subr.bf16.mxu0 0
        %1188 = vmatpush1.bf16.xpose.msra.mxu0 %v1185
        %1189 = vmatprep.subr.bf16.mxu0 0
        %1190 = vmatpush1.bf16.xpose.msra.mxu0 0
        %1191 = vmatprep.subr.bf16.mxu0 0
        %1192 = vmatpush1.bf16.xpose.msra.mxu0 0
        %1193 = vmatprep.subr.bf16.mxu0 0
        %1194 = vmatpush1.bf16.xpose.msra.mxu0 0
        %1195 = vmatprep.subr.bf16.mxu0 0
        %1196 = vmatpush1.bf16.xpose.msra.mxu0 0
        %1197 = vmatprep.subr.bf16.mxu0 0
        %1198 = vmatpush1.bf16.xpose.msra.mxu0 0
        %1199 = vmatprep.subr.bf16.mxu0 0
        %1200 = vmatpush1.bf16.xpose.msra.mxu0 0
        %1201 = vmatprep.subr.bf16.mxu0 0
        %1202 = vmatpush1.bf16.xpose.msra.mxu0 0
        %1203 = vmatprep.subr.bf16.mxu0 0
        %1204 = vmatpush1.bf16.xpose.msra.mxu0 0
        %1205 = vmatprep.subr.bf16.mxu0 0
        %1206 = vmatpush1.bf16.xpose.msra.mxu0 0
        %1207 = vmatprep.subr.bf16.mxu0 0
        %1208 = vmatpush1.bf16.xpose.msra.mxu0 0
        %1209 = vmatprep.subr.bf16.mxu0 0
        %1210 = vmatpush1.bf16.xpose.msra.mxu0 0
        %1211 = vmatprep.subr.bf16.mxu0 0
        %1212 = vmatpush1.bf16.xpose.msra.mxu0 0
        %1213 = vmatprep.subr.bf16.mxu0 0
        %1214 = vmatpush1.bf16.xpose.msra.mxu0 0
        %1215 = vmatprep.subr.bf16.mxu0 0
        %1216 = vmatpush1.bf16.xpose.msra.mxu0 0
        %1217 = vmatprep.subr.bf16.mxu0 0
        %1218 = vmatpush1.bf16.xpose.msra.mxu0 0
        %1219 = vmatprep.mubr.bf16.mxu0 0
        %1220 = vmatmul.mubr.bf16.gmra.mrb[0].mxu0 %v1182
        %v1221 = vpop.f32.mrb[0].mxu0
        %v1222 = vadd.f32 0.0, %v1221
        %v1223 = vpop.f32.mrb[0].mxu0
        %v1224 = vpop.f32.mrb[0].mxu0
        %v1225 = vpop.f32.mrb[0].mxu0
        %1226 = vdwg.mxu0
        %v1227 = vmul.f32 %v1176, 0.17677669
        %v1228 = vmul.f32 %v1222, 0.17677669
        %vm1229 = vcmask 130048
        %v1230 = vsel %vm1229, %v1227, -inf
        %1231 = vmax.xlane.f32.xlu0 %v1230
        %v1232 = vpop.xlane.xlu0 %1231
        %v1233 = vsel %vm1229, %v1228, -inf
        %1234 = vmax.xlane.f32.xlu0 %v1233
        %v1235 = vpop.xlane.xlu0 %1234
        %v1236 = vsub.f32 %v1227, %v1232
        %v1237 = vsub.f32 %v1228, %v1235
        %v1238 = vmul.f32 %v1236, 1.442695
        %v1239 = vpow.pop %v1238
        %v1240 = vmul.f32 %v1237, 1.442695
        %v1241 = vpow.pop %v1240
        %v1242 = vsel %vm1229, %v1239, 0.0
        %1243 = vadd.xlane.f32.xlu0 %v1242
        %v1244 = vpop.xlane.xlu0 %1243
        %v1245 = vsel %vm1229, %v1241, 0.0
        %1246 = vadd.xlane.f32.xlu0 %v1245
        %v1247 = vpop.xlane.xlu0 %1246
        %v1248 = vrcp.pop %v1244
        %v1249 = vrcp.pop %v1247
        %v1250 = vmul.f32 %v1239, %v1248
        %v1251 = vmul.f32 %v1241, %v1249
        %v1252 = vpack.c.bf16 %v1250, %v1250
        %v1253 = vpack.c.bf16 %v1251, %v1251
        %v1255 = vsel %vm1229, %v1252, 0
        %1257 = vmatprep.subr.bf16.mxu0 0
        %1258 = vmatpush1.bf16.msra.mxu0 %v1132
        %1259 = vmatprep.subr.bf16.mxu0 0
        %1260 = vmatpush1.bf16.msra.mxu0 0
        %1261 = vmatprep.subr.bf16.mxu0 0
        %1262 = vmatpush1.bf16.msra.mxu0 0
        %1263 = vmatprep.subr.bf16.mxu0 0
        %1264 = vmatpush1.bf16.msra.mxu0 0
        %1265 = vmatprep.subr.bf16.mxu0 0
        %1266 = vmatpush1.bf16.msra.mxu0 0
        %1267 = vmatprep.subr.bf16.mxu0 0
        %1268 = vmatpush1.bf16.msra.mxu0 0
        %1269 = vmatprep.subr.bf16.mxu0 0
        %1270 = vmatpush1.bf16.msra.mxu0 0
        %1271 = vmatprep.subr.bf16.mxu0 0
        %1272 = vmatpush1.bf16.msra.mxu0 0
        %1273 = vmatprep.subr.bf16.mxu0 0
        %1274 = vmatpush1.bf16.msra.mxu0 0
        %1275 = vmatprep.subr.bf16.mxu0 0
        %1276 = vmatpush1.bf16.msra.mxu0 0
        %1277 = vmatprep.subr.bf16.mxu0 0
        %1278 = vmatpush1.bf16.msra.mxu0 0
        %1279 = vmatprep.subr.bf16.mxu0 0
        %1280 = vmatpush1.bf16.msra.mxu0 0
        %1281 = vmatprep.subr.bf16.mxu0 0
        %1282 = vmatpush1.bf16.msra.mxu0 0
        %1283 = vmatprep.subr.bf16.mxu0 0
        %1284 = vmatpush1.bf16.msra.mxu0 0
        %1285 = vmatprep.subr.bf16.mxu0 0
        %1286 = vmatpush1.bf16.msra.mxu0 0
        %1287 = vmatprep.subr.bf16.mxu0 0
        %1288 = vmatpush1.bf16.msra.mxu0 0
        %1289 = vmatprep.mubr.bf16.mxu0 0
        %1290 = vmatmul.mubr.bf16.gmra.mrb[0].mxu0 %v1255
        %v1291 = vpop.f32.mrb[0].mxu0
        %v1292 = vadd.f32 0.0, %v1291
        %v1293 = vpop.f32.mrb[0].mxu0
        %v1294 = vpop.f32.mrb[0].mxu0
        %v1295 = vpop.f32.mrb[0].mxu0
        %1296 = vdwg.mxu0
        %v1298 = vsel %vm1229, %v1253, 0
        %1300 = vmatprep.subr.bf16.mxu0 0
        %1301 = vmatpush1.bf16.msra.mxu0 %v1133
        %1302 = vmatprep.subr.bf16.mxu0 0
        %1303 = vmatpush1.bf16.msra.mxu0 0
        %1304 = vmatprep.subr.bf16.mxu0 0
        %1305 = vmatpush1.bf16.msra.mxu0 0
        %1306 = vmatprep.subr.bf16.mxu0 0
        %1307 = vmatpush1.bf16.msra.mxu0 0
        %1308 = vmatprep.subr.bf16.mxu0 0
        %1309 = vmatpush1.bf16.msra.mxu0 0
        %1310 = vmatprep.subr.bf16.mxu0 0
        %1311 = vmatpush1.bf16.msra.mxu0 0
        %1312 = vmatprep.subr.bf16.mxu0 0
        %1313 = vmatpush1.bf16.msra.mxu0 0
        %1314 = vmatprep.subr.bf16.mxu0 0
        %1315 = vmatpush1.bf16.msra.mxu0 0
        %1316 = vmatprep.subr.bf16.mxu0 0
        %1317 = vmatpush1.bf16.msra.mxu0 0
        %1318 = vmatprep.subr.bf16.mxu0 0
        %1319 = vmatpush1.bf16.msra.mxu0 0
        %1320 = vmatprep.subr.bf16.mxu0 0
        %1321 = vmatpush1.bf16.msra.mxu0 0
        %1322 = vmatprep.subr.bf16.mxu0 0
        %1323 = vmatpush1.bf16.msra.mxu0 0
        %1324 = vmatprep.subr.bf16.mxu0 0
        %1325 = vmatpush1.bf16.msra.mxu0 0
        %1326 = vmatprep.subr.bf16.mxu0 0
        %1327 = vmatpush1.bf16.msra.mxu0 0
        %1328 = vmatprep.subr.bf16.mxu0 0
        %1329 = vmatpush1.bf16.msra.mxu0 0
        %1330 = vmatprep.subr.bf16.mxu0 0
        %1331 = vmatpush1.bf16.msra.mxu0 0
        %1332 = vmatprep.mubr.bf16.mxu0 0
        %1333 = vmatmul.mubr.bf16.gmra.mrb[0].mxu0 %v1298
        %v1334 = vpop.f32.mrb[0].mxu0
        %v1335 = vadd.f32 0.0, %v1334
        %v1336 = vpop.f32.mrb[0].mxu0
        %v1337 = vpop.f32.mrb[0].mxu0
        %v1338 = vpop.f32.mrb[0].mxu0
        %1339 = vdwg.mxu0
        %v1340 = vpack.c.bf16 %v1335, %v1292
        %1342 = vrot.lane.b32.xlu0 %v1128, 120
        %v1343 = vpop.permute.xlu0 %1342
        %1345 = vrot.lane.b32.xlu0 %v1130, 120
        %v1346 = vpop.permute.xlu0 %1345
        %v1348 = vsel %vm1134, %v1343, 0
        %v1351 = vsel %vm1134, %v1346, 0
        %1353 = vmatprep.subr.bf16.mxu0 0
        %1354 = vmatpush1.bf16.xpose.msra.mxu0 %v1351
        %1355 = vmatprep.subr.bf16.mxu0 0
        %1356 = vmatpush1.bf16.xpose.msra.mxu0 0
        %1357 = vmatprep.subr.bf16.mxu0 0
        %1358 = vmatpush1.bf16.xpose.msra.mxu0 0
        %1359 = vmatprep.subr.bf16.mxu0 0
        %1360 = vmatpush1.bf16.xpose.msra.mxu0 0
        %1361 = vmatprep.subr.bf16.mxu0 0
        %1362 = vmatpush1.bf16.xpose.msra.mxu0 0
        %1363 = vmatprep.subr.bf16.mxu0 0
        %1364 = vmatpush1.bf16.xpose.msra.mxu0 0
        %1365 = vmatprep.subr.bf16.mxu0 0
        %1366 = vmatpush1.bf16.xpose.msra.mxu0 0
        %1367 = vmatprep.subr.bf16.mxu0 0
        %1368 = vmatpush1.bf16.xpose.msra.mxu0 0
        %1369 = vmatprep.subr.bf16.mxu0 0
        %1370 = vmatpush1.bf16.xpose.msra.mxu0 0
        %1371 = vmatprep.subr.bf16.mxu0 0
        %1372 = vmatpush1.bf16.xpose.msra.mxu0 0
        %1373 = vmatprep.subr.bf16.mxu0 0
        %1374 = vmatpush1.bf16.xpose.msra.mxu0 0
        %1375 = vmatprep.subr.bf16.mxu0 0
        %1376 = vmatpush1.bf16.xpose.msra.mxu0 0
        %1377 = vmatprep.subr.bf16.mxu0 0
        %1378 = vmatpush1.bf16.xpose.msra.mxu0 0
        %1379 = vmatprep.subr.bf16.mxu0 0
        %1380 = vmatpush1.bf16.xpose.msra.mxu0 0
        %1381 = vmatprep.subr.bf16.mxu0 0
        %1382 = vmatpush1.bf16.xpose.msra.mxu0 0
        %1383 = vmatprep.subr.bf16.mxu0 0
        %1384 = vmatpush1.bf16.xpose.msra.mxu0 0
        %1385 = vmatprep.mubr.bf16.mxu0 0
        %1386 = vmatmul.mubr.bf16.gmra.mrb[0].mxu0 %v1348
        %v1387 = vpop.f32.mrb[0].mxu0
        %v1388 = vadd.f32 0.0, %v1387
        %v1389 = vpop.f32.mrb[0].mxu0
        %v1390 = vpop.f32.mrb[0].mxu0
        %v1391 = vpop.f32.mrb[0].mxu0
        %1392 = vdwg.mxu0
        %1394 = vrot.lane.b32.xlu0 %v1129, 120
        %v1395 = vpop.permute.xlu0 %1394
        %1397 = vrot.lane.b32.xlu0 %v1131, 120
        %v1398 = vpop.permute.xlu0 %1397
        %v1400 = vsel %vm1134, %v1395, 0
        %v1403 = vsel %vm1134, %v1398, 0
        %1405 = vmatprep.subr.bf16.mxu0 0
        %1406 = vmatpush1.bf16.xpose.msra.mxu0 %v1403
        %1407 = vmatprep.subr.bf16.mxu0 0
        %1408 = vmatpush1.bf16.xpose.msra.mxu0 0
        %1409 = vmatprep.subr.bf16.mxu0 0
        %1410 = vmatpush1.bf16.xpose.msra.mxu0 0
        %1411 = vmatprep.subr.bf16.mxu0 0
        %1412 = vmatpush1.bf16.xpose.msra.mxu0 0
        %1413 = vmatprep.subr.bf16.mxu0 0
        %1414 = vmatpush1.bf16.xpose.msra.mxu0 0
        %1415 = vmatprep.subr.bf16.mxu0 0
        %1416 = vmatpush1.bf16.xpose.msra.mxu0 0
        %1417 = vmatprep.subr.bf16.mxu0 0
        %1418 = vmatpush1.bf16.xpose.msra.mxu0 0
        %1419 = vmatprep.subr.bf16.mxu0 0
        %1420 = vmatpush1.bf16.xpose.msra.mxu0 0
        %1421 = vmatprep.subr.bf16.mxu0 0
        %1422 = vmatpush1.bf16.xpose.msra.mxu0 0
        %1423 = vmatprep.subr.bf16.mxu0 0
        %1424 = vmatpush1.bf16.xpose.msra.mxu0 0
        %1425 = vmatprep.subr.bf16.mxu0 0
        %1426 = vmatpush1.bf16.xpose.msra.mxu0 0
        %1427 = vmatprep.subr.bf16.mxu0 0
        %1428 = vmatpush1.bf16.xpose.msra.mxu0 0
        %1429 = vmatprep.subr.bf16.mxu0 0
        %1430 = vmatpush1.bf16.xpose.msra.mxu0 0
        %1431 = vmatprep.subr.bf16.mxu0 0
        %1432 = vmatpush1.bf16.xpose.msra.mxu0 0
        %1433 = vmatprep.subr.bf16.mxu0 0
        %1434 = vmatpush1.bf16.xpose.msra.mxu0 0
        %1435 = vmatprep.subr.bf16.mxu0 0
        %1436 = vmatpush1.bf16.xpose.msra.mxu0 0
        %1437 = vmatprep.mubr.bf16.mxu0 0
        %1438 = vmatmul.mubr.bf16.gmra.mrb[0].mxu0 %v1400
        %v1439 = vpop.f32.mrb[0].mxu0
        %v1440 = vadd.f32 0.0, %v1439
        %v1441 = vpop.f32.mrb[0].mxu0
        %v1442 = vpop.f32.mrb[0].mxu0
        %v1443 = vpop.f32.mrb[0].mxu0
        %1444 = vdwg.mxu0
        %v1445 = vmul.f32 %v1388, 0.17677669
        %v1446 = vmul.f32 %v1440, 0.17677669
        %v1447 = vsel %vm1229, %v1445, -inf
        %1448 = vmax.xlane.f32.xlu0 %v1447
        %v1449 = vpop.xlane.xlu0 %1448
        %v1450 = vsel %vm1229, %v1446, -inf
        %1451 = vmax.xlane.f32.xlu0 %v1450
        %v1452 = vpop.xlane.xlu0 %1451
        %v1453 = vsub.f32 %v1445, %v1449
        %v1454 = vsub.f32 %v1446, %v1452
        %v1455 = vmul.f32 %v1453, 1.442695
        %v1456 = vpow.pop %v1455
        %v1457 = vmul.f32 %v1454, 1.442695
        %v1458 = vpow.pop %v1457
        %v1459 = vsel %vm1229, %v1456, 0.0
        %1460 = vadd.xlane.f32.xlu0 %v1459
        %v1461 = vpop.xlane.xlu0 %1460
        %v1462 = vsel %vm1229, %v1458, 0.0
        %1463 = vadd.xlane.f32.xlu0 %v1462
        %v1464 = vpop.xlane.xlu0 %1463
        %v1465 = vrcp.pop %v1461
        %v1466 = vrcp.pop %v1464
        %v1467 = vmul.f32 %v1456, %v1465
        %v1468 = vmul.f32 %v1458, %v1466
        %v1469 = vpack.c.bf16 %v1467, %v1467
        %v1470 = vpack.c.bf16 %v1468, %v1468
        %1472 = vrot.lane.b32.xlu0 %v1132, 120
        %v1473 = vpop.permute.xlu0 %1472
        %v1476 = vsel %vm1229, %v1469, 0
        %1478 = vmatprep.subr.bf16.mxu0 0
        %1479 = vmatpush1.bf16.msra.mxu0 %v1473
        %1480 = vmatprep.subr.bf16.mxu0 0
        %1481 = vmatpush1.bf16.msra.mxu0 0
        %1482 = vmatprep.subr.bf16.mxu0 0
        %1483 = vmatpush1.bf16.msra.mxu0 0
        %1484 = vmatprep.subr.bf16.mxu0 0
        %1485 = vmatpush1.bf16.msra.mxu0 0
        %1486 = vmatprep.subr.bf16.mxu0 0
        %1487 = vmatpush1.bf16.msra.mxu0 0
        %1488 = vmatprep.subr.bf16.mxu0 0
        %1489 = vmatpush1.bf16.msra.mxu0 0
        %1490 = vmatprep.subr.bf16.mxu0 0
        %1491 = vmatpush1.bf16.msra.mxu0 0
        %1492 = vmatprep.subr.bf16.mxu0 0
        %1493 = vmatpush1.bf16.msra.mxu0 0
        %1494 = vmatprep.subr.bf16.mxu0 0
        %1495 = vmatpush1.bf16.msra.mxu0 0
        %1496 = vmatprep.subr.bf16.mxu0 0
        %1497 = vmatpush1.bf16.msra.mxu0 0
        %1498 = vmatprep.subr.bf16.mxu0 0
        %1499 = vmatpush1.bf16.msra.mxu0 0
        %1500 = vmatprep.subr.bf16.mxu0 0
        %1501 = vmatpush1.bf16.msra.mxu0 0
        %1502 = vmatprep.subr.bf16.mxu0 0
        %1503 = vmatpush1.bf16.msra.mxu0 0
        %1504 = vmatprep.subr.bf16.mxu0 0
        %1505 = vmatpush1.bf16.msra.mxu0 0
        %1506 = vmatprep.subr.bf16.mxu0 0
        %1507 = vmatpush1.bf16.msra.mxu0 0
        %1508 = vmatprep.subr.bf16.mxu0 0
        %1509 = vmatpush1.bf16.msra.mxu0 0
        %1510 = vmatprep.mubr.bf16.mxu0 0
        %1511 = vmatmul.mubr.bf16.gmra.mrb[0].mxu0 %v1476
        %v1512 = vpop.f32.mrb[0].mxu0
        %v1513 = vadd.f32 0.0, %v1512
        %v1514 = vpop.f32.mrb[0].mxu0
        %v1515 = vpop.f32.mrb[0].mxu0
        %v1516 = vpop.f32.mrb[0].mxu0
        %1517 = vdwg.mxu0
        %1519 = vrot.lane.b32.xlu0 %v1133, 120
        %v1520 = vpop.permute.xlu0 %1519
        %v1523 = vsel %vm1229, %v1470, 0
        %1525 = vmatprep.subr.bf16.mxu0 0
        %1526 = vmatpush1.bf16.msra.mxu0 %v1520
        %1527 = vmatprep.subr.bf16.mxu0 0
        %1528 = vmatpush1.bf16.msra.mxu0 0
        %1529 = vmatprep.subr.bf16.mxu0 0
        %1530 = vmatpush1.bf16.msra.mxu0 0
        %1531 = vmatprep.subr.bf16.mxu0 0
        %1532 = vmatpush1.bf16.msra.mxu0 0
        %1533 = vmatprep.subr.bf16.mxu0 0
        %1534 = vmatpush1.bf16.msra.mxu0 0
        %1535 = vmatprep.subr.bf16.mxu0 0
        %1536 = vmatpush1.bf16.msra.mxu0 0
        %1537 = vmatprep.subr.bf16.mxu0 0
        %1538 = vmatpush1.bf16.msra.mxu0 0
        %1539 = vmatprep.subr.bf16.mxu0 0
        %1540 = vmatpush1.bf16.msra.mxu0 0
        %1541 = vmatprep.subr.bf16.mxu0 0
        %1542 = vmatpush1.bf16.msra.mxu0 0
        %1543 = vmatprep.subr.bf16.mxu0 0
        %1544 = vmatpush1.bf16.msra.mxu0 0
        %1545 = vmatprep.subr.bf16.mxu0 0
        %1546 = vmatpush1.bf16.msra.mxu0 0
        %1547 = vmatprep.subr.bf16.mxu0 0
        %1548 = vmatpush1.bf16.msra.mxu0 0
        %1549 = vmatprep.subr.bf16.mxu0 0
        %1550 = vmatpush1.bf16.msra.mxu0 0
        %1551 = vmatprep.subr.bf16.mxu0 0
        %1552 = vmatpush1.bf16.msra.mxu0 0
        %1553 = vmatprep.subr.bf16.mxu0 0
        %1554 = vmatpush1.bf16.msra.mxu0 0
        %1555 = vmatprep.subr.bf16.mxu0 0
        %1556 = vmatpush1.bf16.msra.mxu0 0
        %1557 = vmatprep.mubr.bf16.mxu0 0
        %1558 = vmatmul.mubr.bf16.gmra.mrb[0].mxu0 %v1523
        %v1559 = vpop.f32.mrb[0].mxu0
        %v1560 = vadd.f32 0.0, %v1559
        %v1561 = vpop.f32.mrb[0].mxu0
        %v1562 = vpop.f32.mrb[0].mxu0
        %v1563 = vpop.f32.mrb[0].mxu0
        %1564 = vdwg.mxu0
        %v1565 = vpack.c.bf16 %v1560, %v1513
        %v1567 = vsel %vm1134, %v1565, 0
        %vm1569 = vcmask 1043456
        %v1571 = vsel %vm1569, %v1125, 0
        %1573 = vmatprep.subr.bf16.mxu0 0
        %1574 = vmatpush1.bf16.msra.mxu0 %v1571
        %1575 = vmatprep.subr.bf16.mxu0 0
        %1576 = vmatpush1.bf16.msra.mxu0 0
        %1577 = vmatprep.subr.bf16.mxu0 0
        %1578 = vmatpush1.bf16.msra.mxu0 0
        %1579 = vmatprep.subr.bf16.mxu0 0
        %1580 = vmatpush1.bf16.msra.mxu0 0
        %1581 = vmatprep.subr.bf16.mxu0 0
        %1582 = vmatpush1.bf16.msra.mxu0 0
        %1583 = vmatprep.subr.bf16.mxu0 0
        %1584 = vmatpush1.bf16.msra.mxu0 0
        %1585 = vmatprep.subr.bf16.mxu0 0
        %1586 = vmatpush1.bf16.msra.mxu0 0
        %1587 = vmatprep.subr.bf16.mxu0 0
        %1588 = vmatpush1.bf16.msra.mxu0 0
        %1589 = vmatprep.subr.bf16.mxu0 0
        %1590 = vmatpush1.bf16.msra.mxu0 0
        %1591 = vmatprep.subr.bf16.mxu0 0
        %1592 = vmatpush1.bf16.msra.mxu0 0
        %1593 = vmatprep.subr.bf16.mxu0 0
        %1594 = vmatpush1.bf16.msra.mxu0 0
        %1595 = vmatprep.subr.bf16.mxu0 0
        %1596 = vmatpush1.bf16.msra.mxu0 0
        %1597 = vmatprep.subr.bf16.mxu0 0
        %1598 = vmatpush1.bf16.msra.mxu0 0
        %1599 = vmatprep.subr.bf16.mxu0 0
        %1600 = vmatpush1.bf16.msra.mxu0 0
        %1601 = vmatprep.subr.bf16.mxu0 0
        %1602 = vmatpush1.bf16.msra.mxu0 0
        %1603 = vmatprep.subr.bf16.mxu0 0
        %1604 = vmatpush1.bf16.msra.mxu0 0
        %1605 = vmatprep.mubr.bf16.mxu0 0
        %1606 = vmatmul.mubr.bf16.gmra.mrb[0].mxu0 %v1567
        %v1607 = vpop.f32.mrb[0].mxu0
        %v1608 = vadd.f32 0.0, %v1607
        %v1609 = vpop.f32.mrb[0].mxu0
        %v1610 = vpop.f32.mrb[0].mxu0
        %v1611 = vadd.f32 0.0, %v1610
        %v1612 = vpop.f32.mrb[0].mxu0
        %1613 = vdwg.mxu0
        %v1615 = vsel %vm1134, %v1340, 0
        %v1618 = vsel %vm1569, %v1124, 0
        %1620 = vmatprep.subr.bf16.mxu0 0
        %1621 = vmatpush1.bf16.msra.mxu0 %v1618
        %1622 = vmatprep.subr.bf16.mxu0 0
        %1623 = vmatpush1.bf16.msra.mxu0 0
        %1624 = vmatprep.subr.bf16.mxu0 0
        %1625 = vmatpush1.bf16.msra.mxu0 0
        %1626 = vmatprep.subr.bf16.mxu0 0
        %1627 = vmatpush1.bf16.msra.mxu0 0
        %1628 = vmatprep.subr.bf16.mxu0 0
        %1629 = vmatpush1.bf16.msra.mxu0 0
        %1630 = vmatprep.subr.bf16.mxu0 0
        %1631 = vmatpush1.bf16.msra.mxu0 0
        %1632 = vmatprep.subr.bf16.mxu0 0
        %1633 = vmatpush1.bf16.msra.mxu0 0
        %1634 = vmatprep.subr.bf16.mxu0 0
        %1635 = vmatpush1.bf16.msra.mxu0 0
        %1636 = vmatprep.subr.bf16.mxu0 0
        %1637 = vmatpush1.bf16.msra.mxu0 0
        %1638 = vmatprep.subr.bf16.mxu0 0
        %1639 = vmatpush1.bf16.msra.mxu0 0
        %1640 = vmatprep.subr.bf16.mxu0 0
        %1641 = vmatpush1.bf16.msra.mxu0 0
        %1642 = vmatprep.subr.bf16.mxu0 0
        %1643 = vmatpush1.bf16.msra.mxu0 0
        %1644 = vmatprep.subr.bf16.mxu0 0
        %1645 = vmatpush1.bf16.msra.mxu0 0
        %1646 = vmatprep.subr.bf16.mxu0 0
        %1647 = vmatpush1.bf16.msra.mxu0 0
        %1648 = vmatprep.subr.bf16.mxu0 0
        %1649 = vmatpush1.bf16.msra.mxu0 0
        %1650 = vmatprep.subr.bf16.mxu0 0
        %1651 = vmatpush1.bf16.msra.mxu0 0
        %1652 = vmatprep.mubr.bf16.mxu0 0
        %1653 = vmatmul.mubr.bf16.gmra.mrb[0].mxu0 %v1615
        %v1654 = vpop.f32.mrb[0].mxu0
        %v1655 = vadd.f32 %v1608, %v1654
        %v1656 = vpop.f32.mrb[0].mxu0
        %v1657 = vpop.f32.mrb[0].mxu0
        %v1658 = vadd.f32 %v1611, %v1657
        %v1659 = vpop.f32.mrb[0].mxu0
        %1660 = vdwg.mxu0
        %1661 = vrot.lane.b32.xlu0 %v1128, 112
        %v1662 = vpop.permute.xlu0 %1661
        %1663 = vrot.lane.b32.xlu0 %v1130, 112
        %v1664 = vpop.permute.xlu0 %1663
        %v1666 = vsel %vm1134, %v1662, 0
        %v1669 = vsel %vm1134, %v1664, 0
        %1671 = vmatprep.subr.bf16.mxu0 0
        %1672 = vmatpush1.bf16.xpose.msra.mxu0 %v1669
        %1673 = vmatprep.subr.bf16.mxu0 0
        %1674 = vmatpush1.bf16.xpose.msra.mxu0 0
        %1675 = vmatprep.subr.bf16.mxu0 0
        %1676 = vmatpush1.bf16.xpose.msra.mxu0 0
        %1677 = vmatprep.subr.bf16.mxu0 0
        %1678 = vmatpush1.bf16.xpose.msra.mxu0 0
        %1679 = vmatprep.subr.bf16.mxu0 0
        %1680 = vmatpush1.bf16.xpose.msra.mxu0 0
        %1681 = vmatprep.subr.bf16.mxu0 0
        %1682 = vmatpush1.bf16.xpose.msra.mxu0 0
        %1683 = vmatprep.subr.bf16.mxu0 0
        %1684 = vmatpush1.bf16.xpose.msra.mxu0 0
        %1685 = vmatprep.subr.bf16.mxu0 0
        %1686 = vmatpush1.bf16.xpose.msra.mxu0 0
        %1687 = vmatprep.subr.bf16.mxu0 0
        %1688 = vmatpush1.bf16.xpose.msra.mxu0 0
        %1689 = vmatprep.subr.bf16.mxu0 0
        %1690 = vmatpush1.bf16.xpose.msra.mxu0 0
        %1691 = vmatprep.subr.bf16.mxu0 0
        %1692 = vmatpush1.bf16.xpose.msra.mxu0 0
        %1693 = vmatprep.subr.bf16.mxu0 0
        %1694 = vmatpush1.bf16.xpose.msra.mxu0 0
        %1695 = vmatprep.subr.bf16.mxu0 0
        %1696 = vmatpush1.bf16.xpose.msra.mxu0 0
        %1697 = vmatprep.subr.bf16.mxu0 0
        %1698 = vmatpush1.bf16.xpose.msra.mxu0 0
        %1699 = vmatprep.subr.bf16.mxu0 0
        %1700 = vmatpush1.bf16.xpose.msra.mxu0 0
        %1701 = vmatprep.subr.bf16.mxu0 0
        %1702 = vmatpush1.bf16.xpose.msra.mxu0 0
        %1703 = vmatprep.mubr.bf16.mxu0 0
        %1704 = vmatmul.mubr.bf16.gmra.mrb[0].mxu0 %v1666
        %v1705 = vpop.f32.mrb[0].mxu0
        %v1706 = vadd.f32 0.0, %v1705
        %v1707 = vpop.f32.mrb[0].mxu0
        %v1708 = vpop.f32.mrb[0].mxu0
        %v1709 = vpop.f32.mrb[0].mxu0
        %1710 = vdwg.mxu0
        %1711 = vrot.lane.b32.xlu0 %v1129, 112
        %v1712 = vpop.permute.xlu0 %1711
        %1713 = vrot.lane.b32.xlu0 %v1131, 112
        %v1714 = vpop.permute.xlu0 %1713
        %v1716 = vsel %vm1134, %v1712, 0
        %v1719 = vsel %vm1134, %v1714, 0
        %1721 = vmatprep.subr.bf16.mxu0 0
        %1722 = vmatpush1.bf16.xpose.msra.mxu0 %v1719
        %1723 = vmatprep.subr.bf16.mxu0 0
        %1724 = vmatpush1.bf16.xpose.msra.mxu0 0
        %1725 = vmatprep.subr.bf16.mxu0 0
        %1726 = vmatpush1.bf16.xpose.msra.mxu0 0
        %1727 = vmatprep.subr.bf16.mxu0 0
        %1728 = vmatpush1.bf16.xpose.msra.mxu0 0
        %1729 = vmatprep.subr.bf16.mxu0 0
        %1730 = vmatpush1.bf16.xpose.msra.mxu0 0
        %1731 = vmatprep.subr.bf16.mxu0 0
        %1732 = vmatpush1.bf16.xpose.msra.mxu0 0
        %1733 = vmatprep.subr.bf16.mxu0 0
        %1734 = vmatpush1.bf16.xpose.msra.mxu0 0
        %1735 = vmatprep.subr.bf16.mxu0 0
        %1736 = vmatpush1.bf16.xpose.msra.mxu0 0
        %1737 = vmatprep.subr.bf16.mxu0 0
        %1738 = vmatpush1.bf16.xpose.msra.mxu0 0
        %1739 = vmatprep.subr.bf16.mxu0 0
        %1740 = vmatpush1.bf16.xpose.msra.mxu0 0
        %1741 = vmatprep.subr.bf16.mxu0 0
        %1742 = vmatpush1.bf16.xpose.msra.mxu0 0
        %1743 = vmatprep.subr.bf16.mxu0 0
        %1744 = vmatpush1.bf16.xpose.msra.mxu0 0
        %1745 = vmatprep.subr.bf16.mxu0 0
        %1746 = vmatpush1.bf16.xpose.msra.mxu0 0
        %1747 = vmatprep.subr.bf16.mxu0 0
        %1748 = vmatpush1.bf16.xpose.msra.mxu0 0
        %1749 = vmatprep.subr.bf16.mxu0 0
        %1750 = vmatpush1.bf16.xpose.msra.mxu0 0
        %1751 = vmatprep.subr.bf16.mxu0 0
        %1752 = vmatpush1.bf16.xpose.msra.mxu0 0
        %1753 = vmatprep.mubr.bf16.mxu0 0
        %1754 = vmatmul.mubr.bf16.gmra.mrb[0].mxu0 %v1716
        %v1755 = vpop.f32.mrb[0].mxu0
        %v1756 = vadd.f32 0.0, %v1755
        %v1757 = vpop.f32.mrb[0].mxu0
        %v1758 = vpop.f32.mrb[0].mxu0
        %v1759 = vpop.f32.mrb[0].mxu0
        %1760 = vdwg.mxu0
        %v1761 = vmul.f32 %v1706, 0.17677669
        %v1762 = vmul.f32 %v1756, 0.17677669
        %v1763 = vsel %vm1229, %v1761, -inf
        %1764 = vmax.xlane.f32.xlu0 %v1763
        %v1765 = vpop.xlane.xlu0 %1764
        %v1766 = vsel %vm1229, %v1762, -inf
        %1767 = vmax.xlane.f32.xlu0 %v1766
        %v1768 = vpop.xlane.xlu0 %1767
        %v1769 = vsub.f32 %v1761, %v1765
        %v1770 = vsub.f32 %v1762, %v1768
        %v1771 = vmul.f32 %v1769, 1.442695
        %v1772 = vpow.pop %v1771
        %v1773 = vmul.f32 %v1770, 1.442695
        %v1774 = vpow.pop %v1773
        %v1775 = vsel %vm1229, %v1772, 0.0
        %1776 = vadd.xlane.f32.xlu0 %v1775
        %v1777 = vpop.xlane.xlu0 %1776
        %v1778 = vsel %vm1229, %v1774, 0.0
        %1779 = vadd.xlane.f32.xlu0 %v1778
        %v1780 = vpop.xlane.xlu0 %1779
        %v1781 = vrcp.pop %v1777
        %v1782 = vrcp.pop %v1780
        %v1783 = vmul.f32 %v1772, %v1781
        %v1784 = vmul.f32 %v1774, %v1782
        %v1785 = vpack.c.bf16 %v1783, %v1783
        %v1786 = vpack.c.bf16 %v1784, %v1784
        %1787 = vrot.lane.b32.xlu0 %v1132, 112
        %v1788 = vpop.permute.xlu0 %1787
        %v1791 = vsel %vm1229, %v1785, 0
        %1793 = vmatprep.subr.bf16.mxu0 0
        %1794 = vmatpush1.bf16.msra.mxu0 %v1788
        %1795 = vmatprep.subr.bf16.mxu0 0
        %1796 = vmatpush1.bf16.msra.mxu0 0
        %1797 = vmatprep.subr.bf16.mxu0 0
        %1798 = vmatpush1.bf16.msra.mxu0 0
        %1799 = vmatprep.subr.bf16.mxu0 0
        %1800 = vmatpush1.bf16.msra.mxu0 0
        %1801 = vmatprep.subr.bf16.mxu0 0
        %1802 = vmatpush1.bf16.msra.mxu0 0
        %1803 = vmatprep.subr.bf16.mxu0 0
        %1804 = vmatpush1.bf16.msra.mxu0 0
        %1805 = vmatprep.subr.bf16.mxu0 0
        %1806 = vmatpush1.bf16.msra.mxu0 0
        %1807 = vmatprep.subr.bf16.mxu0 0
        %1808 = vmatpush1.bf16.msra.mxu0 0
        %1809 = vmatprep.subr.bf16.mxu0 0
        %1810 = vmatpush1.bf16.msra.mxu0 0
        %1811 = vmatprep.subr.bf16.mxu0 0
        %1812 = vmatpush1.bf16.msra.mxu0 0
        %1813 = vmatprep.subr.bf16.mxu0 0
        %1814 = vmatpush1.bf16.msra.mxu0 0
        %1815 = vmatprep.subr.bf16.mxu0 0
        %1816 = vmatpush1.bf16.msra.mxu0 0
        %1817 = vmatprep.subr.bf16.mxu0 0
        %1818 = vmatpush1.bf16.msra.mxu0 0
        %1819 = vmatprep.subr.bf16.mxu0 0
        %1820 = vmatpush1.bf16.msra.mxu0 0
        %1821 = vmatprep.subr.bf16.mxu0 0
        %1822 = vmatpush1.bf16.msra.mxu0 0
        %1823 = vmatprep.subr.bf16.mxu0 0
        %1824 = vmatpush1.bf16.msra.mxu0 0
        %1825 = vmatprep.mubr.bf16.mxu0 0
        %1826 = vmatmul.mubr.bf16.gmra.mrb[0].mxu0 %v1791
        %v1827 = vpop.f32.mrb[0].mxu0
        %v1828 = vadd.f32 0.0, %v1827
        %v1829 = vpop.f32.mrb[0].mxu0
        %v1830 = vpop.f32.mrb[0].mxu0
        %v1831 = vpop.f32.mrb[0].mxu0
        %1832 = vdwg.mxu0
        %1833 = vrot.lane.b32.xlu0 %v1133, 112
        %v1834 = vpop.permute.xlu0 %1833
        %v1837 = vsel %vm1229, %v1786, 0
        %1839 = vmatprep.subr.bf16.mxu0 0
        %1840 = vmatpush1.bf16.msra.mxu0 %v1834
        %1841 = vmatprep.subr.bf16.mxu0 0
        %1842 = vmatpush1.bf16.msra.mxu0 0
        %1843 = vmatprep.subr.bf16.mxu0 0
        %1844 = vmatpush1.bf16.msra.mxu0 0
        %1845 = vmatprep.subr.bf16.mxu0 0
        %1846 = vmatpush1.bf16.msra.mxu0 0
        %1847 = vmatprep.subr.bf16.mxu0 0
        %1848 = vmatpush1.bf16.msra.mxu0 0
        %1849 = vmatprep.subr.bf16.mxu0 0
        %1850 = vmatpush1.bf16.msra.mxu0 0
        %1851 = vmatprep.subr.bf16.mxu0 0
        %1852 = vmatpush1.bf16.msra.mxu0 0
        %1853 = vmatprep.subr.bf16.mxu0 0
        %1854 = vmatpush1.bf16.msra.mxu0 0
        %1855 = vmatprep.subr.bf16.mxu0 0
        %1856 = vmatpush1.bf16.msra.mxu0 0
        %1857 = vmatprep.subr.bf16.mxu0 0
        %1858 = vmatpush1.bf16.msra.mxu0 0
        %1859 = vmatprep.subr.bf16.mxu0 0
        %1860 = vmatpush1.bf16.msra.mxu0 0
        %1861 = vmatprep.subr.bf16.mxu0 0
        %1862 = vmatpush1.bf16.msra.mxu0 0
        %1863 = vmatprep.subr.bf16.mxu0 0
        %1864 = vmatpush1.bf16.msra.mxu0 0
        %1865 = vmatprep.subr.bf16.mxu0 0
        %1866 = vmatpush1.bf16.msra.mxu0 0
        %1867 = vmatprep.subr.bf16.mxu0 0
        %1868 = vmatpush1.bf16.msra.mxu0 0
        %1869 = vmatprep.subr.bf16.mxu0 0
        %1870 = vmatpush1.bf16.msra.mxu0 0
        %1871 = vmatprep.mubr.bf16.mxu0 0
        %1872 = vmatmul.mubr.bf16.gmra.mrb[0].mxu0 %v1837
        %v1873 = vpop.f32.mrb[0].mxu0
        %v1874 = vadd.f32 0.0, %v1873
        %v1875 = vpop.f32.mrb[0].mxu0
        %v1876 = vpop.f32.mrb[0].mxu0
        %v1877 = vpop.f32.mrb[0].mxu0
        %1878 = vdwg.mxu0
        %v1879 = vpack.c.bf16 %v1874, %v1828
        %v1881 = vsel %vm1134, %v1879, 0
        %v1884 = vsel %vm1569, %v1126, 0
        %1886 = vmatprep.subr.bf16.mxu0 0
        %1887 = vmatpush1.bf16.msra.mxu0 %v1884
        %1888 = vmatprep.subr.bf16.mxu0 0
        %1889 = vmatpush1.bf16.msra.mxu0 0
        %1890 = vmatprep.subr.bf16.mxu0 0
        %1891 = vmatpush1.bf16.msra.mxu0 0
        %1892 = vmatprep.subr.bf16.mxu0 0
        %1893 = vmatpush1.bf16.msra.mxu0 0
        %1894 = vmatprep.subr.bf16.mxu0 0
        %1895 = vmatpush1.bf16.msra.mxu0 0
        %1896 = vmatprep.subr.bf16.mxu0 0
        %1897 = vmatpush1.bf16.msra.mxu0 0
        %1898 = vmatprep.subr.bf16.mxu0 0
        %1899 = vmatpush1.bf16.msra.mxu0 0
        %1900 = vmatprep.subr.bf16.mxu0 0
        %1901 = vmatpush1.bf16.msra.mxu0 0
        %1902 = vmatprep.subr.bf16.mxu0 0
        %1903 = vmatpush1.bf16.msra.mxu0 0
        %1904 = vmatprep.subr.bf16.mxu0 0
        %1905 = vmatpush1.bf16.msra.mxu0 0
        %1906 = vmatprep.subr.bf16.mxu0 0
        %1907 = vmatpush1.bf16.msra.mxu0 0
        %1908 = vmatprep.subr.bf16.mxu0 0
        %1909 = vmatpush1.bf16.msra.mxu0 0
        %1910 = vmatprep.subr.bf16.mxu0 0
        %1911 = vmatpush1.bf16.msra.mxu0 0
        %1912 = vmatprep.subr.bf16.mxu0 0
        %1913 = vmatpush1.bf16.msra.mxu0 0
        %1914 = vmatprep.subr.bf16.mxu0 0
        %1915 = vmatpush1.bf16.msra.mxu0 0
        %1916 = vmatprep.subr.bf16.mxu0 0
        %1917 = vmatpush1.bf16.msra.mxu0 0
        %1918 = vmatprep.mubr.bf16.mxu0 0
        %1919 = vmatmul.mubr.bf16.gmra.mrb[0].mxu0 %v1881
        %v1920 = vpop.f32.mrb[0].mxu0
        %v1921 = vadd.f32 0.0, %v1920
        %v1922 = vpop.f32.mrb[0].mxu0
        %v1923 = vpop.f32.mrb[0].mxu0
        %v1924 = vadd.f32 0.0, %v1923
        %v1925 = vpop.f32.mrb[0].mxu0
        %1926 = vdwg.mxu0
        %v1927 = vadd.f32 %v1655, %v1921
        %v1928 = vadd.f32 %v1658, %v1924
        %1929 = vrot.lane.b32.xlu0 %v1128, 104
        %v1930 = vpop.permute.xlu0 %1929
        %1931 = vrot.lane.b32.xlu0 %v1130, 104
        %v1932 = vpop.permute.xlu0 %1931
        %v1934 = vsel %vm1134, %v1930, 0
        %v1937 = vsel %vm1134, %v1932, 0
        %1939 = vmatprep.subr.bf16.mxu0 0
        %1940 = vmatpush1.bf16.xpose.msra.mxu0 %v1937
        %1941 = vmatprep.subr.bf16.mxu0 0
        %1942 = vmatpush1.bf16.xpose.msra.mxu0 0
        %1943 = vmatprep.subr.bf16.mxu0 0
        %1944 = vmatpush1.bf16.xpose.msra.mxu0 0
        %1945 = vmatprep.subr.bf16.mxu0 0
        %1946 = vmatpush1.bf16.xpose.msra.mxu0 0
        %1947 = vmatprep.subr.bf16.mxu0 0
        %1948 = vmatpush1.bf16.xpose.msra.mxu0 0
        %1949 = vmatprep.subr.bf16.mxu0 0
        %1950 = vmatpush1.bf16.xpose.msra.mxu0 0
        %1951 = vmatprep.subr.bf16.mxu0 0
        %1952 = vmatpush1.bf16.xpose.msra.mxu0 0
        %1953 = vmatprep.subr.bf16.mxu0 0
        %1954 = vmatpush1.bf16.xpose.msra.mxu0 0
        %1955 = vmatprep.subr.bf16.mxu0 0
        %1956 = vmatpush1.bf16.xpose.msra.mxu0 0
        %1957 = vmatprep.subr.bf16.mxu0 0
        %1958 = vmatpush1.bf16.xpose.msra.mxu0 0
        %1959 = vmatprep.subr.bf16.mxu0 0
        %1960 = vmatpush1.bf16.xpose.msra.mxu0 0
        %1961 = vmatprep.subr.bf16.mxu0 0
        %1962 = vmatpush1.bf16.xpose.msra.mxu0 0
        %1963 = vmatprep.subr.bf16.mxu0 0
        %1964 = vmatpush1.bf16.xpose.msra.mxu0 0
        %1965 = vmatprep.subr.bf16.mxu0 0
        %1966 = vmatpush1.bf16.xpose.msra.mxu0 0
        %1967 = vmatprep.subr.bf16.mxu0 0
        %1968 = vmatpush1.bf16.xpose.msra.mxu0 0
        %1969 = vmatprep.subr.bf16.mxu0 0
        %1970 = vmatpush1.bf16.xpose.msra.mxu0 0
        %1971 = vmatprep.mubr.bf16.mxu0 0
        %1972 = vmatmul.mubr.bf16.gmra.mrb[0].mxu0 %v1934
        %v1973 = vpop.f32.mrb[0].mxu0
        %v1974 = vadd.f32 0.0, %v1973
        %v1975 = vpop.f32.mrb[0].mxu0
        %v1976 = vpop.f32.mrb[0].mxu0
        %v1977 = vpop.f32.mrb[0].mxu0
        %1978 = vdwg.mxu0
        %1979 = vrot.lane.b32.xlu0 %v1129, 104
        %v1980 = vpop.permute.xlu0 %1979
        %1981 = vrot.lane.b32.xlu0 %v1131, 104
        %v1982 = vpop.permute.xlu0 %1981
        %v1984 = vsel %vm1134, %v1980, 0
        %v1987 = vsel %vm1134, %v1982, 0
        %1989 = vmatprep.subr.bf16.mxu0 0
        %1990 = vmatpush1.bf16.xpose.msra.mxu0 %v1987
        %1991 = vmatprep.subr.bf16.mxu0 0
        %1992 = vmatpush1.bf16.xpose.msra.mxu0 0
        %1993 = vmatprep.subr.bf16.mxu0 0
        %1994 = vmatpush1.bf16.xpose.msra.mxu0 0
        %1995 = vmatprep.subr.bf16.mxu0 0
        %1996 = vmatpush1.bf16.xpose.msra.mxu0 0
        %1997 = vmatprep.subr.bf16.mxu0 0
        %1998 = vmatpush1.bf16.xpose.msra.mxu0 0
        %1999 = vmatprep.subr.bf16.mxu0 0
        %2000 = vmatpush1.bf16.xpose.msra.mxu0 0
        %2001 = vmatprep.subr.bf16.mxu0 0
        %2002 = vmatpush1.bf16.xpose.msra.mxu0 0
        %2003 = vmatprep.subr.bf16.mxu0 0
        %2004 = vmatpush1.bf16.xpose.msra.mxu0 0
        %2005 = vmatprep.subr.bf16.mxu0 0
        %2006 = vmatpush1.bf16.xpose.msra.mxu0 0
        %2007 = vmatprep.subr.bf16.mxu0 0
        %2008 = vmatpush1.bf16.xpose.msra.mxu0 0
        %2009 = vmatprep.subr.bf16.mxu0 0
        %2010 = vmatpush1.bf16.xpose.msra.mxu0 0
        %2011 = vmatprep.subr.bf16.mxu0 0
        %2012 = vmatpush1.bf16.xpose.msra.mxu0 0
        %2013 = vmatprep.subr.bf16.mxu0 0
        %2014 = vmatpush1.bf16.xpose.msra.mxu0 0
        %2015 = vmatprep.subr.bf16.mxu0 0
        %2016 = vmatpush1.bf16.xpose.msra.mxu0 0
        %2017 = vmatprep.subr.bf16.mxu0 0
        %2018 = vmatpush1.bf16.xpose.msra.mxu0 0
        %2019 = vmatprep.subr.bf16.mxu0 0
        %2020 = vmatpush1.bf16.xpose.msra.mxu0 0
        %2021 = vmatprep.mubr.bf16.mxu0 0
        %2022 = vmatmul.mubr.bf16.gmra.mrb[0].mxu0 %v1984
        %v2023 = vpop.f32.mrb[0].mxu0
        %v2024 = vadd.f32 0.0, %v2023
        %v2025 = vpop.f32.mrb[0].mxu0
        %v2026 = vpop.f32.mrb[0].mxu0
        %v2027 = vpop.f32.mrb[0].mxu0
        %2028 = vdwg.mxu0
        %v2029 = vmul.f32 %v1974, 0.17677669
        %v2030 = vmul.f32 %v2024, 0.17677669
        %v2031 = vsel %vm1229, %v2029, -inf
        %2032 = vmax.xlane.f32.xlu0 %v2031
        %v2033 = vpop.xlane.xlu0 %2032
        %v2034 = vsel %vm1229, %v2030, -inf
        %2035 = vmax.xlane.f32.xlu0 %v2034
        %v2036 = vpop.xlane.xlu0 %2035
        %v2037 = vsub.f32 %v2029, %v2033
        %v2038 = vsub.f32 %v2030, %v2036
        %v2039 = vmul.f32 %v2037, 1.442695
        %v2040 = vpow.pop %v2039
        %v2041 = vmul.f32 %v2038, 1.442695
        %v2042 = vpow.pop %v2041
        %v2043 = vsel %vm1229, %v2040, 0.0
        %2044 = vadd.xlane.f32.xlu0 %v2043
        %v2045 = vpop.xlane.xlu0 %2044
        %v2046 = vsel %vm1229, %v2042, 0.0
        %2047 = vadd.xlane.f32.xlu0 %v2046
        %v2048 = vpop.xlane.xlu0 %2047
        %v2049 = vrcp.pop %v2045
        %v2050 = vrcp.pop %v2048
        %v2051 = vmul.f32 %v2040, %v2049
        %v2052 = vmul.f32 %v2042, %v2050
        %v2053 = vpack.c.bf16 %v2051, %v2051
        %v2054 = vpack.c.bf16 %v2052, %v2052
        %2055 = vrot.lane.b32.xlu0 %v1132, 104
        %v2056 = vpop.permute.xlu0 %2055
        %v2059 = vsel %vm1229, %v2053, 0
        %2061 = vmatprep.subr.bf16.mxu0 0
        %2062 = vmatpush1.bf16.msra.mxu0 %v2056
        %2063 = vmatprep.subr.bf16.mxu0 0
        %2064 = vmatpush1.bf16.msra.mxu0 0
        %2065 = vmatprep.subr.bf16.mxu0 0
        %2066 = vmatpush1.bf16.msra.mxu0 0
        %2067 = vmatprep.subr.bf16.mxu0 0
        %2068 = vmatpush1.bf16.msra.mxu0 0
        %2069 = vmatprep.subr.bf16.mxu0 0
        %2070 = vmatpush1.bf16.msra.mxu0 0
        %2071 = vmatprep.subr.bf16.mxu0 0
        %2072 = vmatpush1.bf16.msra.mxu0 0
        %2073 = vmatprep.subr.bf16.mxu0 0
        %2074 = vmatpush1.bf16.msra.mxu0 0
        %2075 = vmatprep.subr.bf16.mxu0 0
        %2076 = vmatpush1.bf16.msra.mxu0 0
        %2077 = vmatprep.subr.bf16.mxu0 0
        %2078 = vmatpush1.bf16.msra.mxu0 0
        %2079 = vmatprep.subr.bf16.mxu0 0
        %2080 = vmatpush1.bf16.msra.mxu0 0
        %2081 = vmatprep.subr.bf16.mxu0 0
        %2082 = vmatpush1.bf16.msra.mxu0 0
        %2083 = vmatprep.subr.bf16.mxu0 0
        %2084 = vmatpush1.bf16.msra.mxu0 0
        %2085 = vmatprep.subr.bf16.mxu0 0
        %2086 = vmatpush1.bf16.msra.mxu0 0
        %2087 = vmatprep.subr.bf16.mxu0 0
        %2088 = vmatpush1.bf16.msra.mxu0 0
        %2089 = vmatprep.subr.bf16.mxu0 0
        %2090 = vmatpush1.bf16.msra.mxu0 0
        %2091 = vmatprep.subr.bf16.mxu0 0
        %2092 = vmatpush1.bf16.msra.mxu0 0
        %2093 = vmatprep.mubr.bf16.mxu0 0
        %2094 = vmatmul.mubr.bf16.gmra.mrb[0].mxu0 %v2059
        %v2095 = vpop.f32.mrb[0].mxu0
        %v2096 = vadd.f32 0.0, %v2095
        %v2097 = vpop.f32.mrb[0].mxu0
        %v2098 = vpop.f32.mrb[0].mxu0
        %v2099 = vpop.f32.mrb[0].mxu0
        %2100 = vdwg.mxu0
        %2101 = vrot.lane.b32.xlu0 %v1133, 104
        %v2102 = vpop.permute.xlu0 %2101
        %v2105 = vsel %vm1229, %v2054, 0
        %2107 = vmatprep.subr.bf16.mxu0 0
        %2108 = vmatpush1.bf16.msra.mxu0 %v2102
        %2109 = vmatprep.subr.bf16.mxu0 0
        %2110 = vmatpush1.bf16.msra.mxu0 0
        %2111 = vmatprep.subr.bf16.mxu0 0
        %2112 = vmatpush1.bf16.msra.mxu0 0
        %2113 = vmatprep.subr.bf16.mxu0 0
        %2114 = vmatpush1.bf16.msra.mxu0 0
        %2115 = vmatprep.subr.bf16.mxu0 0
        %2116 = vmatpush1.bf16.msra.mxu0 0
        %2117 = vmatprep.subr.bf16.mxu0 0
        %2118 = vmatpush1.bf16.msra.mxu0 0
        %2119 = vmatprep.subr.bf16.mxu0 0
        %2120 = vmatpush1.bf16.msra.mxu0 0
        %2121 = vmatprep.subr.bf16.mxu0 0
        %2122 = vmatpush1.bf16.msra.mxu0 0
        %2123 = vmatprep.subr.bf16.mxu0 0
        %2124 = vmatpush1.bf16.msra.mxu0 0
        %2125 = vmatprep.subr.bf16.mxu0 0
        %2126 = vmatpush1.bf16.msra.mxu0 0
        %2127 = vmatprep.subr.bf16.mxu0 0
        %2128 = vmatpush1.bf16.msra.mxu0 0
        %2129 = vmatprep.subr.bf16.mxu0 0
        %2130 = vmatpush1.bf16.msra.mxu0 0
        %2131 = vmatprep.subr.bf16.mxu0 0
        %2132 = vmatpush1.bf16.msra.mxu0 0
        %2133 = vmatprep.subr.bf16.mxu0 0
        %2134 = vmatpush1.bf16.msra.mxu0 0
        %2135 = vmatprep.subr.bf16.mxu0 0
        %2136 = vmatpush1.bf16.msra.mxu0 0
        %2137 = vmatprep.subr.bf16.mxu0 0
        %2138 = vmatpush1.bf16.msra.mxu0 0
        %2139 = vmatprep.mubr.bf16.mxu0 0
        %2140 = vmatmul.mubr.bf16.gmra.mrb[0].mxu0 %v2105
        %v2141 = vpop.f32.mrb[0].mxu0
        %v2142 = vadd.f32 0.0, %v2141
        %v2143 = vpop.f32.mrb[0].mxu0
        %v2144 = vpop.f32.mrb[0].mxu0
        %v2145 = vpop.f32.mrb[0].mxu0
        %2146 = vdwg.mxu0
        %v2147 = vpack.c.bf16 %v2142, %v2096
        %v2149 = vsel %vm1134, %v2147, 0
        %v2152 = vsel %vm1569, %v1127, 0
        %2154 = vmatprep.subr.bf16.mxu0 0
        %2155 = vmatpush1.bf16.msra.mxu0 %v2152
        %2156 = vmatprep.subr.bf16.mxu0 0
        %2157 = vmatpush1.bf16.msra.mxu0 0
        %2158 = vmatprep.subr.bf16.mxu0 0
        %2159 = vmatpush1.bf16.msra.mxu0 0
        %2160 = vmatprep.subr.bf16.mxu0 0
        %2161 = vmatpush1.bf16.msra.mxu0 0
        %2162 = vmatprep.subr.bf16.mxu0 0
        %2163 = vmatpush1.bf16.msra.mxu0 0
        %2164 = vmatprep.subr.bf16.mxu0 0
        %2165 = vmatpush1.bf16.msra.mxu0 0
        %2166 = vmatprep.subr.bf16.mxu0 0
        %2167 = vmatpush1.bf16.msra.mxu0 0
        %2168 = vmatprep.subr.bf16.mxu0 0
        %2169 = vmatpush1.bf16.msra.mxu0 0
        %2170 = vmatprep.subr.bf16.mxu0 0
        %2171 = vmatpush1.bf16.msra.mxu0 0
        %2172 = vmatprep.subr.bf16.mxu0 0
        %2173 = vmatpush1.bf16.msra.mxu0 0
        %2174 = vmatprep.subr.bf16.mxu0 0
        %2175 = vmatpush1.bf16.msra.mxu0 0
        %2176 = vmatprep.subr.bf16.mxu0 0
        %2177 = vmatpush1.bf16.msra.mxu0 0
        %2178 = vmatprep.subr.bf16.mxu0 0
        %2179 = vmatpush1.bf16.msra.mxu0 0
        %2180 = vmatprep.subr.bf16.mxu0 0
        %2181 = vmatpush1.bf16.msra.mxu0 0
        %2182 = vmatprep.subr.bf16.mxu0 0
        %2183 = vmatpush1.bf16.msra.mxu0 0
        %2184 = vmatprep.subr.bf16.mxu0 0
        %2185 = vmatpush1.bf16.msra.mxu0 0
        %2186 = vmatprep.mubr.bf16.mxu0 0
        %2187 = vmatmul.mubr.bf16.gmra.mrb[0].mxu0 %v2149
        %v2188 = vpop.f32.mrb[0].mxu0
        %v2189 = vadd.f32 0.0, %v2188
        %v2190 = vpop.f32.mrb[0].mxu0
        %v2191 = vpop.f32.mrb[0].mxu0
        %v2192 = vadd.f32 0.0, %v2191
        %v2193 = vpop.f32.mrb[0].mxu0
        %2194 = vdwg.mxu0
        %v2195 = vadd.f32 %v1927, %v2189
        %v2196 = vadd.f32 %v1928, %v2192
        %v2197 = vld [vmem:[%s784] sm:$0x1]
        %v2199 = vlaneseq
        %v2200 = vshrl.u32 %v2199, 7
        %v2201 = vsub.s32 0, %v2200
        %v2202 = vrot.slane %v2197, %v2201
        %v2204 = vadd.f32 %v2195, %v2202
        %v2205 = vadd.f32 %v2196, %v2202
        %v2206 = vadd.f32 %v2204, %v813
        %v2207 = vadd.f32 %v2205, %v814
        %v2208 = vld [vmem:[%s787] sm:$0x1]
        %v2209 = vld [vmem:[%s790] sm:$0x1]
        %v2210 = vsel %vm821, %v2206, 0.0
        %2211 = vadd.xlane.f32.xlu0 %v2210
        %v2212 = vpop.xlane.xlu0 %2211
        %v2213 = vsel %vm821, %v2207, 0.0
        %2214 = vadd.xlane.f32.xlu0 %v2213
        %v2215 = vpop.xlane.xlu0 %2214
        %v2216 = vmul.f32 %v2212, %v828
        %v2217 = vmul.f32 %v2215, %v828
        %v2218 = vsub.f32 %v2206, %v2216
        %v2219 = vsub.f32 %v2207, %v2217
        %v2220 = vmul.f32 %v2218, %v2218
        %v2221 = vmul.f32 %v2219, %v2219
        %v2222 = vsel %vm821, %v2220, 0.0
        %2223 = vadd.xlane.f32.xlu0 %v2222
        %v2224 = vpop.xlane.xlu0 %2223
        %v2225 = vsel %vm821, %v2221, 0.0
        %2226 = vadd.xlane.f32.xlu0 %v2225
        %v2227 = vpop.xlane.xlu0 %2226
        %v2228 = vmul.f32 %v2224, %v828
        %v2229 = vmul.f32 %v2227, %v828
        %v2230 = vadd.f32 %v2228, 1e-05
        %v2231 = vadd.f32 %v2229, 1e-05
        %v2232 = vrsqrt.pop %v2230
        %v2233 = vrsqrt.pop %v2231
        %v2234 = vmul.f32 %v2218, %v2232
        %v2235 = vmul.f32 %v2219, %v2233
        %v2237 = vlaneseq
        %v2238 = vshrl.u32 %v2237, 7
        %v2239 = vsub.s32 0, %v2238
        %v2240 = vrot.slane %v2208, %v2239
        %v2242 = vmul.f32 %v2234, %v2240
        %v2243 = vmul.f32 %v2235, %v2240
        %v2245 = vlaneseq
        %v2246 = vshrl.u32 %v2245, 7
        %v2247 = vsub.s32 0, %v2246
        %v2248 = vrot.slane %v2209, %v2247
        %v2250 = vadd.f32 %v2242, %v2248
        %v2251 = vadd.f32 %v2243, %v2248
        %v2252 = vpack.c.bf16 %v2251, %v2250
        %v2253 = vld [vmem:[%s664] sm:$0xf]
        %v2254 = vld [vmem:[%s664 + $0x4] sm:$0xf]
        %v2255 = vld [vmem:[%s664 + $0x8] sm:$0xf]
        %v2256 = vld [vmem:[%s664 + $0xc] sm:$0xf]
        %v2257 = vld [vmem:[%s793] sm:$0x1]
        %v2259 = vlaneseq
        %v2260 = vshrl.u32 %v2259, 7
        %v2261 = vsub.s32 0, %v2260
        %v2262 = vrot.slane %v2257, %v2261
        %v2268 = vunpack.c.l.b16 %v2253
        %v2269 = vunpack.c.l.b16 %v2254
        %v2270 = vunpack.c.l.b16 %v2255
        %v2271 = vunpack.c.l.b16 %v2256
        %v2272 = vpack.c.b16 %v2269, %v2268
        %v2273 = vpack.c.b16 %v2271, %v2270
        %v2277 = vsel %vm821, %v2252, 0
        %2279 = vmatprep.subr.bf16.mxu0 0
        %2280 = vmatpush1.bf16.msra.mxu0 %v2272
        %2281 = vmatprep.subr.bf16.mxu0 0
        %2282 = vmatpush1.bf16.msra.mxu0 %v2273
        %2283 = vmatprep.subr.bf16.mxu0 0
        %2284 = vmatpush1.bf16.msra.mxu0 0
        %2285 = vmatprep.subr.bf16.mxu0 0
        %2286 = vmatpush1.bf16.msra.mxu0 0
        %2287 = vmatprep.subr.bf16.mxu0 0
        %2288 = vmatpush1.bf16.msra.mxu0 0
        %2289 = vmatprep.subr.bf16.mxu0 0
        %2290 = vmatpush1.bf16.msra.mxu0 0
        %2291 = vmatprep.subr.bf16.mxu0 0
        %2292 = vmatpush1.bf16.msra.mxu0 0
        %2293 = vmatprep.subr.bf16.mxu0 0
        %2294 = vmatpush1.bf16.msra.mxu0 0
        %2295 = vmatprep.subr.bf16.mxu0 0
        %2296 = vmatpush1.bf16.msra.mxu0 0
        %2297 = vmatprep.subr.bf16.mxu0 0
        %2298 = vmatpush1.bf16.msra.mxu0 0
        %2299 = vmatprep.subr.bf16.mxu0 0
        %2300 = vmatpush1.bf16.msra.mxu0 0
        %2301 = vmatprep.subr.bf16.mxu0 0
        %2302 = vmatpush1.bf16.msra.mxu0 0
        %2303 = vmatprep.subr.bf16.mxu0 0
        %2304 = vmatpush1.bf16.msra.mxu0 0
        %2305 = vmatprep.subr.bf16.mxu0 0
        %2306 = vmatpush1.bf16.msra.mxu0 0
        %2307 = vmatprep.subr.bf16.mxu0 0
        %2308 = vmatpush1.bf16.msra.mxu0 0
        %2309 = vmatprep.subr.bf16.mxu0 0
        %2310 = vmatpush1.bf16.msra.mxu0 0
        %2311 = vmatprep.mubr.bf16.mxu0 0
        %2312 = vmatmul.mubr.bf16.gmra.mrb[0].mxu0 %v2277
        %v2313 = vpop.f32.mrb[0].mxu0
        %v2314 = vadd.f32 %v2262, %v2313
        %v2315 = vpop.f32.mrb[0].mxu0
        %v2316 = vpop.f32.mrb[0].mxu0
        %v2317 = vadd.f32 %v2262, %v2316
        %v2318 = vpop.f32.mrb[0].mxu0
        %2319 = vdwg.mxu0
        %v2320 = vmul.f32 %v2314, 0.5
        %v2321 = vmul.f32 %v2317, 0.5
        %v2322 = vmul.f32 %v2314, 0.70710677
        %v2323 = vmul.f32 %v2317, 0.70710677
        %vm2324 = vcmp.ge.f32.partialorder %v2322, 0.0
        %vm2325 = vcmp.ge.f32.partialorder %v2323, 0.0
        %v2326 = vsel %vm2324, 1.0, -1.0
        %v2327 = vsel %vm2325, 1.0, -1.0
        %v2328 = vand.u32 2147483647, %v2322
        %v2329 = vand.u32 2147483647, %v2323
        %v2330 = vmul.f32 %v2328, 0.3275911
        %v2331 = vmul.f32 %v2329, 0.3275911
        %v2332 = vadd.f32 %v2330, 1.0
        %v2333 = vadd.f32 %v2331, 1.0
        %v2334 = vrcp.pop %v2332
        %v2335 = vmul.f32 1.0, %v2334
        %v2336 = vrcp.pop %v2333
        %v2337 = vmul.f32 1.0, %v2336
        %v2338 = vmul.f32 %v2335, 1.0614054
        %v2339 = vmul.f32 %v2337, 1.0614054
        %v2340 = vadd.f32 %v2338, -1.4531521
        %v2341 = vadd.f32 %v2339, -1.4531521
        %v2342 = vmul.f32 %v2335, %v2340
        %v2343 = vmul.f32 %v2337, %v2341
        %v2344 = vadd.f32 %v2342, 1.4214138
        %v2345 = vadd.f32 %v2343, 1.4214138
        %v2346 = vmul.f32 %v2335, %v2344
        %v2347 = vmul.f32 %v2337, %v2345
        %v2348 = vadd.f32 %v2346, -0.28449672
        %v2349 = vadd.f32 %v2347, -0.28449672
        %v2350 = vmul.f32 %v2335, %v2348
        %v2351 = vmul.f32 %v2337, %v2349
        %v2352 = vadd.f32 %v2350, 0.2548296
        %v2353 = vadd.f32 %v2351, 0.2548296
        %v2354 = vmul.f32 %v2335, %v2352
        %v2355 = vmul.f32 %v2337, %v2353
        %v2356 = vsub.f32 0.0, %v2328
        %v2357 = vsub.f32 0.0, %v2329
        %v2358 = vmul.f32 %v2356, %v2328
        %v2359 = vmul.f32 %v2357, %v2329
        %v2360 = vmul.f32 %v2358, 1.442695
        %v2361 = vpow.pop %v2360
        %v2362 = vmul.f32 %v2359, 1.442695
        %v2363 = vpow.pop %v2362
        %v2364 = vmul.f32 %v2354, %v2361
        %v2365 = vmul.f32 %v2355, %v2363
        %v2366 = vsub.f32 1.0, %v2364
        %v2367 = vsub.f32 1.0, %v2365
        %v2368 = vmul.f32 %v2326, %v2366
        %v2369 = vmul.f32 %v2327, %v2367
        %v2370 = vadd.f32 %v2368, 1.0
        %v2371 = vadd.f32 %v2369, 1.0
        %v2372 = vmul.f32 %v2320, %v2370
        %v2373 = vmul.f32 %v2321, %v2371
        %v2374 = vpack.c.bf16 %v2373, %v2372
        %v2375 = vld [vmem:[%s798] sm:$0xf]
        %v2376 = vld [vmem:[%s798 + $0x4] sm:$0xf]
        %v2377 = vld [vmem:[%s798 + $0x8] sm:$0xf]
        %v2378 = vld [vmem:[%s798 + $0xc] sm:$0xf]
        %v2379 = vld [vmem:[%s798 + $0x10] sm:$0xf]
        %v2380 = vld [vmem:[%s798 + $0x14] sm:$0xf]
        %v2381 = vld [vmem:[%s798 + $0x18] sm:$0xf]
        %v2382 = vld [vmem:[%s798 + $0x1c] sm:$0xf]
        %v2383 = vld [vmem:[%s801] sm:$0x1]
        %v2385 = vlaneseq
        %v2386 = vshrl.u32 %v2385, 7
        %v2387 = vsub.s32 0, %v2386
        %v2388 = vrot.slane %v2383, %v2387
        %v2398 = vunpack.c.l.b16 %v2375
        %v2399 = vunpack.c.l.b16 %v2376
        %v2400 = vunpack.c.l.b16 %v2377
        %v2401 = vunpack.c.l.b16 %v2378
        %v2402 = vunpack.c.l.b16 %v2379
        %v2403 = vunpack.c.l.b16 %v2380
        %v2404 = vunpack.c.l.b16 %v2381
        %v2405 = vunpack.c.l.b16 %v2382
        %v2406 = vpack.c.b16 %v2399, %v2398
        %v2407 = vpack.c.b16 %v2401, %v2400
        %v2408 = vpack.c.b16 %v2403, %v2402
        %v2409 = vpack.c.b16 %v2405, %v2404
        %vm2414 = vcmask 523264
        %v2416 = vsel %vm2414, %v2374, 0
        %2418 = vmatprep.subr.bf16.mxu0 0
        %2419 = vmatpush1.bf16.msra.mxu0 %v2406
        %2420 = vmatprep.subr.bf16.mxu0 0
        %2421 = vmatpush1.bf16.msra.mxu0 %v2407
        %2422 = vmatprep.subr.bf16.mxu0 0
        %2423 = vmatpush1.bf16.msra.mxu0 %v2408
        %2424 = vmatprep.subr.bf16.mxu0 0
        %2425 = vmatpush1.bf16.msra.mxu0 %v2409
        %2426 = vmatprep.subr.bf16.mxu0 0
        %2427 = vmatpush1.bf16.msra.mxu0 0
        %2428 = vmatprep.subr.bf16.mxu0 0
        %2429 = vmatpush1.bf16.msra.mxu0 0
        %2430 = vmatprep.subr.bf16.mxu0 0
        %2431 = vmatpush1.bf16.msra.mxu0 0
        %2432 = vmatprep.subr.bf16.mxu0 0
        %2433 = vmatpush1.bf16.msra.mxu0 0
        %2434 = vmatprep.subr.bf16.mxu0 0
        %2435 = vmatpush1.bf16.msra.mxu0 0
        %2436 = vmatprep.subr.bf16.mxu0 0
        %2437 = vmatpush1.bf16.msra.mxu0 0
        %2438 = vmatprep.subr.bf16.mxu0 0
        %2439 = vmatpush1.bf16.msra.mxu0 0
        %2440 = vmatprep.subr.bf16.mxu0 0
        %2441 = vmatpush1.bf16.msra.mxu0 0
        %2442 = vmatprep.subr.bf16.mxu0 0
        %2443 = vmatpush1.bf16.msra.mxu0 0
        %2444 = vmatprep.subr.bf16.mxu0 0
        %2445 = vmatpush1.bf16.msra.mxu0 0
        %2446 = vmatprep.subr.bf16.mxu0 0
        %2447 = vmatpush1.bf16.msra.mxu0 0
        %2448 = vmatprep.subr.bf16.mxu0 0
        %2449 = vmatpush1.bf16.msra.mxu0 0
        %2450 = vmatprep.mubr.bf16.mxu0 0
        %2451 = vmatmul.mubr.bf16.gmra.mrb[0].mxu0 %v2416
        %v2452 = vpop.f32.mrb[0].mxu0
        %v2453 = vadd.f32 %v2388, %v2452
        %v2454 = vpop.f32.mrb[0].mxu0
        %v2455 = vpop.f32.mrb[0].mxu0
        %v2456 = vadd.f32 %v2388, %v2455
        %v2457 = vpop.f32.mrb[0].mxu0
        %2458 = vdwg.mxu0
        %v2459 = vadd.f32 %v2453, %v2206
        %v2460 = vadd.f32 %v2456, %v2207
        %2461 = vst.msk [vmem:[#allocation10] sm:$0xff] %vm821, %v2459
        %2462 = vst.msk [vmem:[#allocation10 + $0x8] sm:$0xff] %vm821, %v2460
        // Predicated region
        $region101: #{tpu_custom_call.1} parent=79 // pred_check
          %p2463 = pneg %p454
        $region102: #{tpu_custom_call.1} parent=79 // pred_check_branch
          %2465 = sbr.rel (%p2463) target = $region104
        $region103: #{tpu_custom_call.1} parent=79 // pred_region
          %s2466 = smul.u32 2, %s38
          %s2468 = ssub.s32 256, 256
          %2469 = vsyncadd [#allocation4], %s2468
          %s2470 = smul.addr %s2466, 128
          %s2471 = scalar_lea.hbm %s15, %s2470
          %s2472 = sshll.u32 [#allocation10], 4
          %s2473 = int_to_ptr.vmem [resolvable:$true] %s2472
          %2478 = dma.vmem_to_hbm [thread:$0]  %s2473, 256, %s2471, [#allocation4], 128, 128, 8
        $region104: #{tpu_custom_call.1} parent=79 // pred_fallthru
          _
        // Predicated region
        $region105: #{tpu_custom_call.1} parent=79 // pred_check
          %p2479 = pneg %p454
        $region106: #{tpu_custom_call.1} parent=79 // pred_check_branch
          %2481 = sbr.rel (%p2479) target = $region108
        $region107: #{tpu_custom_call.1} parent=79 // pred_region
          %2482 = dma.done [#allocation4], 256
        $region108: #{tpu_custom_call.1} parent=79 // pred_fallthru
          _
      $region80: #{tpu_custom_call.1} parent=5 // pred_fallthru
        _
      %p2483 = scmp.le.s32.totalorder 2, %s29
      // Predicated region
      $region109: #{tpu_custom_call.1} parent=5 // pred_check
        %p2484 = pneg %p2483
      $region110: #{tpu_custom_call.1} parent=5 // pred_check_branch
        %2486 = sbr.rel (%p2484) target = $region112
      $region111: #{tpu_custom_call.1} parent=5 // pred_region
        %s2487 = ssub.s32 %s29, 2
      $region112: #{tpu_custom_call.1} parent=5 // pred_fallthru
        _
    $region6: #{tpu_custom_call.1} parent=1 // loop_footer
      %s33 = sadd.s32 1, %s29
    $region7: #{tpu_custom_call.1} parent=1 // loop_footer_branch
      %28 = sbr.rel target = $region3
    $region8: #{tpu_custom_call.1} parent=1 // loop_exit
      _
    %2488 = vsyncpa [#allocation3], 1
    %s2489 = scalar_lea.sflag [#allocation3], 1
    %2490 = vsyncpa %s2489, 1
    %2491 = vsyncpa [#allocation6], 1
    %s2492 = scalar_lea.sflag [#allocation6], 1
    %2493 = vsyncpa %s2492, 1
    %2494 = vsyncpa [#allocation9], 1
    %s2495 = scalar_lea.sflag [#allocation9], 1
    %2496 = vsyncpa %s2495, 1
    %2497 = vsyncpa [#allocation4], 1
    %s2498 = scalar_lea.sflag [#allocation4], 1
    %2499 = vsyncpa %s2498, 1

</llo_original>
